<compile_context>
chip_gen: v6e
topology: v6e:2x2x1
jax: 0.10.0
libtpu: 0.0.40
codegen_flags: <defaults>
</compile_context>

<pallas_src>
import functools

import jax
import jax.numpy as jnp
from jax import lax
from jax.experimental import pallas as pl
from jax.experimental.pallas import tpu as pltpu

NEG_SLOPE = 0.2      # LeakyReLU alpha (self.p.alpha)
BN_EPS = 1e-5
NEG_INF = -1e30
LANE = 128
TILE_E = 128         # edge rows per grid step (raise to 256-512 on v6e;
                     # keep 128-256 on v5e; re-derive VMEM budget on v7x)


def _round_up(x, m):
    return ((x + m - 1) // m) * m


def _pad2(x, rows, cols):
    return jnp.pad(x, ((0, rows - x.shape[0]), (0, cols - x.shape[1])))


# ---------------------------------------------------------------------------
# Fused multi-head GAT layer: edge tiles + online segment softmax
# ---------------------------------------------------------------------------
def _gat_layer_kernel(src_ref, edge_feat_ref, W_ref, a_ref, expand_ref,
                      out_ref, m_ref, l_ref, *, n_pad, apply_elu):
    t = pl.program_id(0)

    @pl.when(t == 0)
    def _init():
        m_ref[...] = jnp.full(m_ref.shape, NEG_INF, m_ref.dtype)
        l_ref[...] = jnp.zeros(l_ref.shape, l_ref.dtype)
        out_ref[...] = jnp.zeros(out_ref.shape, out_ref.dtype)

    # Build the one-hot(src) tile in-kernel: S[e, n] = (src[e] == n).
    # Padded edges carry src = -1 -> all-zero rows (they scatter nothing).
    src = src_ref[...]                                              # (TILE_E, 1) i32
    node_ids = lax.broadcasted_iota(jnp.int32, (src.shape[0], n_pad), 1)
    S = (node_ids == src).astype(jnp.float32)                       # (TILE_E, N_pad)

    # edge_h = [x_src | x_dst | rel] @ W   (all heads fused, f32 MXU acc)
    edge_h = jnp.dot(edge_feat_ref[...], W_ref[...],
                     preferred_element_type=jnp.float32)            # (TILE_E, D)

    # per-head attention logits via block-diagonal `a`, then LeakyReLU
    logit = jnp.dot(edge_h, a_ref[...],
                    preferred_element_type=jnp.float32)             # (TILE_E, H)
    logit = jnp.where(logit > 0, logit, NEG_SLOPE * logit)

    # ---- online segment softmax with a per-head running *scalar* max -------
    # (a shift constant within every source-node group cancels in the softmax,
    #  so one per-head max is equivalent to the reference's per-group
    #  scatter_max, without any (N_pad x TILE_E) masked reductions).
    m_old = m_ref[...]                                              # (1, H)
    m_new = jnp.maximum(m_old, jnp.max(logit, axis=0, keepdims=True))
    m_ref[...] = m_new
    rescale = jnp.exp(m_old - m_new)                                # (1, H) in [0, 1]
    # TODO(synk): groups whose logits sit > 60 below the head max collapse to
    # uniform weights due to the clamp (the per-group max of the reference
    # never underflows there).
    p = jnp.exp(jnp.maximum(logit - m_new, -60.0))                  # (TILE_E, H)

    # denominator:  l[n,h] = rescale_h*l[n,h] + sum_{e: src(e)=n} p[e,h]
    # (lhs-transposed contraction over the edge axis; S^T never materialized)
    dn = (((0,), (0,)), ((), ()))
    l_ref[...] = rescale * l_ref[...] + lax.dot_general(
        S, p, dimension_numbers=dn, preferred_element_type=jnp.float32)

    # numerator, accumulated directly into the resident output block:
    #   out[n,:] = rescale_wide*out[n,:] + sum_{e: src(e)=n} p_wide[e,:]*edge_h[e,:]
    expand = expand_ref[...]                                        # (H, D) 0/1
    p_wide = jnp.dot(p, expand, preferred_element_type=jnp.float32) # (TILE_E, D)
    rescale_wide = jnp.dot(rescale, expand,
                           preferred_element_type=jnp.float32)      # (1, D)
    out_ref[...] = rescale_wide * out_ref[...] + lax.dot_general(
        S, p_wide * edge_h, dimension_numbers=dn,
        preferred_element_type=jnp.float32)

    # TODO(synk): attention dropout treated as identity (eval-mode forward).

    @pl.when(t == pl.num_programs(0) - 1)
    def _finish():
        l_wide = jnp.dot(l_ref[...], expand, preferred_element_type=jnp.float32)
        out = out_ref[...] / (l_wide + 1e-16)
        if apply_elu:
            out = jnp.where(out > 0, out, jnp.exp(jnp.minimum(out, 0.0)) - 1.0)
        out_ref[...] = out


def gat_layer(src_idx, edge_feat, W, a_block, expand, *, n_pad, apply_elu,
              tile_e=TILE_E):
    E_pad, Fcat_pad = edge_feat.shape
    Dout_pad = W.shape[1]
    H = a_block.shape[1]
    num_tiles = E_pad // tile_e
    kernel = functools.partial(_gat_layer_kernel, n_pad=n_pad, apply_elu=apply_elu)
    return pl.pallas_call(
        kernel,
        out_shape=jax.ShapeDtypeStruct((n_pad, Dout_pad), jnp.float32),
        grid=(num_tiles,),
        in_specs=[
            pl.BlockSpec((tile_e, 1), lambda i: (i, 0)),            # src indices
            pl.BlockSpec((tile_e, Fcat_pad), lambda i: (i, 0)),     # edge features
            pl.BlockSpec((Fcat_pad, Dout_pad), lambda i: (0, 0)),   # W (resident)
            pl.BlockSpec((Dout_pad, H), lambda i: (0, 0)),          # block-diag a
            pl.BlockSpec((H, Dout_pad), lambda i: (0, 0)),          # head expander
        ],
        out_specs=pl.BlockSpec((n_pad, Dout_pad), lambda i: (0, 0)),
        scratch_shapes=[
            pltpu.VMEM((1, H), jnp.float32),        # per-head running max
            pltpu.VMEM((n_pad, H), jnp.float32),    # per-node softmax denominator
        ],
        # Edge axis reduces into the resident output -> "arbitrary".
        # TODO(synk): on v7x (2 TensorCores, 64 MiB VMEM) add an outer
        # node-block "parallel" grid axis and set vmem_limit_bytes explicitly
        # when scaling TILE_E / N to real graph sizes.
        compiler_params=pltpu.CompilerParams(
            dimension_semantics=("arbitrary",)),
    )(src_idx, edge_feat, W, a_block, expand)


# ---------------------------------------------------------------------------
# Tiled projection matmul (f32 operands, f32 accumulator)
# ---------------------------------------------------------------------------
def _matmul_kernel(a_ref, b_ref, o_ref, acc_ref):
    @pl.when(pl.program_id(2) == 0)
    def _():
        acc_ref[...] = jnp.zeros(acc_ref.shape, acc_ref.dtype)

    acc_ref[...] += jnp.dot(a_ref[...], b_ref[...],
                            preferred_element_type=jnp.float32)

    @pl.when(pl.program_id(2) == pl.num_programs(2) - 1)
    def _():
        o_ref[...] = acc_ref[...]


def matmul(a, b, *, tm=128, tn=256, tk=256):
    M, K = a.shape
    _, N = b.shape
    return pl.pallas_call(
        _matmul_kernel,
        out_shape=jax.ShapeDtypeStruct((M, N), jnp.float32),
        grid=(M // tm, N // tn, K // tk),
        in_specs=[pl.BlockSpec((tm, tk), lambda i, j, k: (i, k)),
                  pl.BlockSpec((tk, tn), lambda i, j, k: (k, j))],
        out_specs=pl.BlockSpec((tm, tn), lambda i, j, k: (i, j)),
        scratch_shapes=[pltpu.VMEM((tm, tn), jnp.float32)],
        compiler_params=pltpu.CompilerParams(
            dimension_semantics=("parallel", "parallel", "arbitrary")),
    )(a, b)


def project(a, b):
    M, K = a.shape
    _, N = b.shape
    if min(M, K, N) < 128:
        # Tiny operands (e.g. the 2R x dim relation projection): padding to an
        # MXU tile wastes >98% of the work -- plain dot is cheaper.
        return jnp.dot(a, b, preferred_element_type=jnp.float32)
    tm = 128
    tn = 256 if N >= 256 else 128
    tk = 256 if K >= 256 else 128
    Mp, Kp, Np = _round_up(M, tm), _round_up(K, tk), _round_up(N, tn)
    out = matmul(_pad2(a, Mp, Kp), _pad2(b, Kp, Np), tm=tm, tn=tn, tk=tk)
    return out[:M, :N]


# ---------------------------------------------------------------------------
# x + x_self followed by BatchNorm1d (batch statistics)
# ---------------------------------------------------------------------------
def _finalize_kernel(x_ref, xs_ref, g_ref, b_ref, o_ref):
    x = x_ref[...] + xs_ref[...]
    mean = jnp.mean(x, axis=0, keepdims=True)
    var = jnp.mean((x - mean) ** 2, axis=0, keepdims=True)
    o_ref[...] = (x - mean) * lax.rsqrt(var + BN_EPS) * g_ref[...] + b_ref[...]


def finalize(x, x_self, gamma, beta):
    # TODO(synk): BatchNorm uses batch statistics (train-mode normalization);
    # eval-mode running statistics are not modeled.
    # TODO(synk): for very large N x D on v7x, block over rows with a two-pass
    # mean/var instead of whole-array VMEM blocks.
    vmem = pl.BlockSpec(memory_space=pltpu.MemorySpace.VMEM)
    return pl.pallas_call(
        _finalize_kernel,
        out_shape=jax.ShapeDtypeStruct(x.shape, jnp.float32),
        in_specs=[vmem, vmem, vmem, vmem],
        out_specs=vmem,
    )(x, x_self, gamma, beta)


# ---------------------------------------------------------------------------
# KBGAT forward (glue in plain JAX: index juggling, gathers, padding)
# ---------------------------------------------------------------------------
def kbgat_forward(params, edge_index, edge_type, indices_2hop, *,
                  num_nodes, nheads):
    # ---- edge list / type construction (KBGAT_Model.forward) ----
    edge_list_nhop = jnp.stack([indices_2hop[:, 3], indices_2hop[:, 0]], axis=0)
    edge_type_nhop = jnp.stack([indices_2hop[:, 1], indices_2hop[:, 2]], axis=1)
    ei = edge_index[jnp.array([1, 0])]                       # swap rows
    edge_index_full = jnp.concatenate([ei, edge_list_nhop], axis=1)
    src = edge_index_full[0]
    dst = edge_index_full[1]

    E = src.shape[0]
    E_pad = _round_up(E, TILE_E)
    N_pad = _round_up(num_nodes, LANE)

    # Padded int32 src indices (padded edges -> -1 == "no node"); the one-hot
    # scatter tiles are built from these inside the kernel -- no O(E*N) arrays
    # ever hit HBM.
    src_pad = jnp.concatenate(
        [src.astype(jnp.int32), jnp.full((E_pad - E,), -1, jnp.int32)]
    ).reshape(E_pad, 1)

    x0 = params['init_embed']                                # (N, Din)
    r0 = params['init_rel']                                  # (2R, Dr)
    att_W = params['att_W']                                  # (H, Fcat1, nhid)
    att_a = params['att_a']                                  # (H, nhid, 1)
    H = nheads
    nhid = att_W.shape[2]

    # ---- GAT layer 1: all heads fused into one kernel ----
    edge_embed1 = jnp.concatenate(
        [r0[edge_type], r0[edge_type_nhop[:, 0]] + r0[edge_type_nhop[:, 1]]],
        axis=0)
    edge_feat1 = jnp.concatenate([x0[src], x0[dst], edge_embed1], axis=1)
    Fcat1 = edge_feat1.shape[1]
    Fcat1_pad = _round_up(Fcat1, LANE)
    D1 = H * nhid
    D1_pad = _round_up(D1, LANE)

    W1 = jnp.transpose(att_W, (1, 0, 2)).reshape(Fcat1, D1)  # heads stacked
    a1 = jnp.zeros((D1_pad, H), jnp.float32)                 # block-diagonal a
    e1 = jnp.zeros((H, D1_pad), jnp.float32)                 # head -> lane expander
    for h in range(H):
        a1 = a1.at[h * nhid:(h + 1) * nhid, h].set(att_a[h, :, 0])
        e1 = e1.at[h, h * nhid:(h + 1) * nhid].set(1.0)

    x1_pad = gat_layer(src_pad,
                       _pad2(edge_feat1, E_pad, Fcat1_pad),
                       _pad2(W1, Fcat1_pad, D1_pad),
                       a1, e1, n_pad=N_pad, apply_elu=True)
    x1 = x1_pad[:num_nodes, :D1]
    # TODO(synk): dropout on hidden x treated as identity (eval-mode forward).

    # ---- relation projection  r = r0 @ W_gat ----
    r = project(r0, params['gat_W'])                         # (2R, embed_dim)

    # ---- GAT layer 2 (out_att, single head) + F.elu ----
    edge_embed2 = jnp.concatenate(
        [r[edge_type], r[edge_type_nhop[:, 0]] + r[edge_type_nhop[:, 1]]],
        axis=0)
    edge_feat2 = jnp.concatenate([x1[src], x1[dst], edge_embed2], axis=1)
    Fcat2 = edge_feat2.shape[1]
    Fcat2_pad = _round_up(Fcat2, LANE)
    D2 = params['out_W'].shape[1]
    D2_pad = _round_up(D2, LANE)

    a2 = jnp.zeros((D2_pad, 1), jnp.float32).at[:D2, 0].set(params['out_a'][:, 0])
    e2 = jnp.zeros((1, D2_pad), jnp.float32).at[0, :D2].set(1.0)

    x2_pad = gat_layer(src_pad,
                       _pad2(edge_feat2, E_pad, Fcat2_pad),
                       _pad2(params['out_W'], Fcat2_pad, D2_pad),
                       a2, e2, n_pad=N_pad, apply_elu=True)  # F.elu in GAT.forward
    x2 = x2_pad[:num_nodes, :D2]

    # ---- back in KBGAT_Model.forward ----
    x_self = project(x0, params['W_entities'])               # (N, embed_dim)
    x = finalize(x2, x_self, params['bn_gamma'], params['bn_beta'])
    # TODO(synk): final dropout_layer treated as identity (eval-mode forward).
    return x, r


# ---------------------------------------------------------------------------
if __name__ == "__main__":
    key = jax.random.PRNGKey(0)
    num_nodes = 16
    num_rel = 4
    init_dim = 16                 # entity_in_dim == relation_dim
    embed_dim = 32
    nheads = 2
    nhid = embed_dim // nheads    # 16
    E = 12                        # 1-hop edges
    E2 = 4                        # 2-hop paths

    ks = jax.random.split(key, 12)
    params = {
        'init_embed': jax.random.normal(ks[0], (num_nodes, init_dim), jnp.float32) * 0.1,
        'init_rel':   jax.random.normal(ks[1], (2 * num_rel, init_dim), jnp.float32) * 0.1,
        'att_W':      jax.random.normal(ks[2], (nheads, 2 * init_dim + init_dim, nhid), jnp.float32) * 0.1,
        'att_a':      jax.random.normal(ks[3], (nheads, nhid, 1), jnp.float32) * 0.1,
        'gat_W':      jax.random.normal(ks[4], (init_dim, embed_dim), jnp.float32) * 0.1,
        'out_W':      jax.random.normal(ks[5], (2 * nheads * nhid + embed_dim, nheads * nhid), jnp.float32) * 0.1,
        'out_a':      jax.random.normal(ks[6], (nheads * nhid, 1), jnp.float32) * 0.1,
        'W_entities': jax.random.normal(ks[7], (init_dim, embed_dim), jnp.float32) * 0.1,
        'bn_gamma':   jnp.ones((1, embed_dim), jnp.float32),
        'bn_beta':    jnp.zeros((1, embed_dim), jnp.float32),
    }

    edge_index = jax.random.randint(ks[8], (2, E), 0, num_nodes, dtype=jnp.int32)
    edge_type = jax.random.randint(ks[9], (E,), 0, 2 * num_rel, dtype=jnp.int32)
    ent_cols = jax.random.randint(ks[10], (E2, 2), 0, num_nodes, dtype=jnp.int32)
    rel_cols = jax.random.randint(ks[11], (E2, 2), 0, 2 * num_rel, dtype=jnp.int32)
    # indices_2hop columns: [entity, rel1, rel2, entity]
    indices_2hop = jnp.stack(
        [ent_cols[:, 0], rel_cols[:, 0], rel_cols[:, 1], ent_cols[:, 1]], axis=1)

    fwd = jax.jit(functools.partial(kbgat_forward,
                                    num_nodes=num_nodes, nheads=nheads))
    x, r = fwd(params, edge_index, edge_type, indices_2hop)
    jax.block_until_ready((x, r))

    assert x.shape == (num_nodes, embed_dim)
    assert r.shape == (2 * num_rel, embed_dim)
    assert bool(jnp.all(jnp.isfinite(x))) and bool(jnp.all(jnp.isfinite(r)))
    print("KERNEL_OK")
</pallas_src>

<mosaic_0001>
module attributes {stable_mosaic.version = 11 : i64} {
  func.func @_gat_layer_kernel(%arg0: i32, %arg1: memref<128x1xi32, #tpu.memory_space<vmem>>, %arg2: memref<128x128xf32, #tpu.memory_space<vmem>>, %arg3: memref<128x128xf32, #tpu.memory_space<vmem>>, %arg4: memref<128x2xf32, #tpu.memory_space<vmem>>, %arg5: memref<2x128xf32, #tpu.memory_space<vmem>>, %arg6: memref<128x128xf32, #tpu.memory_space<vmem>>, %arg7: memref<1x2xf32, #tpu.memory_space<vmem>>, %arg8: memref<128x2xf32, #tpu.memory_space<vmem>>) attributes {dimension_semantics = [#tpu.dimension_semantics<arbitrary>], iteration_bounds = array<i64: 1>, scalar_prefetch = 0 : i64, scratch_operands = 2 : i64, tpu.core_type = #tpu.core_type<tc>, window_params = [{transform_indices = @transform_0, window_bounds = array<i64: 128, 1>}, {transform_indices = @transform_1, window_bounds = array<i64: 128, 128>}, {pipeline_mode = #tpu.pipeline_mode<synchronous>, transform_indices = @transform_2, window_bounds = array<i64: 128, 128>}, {pipeline_mode = #tpu.pipeline_mode<synchronous>, transform_indices = @transform_3, window_bounds = array<i64: 128, 2>}, {pipeline_mode = #tpu.pipeline_mode<synchronous>, transform_indices = @transform_4, window_bounds = array<i64: 2, 128>}, {pipeline_mode = #tpu.pipeline_mode<synchronous>, transform_indices = @transform_5, window_bounds = array<i64: 128, 128>}]} {
    %c0_i32 = arith.constant 0 : i32
    %0 = arith.cmpi eq, %arg0, %c0_i32 : i32
    %1 = arith.extui %0 : i1 to i32
    %c0_i32_0 = arith.constant 0 : i32
    %2 = arith.cmpi ne, %1, %c0_i32_0 : i32
    scf.if %2 {
      %cst_33 = arith.constant -1.000000e+30 : f32
      %50 = vector.broadcast %cst_33 : f32 to vector<1x2xf32>
      %c0_34 = arith.constant 0 : index
      %c0_35 = arith.constant 0 : index
      %51 = vector.load %arg7[%c0_34, %c0_35] : memref<1x2xf32, #tpu.memory_space<vmem>>, vector<1x2xf32>
      tpu.vector_store %arg7[%c0_34, %c0_35], %50 {strides = array<i32>} : memref<1x2xf32, #tpu.memory_space<vmem>>, vector<1x2xf32>,
      %cst_36 = arith.constant 0.000000e+00 : f32
      %52 = vector.broadcast %cst_36 : f32 to vector<128x2xf32>
      %c0_37 = arith.constant 0 : index
      %c0_38 = arith.constant 0 : index
      %53 = vector.load %arg8[%c0_37, %c0_38] : memref<128x2xf32, #tpu.memory_space<vmem>>, vector<128x2xf32>
      tpu.vector_store %arg8[%c0_37, %c0_38], %52 {strides = array<i32>} : memref<128x2xf32, #tpu.memory_space<vmem>>, vector<128x2xf32>,
      %cst_39 = arith.constant 0.000000e+00 : f32
      %54 = vector.broadcast %cst_39 : f32 to vector<128x128xf32>
      %c0_40 = arith.constant 0 : index
      %c0_41 = arith.constant 0 : index
      %55 = vector.load %arg6[%c0_40, %c0_41] : memref<128x128xf32, #tpu.memory_space<vmem>>, vector<128x128xf32>
      tpu.vector_store %arg6[%c0_40, %c0_41], %54 {strides = array<i32>} : memref<128x128xf32, #tpu.memory_space<vmem>>, vector<128x128xf32>,
    } else {
    }
    %c0 = arith.constant 0 : index
    %c0_1 = arith.constant 0 : index
    %3 = vector.load %arg1[%c0, %c0_1] : memref<128x1xi32, #tpu.memory_space<vmem>>, vector<128x1xi32>
    %4 = tpu.iota {dimensions = array<i32: 1>} : vector<128x128xi32>
    %5 = vector.broadcast %3 : vector<128x1xi32> to vector<128x128xi32>
    %6 = arith.cmpi eq, %4, %5 : vector<128x128xi32>
    %7 = arith.extui %6 : vector<128x128xi1> to vector<128x128xi32>
    %8 = arith.sitofp %7 : vector<128x128xi32> to vector<128x128xf32>
    %c0_2 = arith.constant 0 : index
    %c0_3 = arith.constant 0 : index
    %9 = vector.load %arg2[%c0_2, %c0_3] : memref<128x128xf32, #tpu.memory_space<vmem>>, vector<128x128xf32>
    %c0_4 = arith.constant 0 : index
    %c0_5 = arith.constant 0 : index
    %10 = vector.load %arg3[%c0_4, %c0_5] : memref<128x128xf32, #tpu.memory_space<vmem>>, vector<128x128xf32>
    %cst = arith.constant dense<0.000000e+00> : vector<128x128xf32>
    %11 = tpu.matmul %9, %10, %cst {dimension_numbers = #tpu.dot_dimension_numbers<[1], [0], [0], [1], [0, 0, 1, 1], [], []>} : vector<128x128xf32>, vector<128x128xf32>, vector<128x128xf32> -> vector<128x128xf32>
    %c0_6 = arith.constant 0 : index
    %c0_7 = arith.constant 0 : index
    %12 = vector.load %arg4[%c0_6, %c0_7] : memref<128x2xf32, #tpu.memory_space<vmem>>, vector<128x2xf32>
    %cst_8 = arith.constant dense<0.000000e+00> : vector<128x2xf32>
    %13 = tpu.matmul %11, %12, %cst_8 {dimension_numbers = #tpu.dot_dimension_numbers<[1], [0], [0], [1], [0, 0, 1, 1], [], []>} : vector<128x128xf32>, vector<128x2xf32>, vector<128x2xf32> -> vector<128x2xf32>
    %cst_9 = arith.constant 0.000000e+00 : f32
    %14 = vector.broadcast %cst_9 : f32 to vector<128x2xf32>
    %15 = arith.cmpf ogt, %13, %14 : vector<128x2xf32>
    %cst_10 = arith.constant 2.000000e-01 : f32
    %16 = vector.broadcast %cst_10 : f32 to vector<128x2xf32>
    %17 = arith.mulf %16, %13 : vector<128x2xf32>
    %18 = arith.select %15, %13, %17 : vector<128x2xi1>, vector<128x2xf32>
    %c0_11 = arith.constant 0 : index
    %c0_12 = arith.constant 0 : index
    %19 = vector.load %arg7[%c0_11, %c0_12] : memref<1x2xf32, #tpu.memory_space<vmem>>, vector<1x2xf32>
    %cst_13 = arith.constant dense<0xFF800000> : vector<2xf32>
    %20 = vector.multi_reduction <maximumf>, %18, %cst_13 [0] : vector<128x2xf32> to vector<2xf32>
    %21 = vector.shape_cast %20 : vector<2xf32> to vector<1x2xf32>
    %22 = arith.maximumf %19, %21 : vector<1x2xf32>
    %c0_14 = arith.constant 0 : index
    %c0_15 = arith.constant 0 : index
    %23 = vector.load %arg7[%c0_14, %c0_15] : memref<1x2xf32, #tpu.memory_space<vmem>>, vector<1x2xf32>
    tpu.vector_store %arg7[%c0_14, %c0_15], %22 {strides = array<i32>} : memref<1x2xf32, #tpu.memory_space<vmem>>, vector<1x2xf32>,
    %24 = arith.subf %19, %22 : vector<1x2xf32>
    %25 = math.exp %24 : vector<1x2xf32>
    %26 = vector.broadcast %22 : vector<1x2xf32> to vector<128x2xf32>
    %27 = arith.subf %18, %26 : vector<128x2xf32>
    %cst_16 = arith.constant -6.000000e+01 : f32
    %28 = vector.broadcast %cst_16 : f32 to vector<128x2xf32>
    %29 = arith.maximumf %27, %28 : vector<128x2xf32>
    %30 = math.exp %29 : vector<128x2xf32>
    %c0_17 = arith.constant 0 : index
    %c0_18 = arith.constant 0 : index
    %31 = vector.load %arg8[%c0_17, %c0_18] : memref<128x2xf32, #tpu.memory_space<vmem>>, vector<128x2xf32>
    %32 = vector.broadcast %25 : vector<1x2xf32> to vector<128x2xf32>
    %33 = arith.mulf %32, %31 : vector<128x2xf32>
    %cst_19 = arith.constant dense<0.000000e+00> : vector<128x2xf32>
    %34 = tpu.matmul %8, %30, %cst_19 {dimension_numbers = #tpu.dot_dimension_numbers<[0], [0], [1], [1], [0, 1, 1, 1], [], []>} : vector<128x128xf32>, vector<128x2xf32>, vector<128x2xf32> -> vector<128x2xf32>
    %35 = arith.addf %33, %34 : vector<128x2xf32>
    %c0_20 = arith.constant 0 : index
    %c0_21 = arith.constant 0 : index
    %36 = vector.load %arg8[%c0_20, %c0_21] : memref<128x2xf32, #tpu.memory_space<vmem>>, vector<128x2xf32>
    tpu.vector_store %arg8[%c0_20, %c0_21], %35 {strides = array<i32>} : memref<128x2xf32, #tpu.memory_space<vmem>>, vector<128x2xf32>,
    %c0_22 = arith.constant 0 : index
    %c0_23 = arith.constant 0 : index
    %37 = vector.load %arg5[%c0_22, %c0_23] : memref<2x128xf32, #tpu.memory_space<vmem>>, vector<2x128xf32>
    %cst_24 = arith.constant dense<0.000000e+00> : vector<128x128xf32>
    %38 = tpu.matmul %30, %37, %cst_24 {dimension_numbers = #tpu.dot_dimension_numbers<[1], [0], [0], [1], [0, 0, 1, 1], [], []>} : vector<128x2xf32>, vector<2x128xf32>, vector<128x128xf32> -> vector<128x128xf32>
    %cst_25 = arith.constant dense<0.000000e+00> : vector<1x128xf32>
    %39 = tpu.matmul %25, %37, %cst_25 {dimension_numbers = #tpu.dot_dimension_numbers<[1], [0], [0], [1], [0, 0, 1, 1], [], []>} : vector<1x2xf32>, vector<2x128xf32>, vector<1x128xf32> -> vector<1x128xf32>
    %c0_26 = arith.constant 0 : index
    %c0_27 = arith.constant 0 : index
    %40 = vector.load %arg6[%c0_26, %c0_27] : memref<128x128xf32, #tpu.memory_space<vmem>>, vector<128x128xf32>
    %41 = vector.broadcast %39 : vector<1x128xf32> to vector<128x128xf32>
    %42 = arith.mulf %41, %40 : vector<128x128xf32>
    %43 = arith.mulf %38, %11 : vector<128x128xf32>
    %cst_28 = arith.constant dense<0.000000e+00> : vector<128x128xf32>
    %44 = tpu.matmul %8, %43, %cst_28 {dimension_numbers = #tpu.dot_dimension_numbers<[0], [0], [1], [1], [0, 1, 1, 1], [], []>} : vector<128x128xf32>, vector<128x128xf32>, vector<128x128xf32> -> vector<128x128xf32>
    %45 = arith.addf %42, %44 : vector<128x128xf32>
    %c0_29 = arith.constant 0 : index
    %c0_30 = arith.constant 0 : index
    %46 = vector.load %arg6[%c0_29, %c0_30] : memref<128x128xf32, #tpu.memory_space<vmem>>, vector<128x128xf32>
    tpu.vector_store %arg6[%c0_29, %c0_30], %45 {strides = array<i32>} : memref<128x128xf32, #tpu.memory_space<vmem>>, vector<128x128xf32>,
    %c0_i32_31 = arith.constant 0 : i32
    %47 = arith.cmpi eq, %arg0, %c0_i32_31 : i32
    %48 = arith.extui %47 : i1 to i32
    %c0_i32_32 = arith.constant 0 : i32
    %49 = arith.cmpi ne, %48, %c0_i32_32 : i32
    scf.if %49 {
      %c0_33 = arith.constant 0 : index
      %c0_34 = arith.constant 0 : index
      %50 = vector.load %arg8[%c0_33, %c0_34] : memref<128x2xf32, #tpu.memory_space<vmem>>, vector<128x2xf32>
      %cst_35 = arith.constant dense<0.000000e+00> : vector<128x128xf32>
      %51 = tpu.matmul %50, %37, %cst_35 {dimension_numbers = #tpu.dot_dimension_numbers<[1], [0], [0], [1], [0, 0, 1, 1], [], []>} : vector<128x2xf32>, vector<2x128xf32>, vector<128x128xf32> -> vector<128x128xf32>
      %c0_36 = arith.constant 0 : index
      %c0_37 = arith.constant 0 : index
      %52 = vector.load %arg6[%c0_36, %c0_37] : memref<128x128xf32, #tpu.memory_space<vmem>>, vector<128x128xf32>
      %cst_38 = arith.constant 1.000000e-16 : f32
      %53 = vector.broadcast %cst_38 : f32 to vector<128x128xf32>
      %54 = arith.addf %51, %53 : vector<128x128xf32>
      %55 = arith.divf %52, %54 : vector<128x128xf32>
      %cst_39 = arith.constant 0.000000e+00 : f32
      %56 = vector.broadcast %cst_39 : f32 to vector<128x128xf32>
      %57 = arith.cmpf ogt, %55, %56 : vector<128x128xf32>
      %cst_40 = arith.constant 0.000000e+00 : f32
      %58 = vector.broadcast %cst_40 : f32 to vector<128x128xf32>
      %59 = arith.minimumf %55, %58 : vector<128x128xf32>
      %60 = math.exp %59 : vector<128x128xf32>
      %cst_41 = arith.constant 1.000000e+00 : f32
      %61 = vector.broadcast %cst_41 : f32 to vector<128x128xf32>
      %62 = arith.subf %60, %61 : vector<128x128xf32>
      %63 = arith.select %57, %55, %62 : vector<128x128xi1>, vector<128x128xf32>
      %c0_42 = arith.constant 0 : index
      %c0_43 = arith.constant 0 : index
      %64 = vector.load %arg6[%c0_42, %c0_43] : memref<128x128xf32, #tpu.memory_space<vmem>>, vector<128x128xf32>
      tpu.vector_store %arg6[%c0_42, %c0_43], %63 {strides = array<i32>} : memref<128x128xf32, #tpu.memory_space<vmem>>, vector<128x128xf32>,
    } else {
    }
    return
  }
  func.func @transform_0(%arg0: i32) -> (i32, i32) {
    %c0_i32 = arith.constant 0 : i32
    %c0_i32_0 = arith.constant 0 : i32
    return %arg0, %c0_i32 : i32, i32
  }
  func.func @transform_1(%arg0: i32) -> (i32, i32) {
    %c0_i32 = arith.constant 0 : i32
    %c0_i32_0 = arith.constant 0 : i32
    return %arg0, %c0_i32 : i32, i32
  }
  func.func @transform_2(%arg0: i32) -> (i32, i32) {
    %c0_i32 = arith.constant 0 : i32
    %c0_i32_0 = arith.constant 0 : i32
    %c0_i32_1 = arith.constant 0 : i32
    return %c0_i32, %c0_i32_0 : i32, i32
  }
  func.func @transform_3(%arg0: i32) -> (i32, i32) {
    %c0_i32 = arith.constant 0 : i32
    %c0_i32_0 = arith.constant 0 : i32
    %c0_i32_1 = arith.constant 0 : i32
    return %c0_i32, %c0_i32_0 : i32, i32
  }
  func.func @transform_4(%arg0: i32) -> (i32, i32) {
    %c0_i32 = arith.constant 0 : i32
    %c0_i32_0 = arith.constant 0 : i32
    %c0_i32_1 = arith.constant 0 : i32
    return %c0_i32, %c0_i32_0 : i32, i32
  }
  func.func @transform_5(%arg0: i32) -> (i32, i32) {
    %c0_i32 = arith.constant 0 : i32
    %c0_i32_0 = arith.constant 0 : i32
    %c0_i32_1 = arith.constant 0 : i32
    return %c0_i32, %c0_i32_0 : i32, i32
  }
}

module attributes {stable_mosaic.version = 11 : i64} {
  func.func @_finalize_kernel(%arg0: memref<16x32xf32, #tpu.memory_space<vmem>>, %arg1: memref<16x32xf32, #tpu.memory_space<vmem>>, %arg2: memref<1x32xf32, #tpu.memory_space<vmem>>, %arg3: memref<1x32xf32, #tpu.memory_space<vmem>>, %arg4: memref<16x32xf32, #tpu.memory_space<vmem>>) attributes {dimension_semantics = [], scalar_prefetch = 0 : i64, scratch_operands = 0 : i64, tpu.core_type = #tpu.core_type<tc>} {
    %c0 = arith.constant 0 : index
    %c0_0 = arith.constant 0 : index
    %0 = vector.load %arg0[%c0, %c0_0] : memref<16x32xf32, #tpu.memory_space<vmem>>, vector<16x32xf32>
    %c0_1 = arith.constant 0 : index
    %c0_2 = arith.constant 0 : index
    %1 = vector.load %arg1[%c0_1, %c0_2] : memref<16x32xf32, #tpu.memory_space<vmem>>, vector<16x32xf32>
    %2 = arith.addf %0, %1 : vector<16x32xf32>
    %cst = arith.constant dense<0.000000e+00> : vector<32xf32>
    %3 = vector.multi_reduction <add>, %2, %cst [0] : vector<16x32xf32> to vector<32xf32>
    %4 = vector.shape_cast %3 : vector<32xf32> to vector<1x32xf32>
    %cst_3 = arith.constant 1.600000e+01 : f32
    %5 = vector.broadcast %cst_3 : f32 to vector<1x32xf32>
    %6 = arith.divf %4, %5 : vector<1x32xf32>
    %7 = vector.broadcast %6 : vector<1x32xf32> to vector<16x32xf32>
    %8 = arith.subf %2, %7 : vector<16x32xf32>
    %9 = arith.mulf %8, %8 : vector<16x32xf32>
    %cst_4 = arith.constant dense<0.000000e+00> : vector<32xf32>
    %10 = vector.multi_reduction <add>, %9, %cst_4 [0] : vector<16x32xf32> to vector<32xf32>
    %11 = vector.shape_cast %10 : vector<32xf32> to vector<1x32xf32>
    %cst_5 = arith.constant 1.600000e+01 : f32
    %12 = vector.broadcast %cst_5 : f32 to vector<1x32xf32>
    %13 = arith.divf %11, %12 : vector<1x32xf32>
    %14 = vector.broadcast %6 : vector<1x32xf32> to vector<16x32xf32>
    %15 = arith.subf %2, %14 : vector<16x32xf32>
    %cst_6 = arith.constant 9.99999974E-6 : f32
    %16 = vector.broadcast %cst_6 : f32 to vector<1x32xf32>
    %17 = arith.addf %13, %16 : vector<1x32xf32>
    %18 = math.rsqrt %17 : vector<1x32xf32>
    %19 = vector.broadcast %18 : vector<1x32xf32> to vector<16x32xf32>
    %20 = arith.mulf %15, %19 : vector<16x32xf32>
    %c0_7 = arith.constant 0 : index
    %c0_8 = arith.constant 0 : index
    %21 = vector.load %arg2[%c0_7, %c0_8] : memref<1x32xf32, #tpu.memory_space<vmem>>, vector<1x32xf32>
    %22 = vector.broadcast %21 : vector<1x32xf32> to vector<16x32xf32>
    %23 = arith.mulf %20, %22 : vector<16x32xf32>
    %c0_9 = arith.constant 0 : index
    %c0_10 = arith.constant 0 : index
    %24 = vector.load %arg3[%c0_9, %c0_10] : memref<1x32xf32, #tpu.memory_space<vmem>>, vector<1x32xf32>
    %25 = vector.broadcast %24 : vector<1x32xf32> to vector<16x32xf32>
    %26 = arith.addf %23, %25 : vector<16x32xf32>
    %c0_11 = arith.constant 0 : index
    %c0_12 = arith.constant 0 : index
    %27 = vector.load %arg4[%c0_11, %c0_12] : memref<16x32xf32, #tpu.memory_space<vmem>>, vector<16x32xf32>
    tpu.vector_store %arg4[%c0_11, %c0_12], %26 {strides = array<i32>} : memref<16x32xf32, #tpu.memory_space<vmem>>, vector<16x32xf32>,
    return
  }
}

module attributes {stable_mosaic.version = 11 : i64} {
  func.func @_gat_layer_kernel(%arg0: i32, %arg1: memref<128x1xi32, #tpu.memory_space<vmem>>, %arg2: memref<128x128xf32, #tpu.memory_space<vmem>>, %arg3: memref<128x128xf32, #tpu.memory_space<vmem>>, %arg4: memref<128x1xf32, #tpu.memory_space<vmem>>, %arg5: memref<1x128xf32, #tpu.memory_space<vmem>>, %arg6: memref<128x128xf32, #tpu.memory_space<vmem>>, %arg7: memref<1x1xf32, #tpu.memory_space<vmem>>, %arg8: memref<128x1xf32, #tpu.memory_space<vmem>>) attributes {dimension_semantics = [#tpu.dimension_semantics<arbitrary>], iteration_bounds = array<i64: 1>, scalar_prefetch = 0 : i64, scratch_operands = 2 : i64, tpu.core_type = #tpu.core_type<tc>, window_params = [{transform_indices = @transform_0, window_bounds = array<i64: 128, 1>}, {transform_indices = @transform_1, window_bounds = array<i64: 128, 128>}, {pipeline_mode = #tpu.pipeline_mode<synchronous>, transform_indices = @transform_2, window_bounds = array<i64: 128, 128>}, {pipeline_mode = #tpu.pipeline_mode<synchronous>, transform_indices = @transform_3, window_bounds = array<i64: 128, 1>}, {pipeline_mode = #tpu.pipeline_mode<synchronous>, transform_indices = @transform_4, window_bounds = array<i64: 1, 128>}, {pipeline_mode = #tpu.pipeline_mode<synchronous>, transform_indices = @transform_5, window_bounds = array<i64: 128, 128>}]} {
    %c0_i32 = arith.constant 0 : i32
    %0 = arith.cmpi eq, %arg0, %c0_i32 : i32
    %1 = arith.extui %0 : i1 to i32
    %c0_i32_0 = arith.constant 0 : i32
    %2 = arith.cmpi ne, %1, %c0_i32_0 : i32
    scf.if %2 {
      %cst_33 = arith.constant -1.000000e+30 : f32
      %50 = vector.broadcast %cst_33 : f32 to vector<1x1xf32>
      %c0_34 = arith.constant 0 : index
      %c0_35 = arith.constant 0 : index
      %51 = vector.load %arg7[%c0_34, %c0_35] : memref<1x1xf32, #tpu.memory_space<vmem>>, vector<1x1xf32>
      tpu.vector_store %arg7[%c0_34, %c0_35], %50 {strides = array<i32>} : memref<1x1xf32, #tpu.memory_space<vmem>>, vector<1x1xf32>,
      %cst_36 = arith.constant 0.000000e+00 : f32
      %52 = vector.broadcast %cst_36 : f32 to vector<128x1xf32>
      %c0_37 = arith.constant 0 : index
      %c0_38 = arith.constant 0 : index
      %53 = vector.load %arg8[%c0_37, %c0_38] : memref<128x1xf32, #tpu.memory_space<vmem>>, vector<128x1xf32>
      tpu.vector_store %arg8[%c0_37, %c0_38], %52 {strides = array<i32>} : memref<128x1xf32, #tpu.memory_space<vmem>>, vector<128x1xf32>,
      %cst_39 = arith.constant 0.000000e+00 : f32
      %54 = vector.broadcast %cst_39 : f32 to vector<128x128xf32>
      %c0_40 = arith.constant 0 : index
      %c0_41 = arith.constant 0 : index
      %55 = vector.load %arg6[%c0_40, %c0_41] : memref<128x128xf32, #tpu.memory_space<vmem>>, vector<128x128xf32>
      tpu.vector_store %arg6[%c0_40, %c0_41], %54 {strides = array<i32>} : memref<128x128xf32, #tpu.memory_space<vmem>>, vector<128x128xf32>,
    } else {
    }
    %c0 = arith.constant 0 : index
    %c0_1 = arith.constant 0 : index
    %3 = vector.load %arg1[%c0, %c0_1] : memref<128x1xi32, #tpu.memory_space<vmem>>, vector<128x1xi32>
    %4 = tpu.iota {dimensions = array<i32: 1>} : vector<128x128xi32>
    %5 = vector.broadcast %3 : vector<128x1xi32> to vector<128x128xi32>
    %6 = arith.cmpi eq, %4, %5 : vector<128x128xi32>
    %7 = arith.extui %6 : vector<128x128xi1> to vector<128x128xi32>
    %8 = arith.sitofp %7 : vector<128x128xi32> to vector<128x128xf32>
    %c0_2 = arith.constant 0 : index
    %c0_3 = arith.constant 0 : index
    %9 = vector.load %arg2[%c0_2, %c0_3] : memref<128x128xf32, #tpu.memory_space<vmem>>, vector<128x128xf32>
    %c0_4 = arith.constant 0 : index
    %c0_5 = arith.constant 0 : index
    %10 = vector.load %arg3[%c0_4, %c0_5] : memref<128x128xf32, #tpu.memory_space<vmem>>, vector<128x128xf32>
    %cst = arith.constant dense<0.000000e+00> : vector<128x128xf32>
    %11 = tpu.matmul %9, %10, %cst {dimension_numbers = #tpu.dot_dimension_numbers<[1], [0], [0], [1], [0, 0, 1, 1], [], []>} : vector<128x128xf32>, vector<128x128xf32>, vector<128x128xf32> -> vector<128x128xf32>
    %c0_6 = arith.constant 0 : index
    %c0_7 = arith.constant 0 : index
    %12 = vector.load %arg4[%c0_6, %c0_7] : memref<128x1xf32, #tpu.memory_space<vmem>>, vector<128x1xf32>
    %cst_8 = arith.constant dense<0.000000e+00> : vector<128x1xf32>
    %13 = tpu.matmul %11, %12, %cst_8 {dimension_numbers = #tpu.dot_dimension_numbers<[1], [0], [0], [1], [0, 0, 1, 1], [], []>} : vector<128x128xf32>, vector<128x1xf32>, vector<128x1xf32> -> vector<128x1xf32>
    %cst_9 = arith.constant 0.000000e+00 : f32
    %14 = vector.broadcast %cst_9 : f32 to vector<128x1xf32>
    %15 = arith.cmpf ogt, %13, %14 : vector<128x1xf32>
    %cst_10 = arith.constant 2.000000e-01 : f32
    %16 = vector.broadcast %cst_10 : f32 to vector<128x1xf32>
    %17 = arith.mulf %16, %13 : vector<128x1xf32>
    %18 = arith.select %15, %13, %17 : vector<128x1xi1>, vector<128x1xf32>
    %c0_11 = arith.constant 0 : index
    %c0_12 = arith.constant 0 : index
    %19 = vector.load %arg7[%c0_11, %c0_12] : memref<1x1xf32, #tpu.memory_space<vmem>>, vector<1x1xf32>
    %cst_13 = arith.constant dense<0xFF800000> : vector<1xf32>
    %20 = vector.multi_reduction <maximumf>, %18, %cst_13 [0] : vector<128x1xf32> to vector<1xf32>
    %21 = vector.shape_cast %20 : vector<1xf32> to vector<1x1xf32>
    %22 = arith.maximumf %19, %21 : vector<1x1xf32>
    %c0_14 = arith.constant 0 : index
    %c0_15 = arith.constant 0 : index
    %23 = vector.load %arg7[%c0_14, %c0_15] : memref<1x1xf32, #tpu.memory_space<vmem>>, vector<1x1xf32>
    tpu.vector_store %arg7[%c0_14, %c0_15], %22 {strides = array<i32>} : memref<1x1xf32, #tpu.memory_space<vmem>>, vector<1x1xf32>,
    %24 = arith.subf %19, %22 : vector<1x1xf32>
    %25 = math.exp %24 : vector<1x1xf32>
    %26 = vector.broadcast %22 : vector<1x1xf32> to vector<128x1xf32>
    %27 = arith.subf %18, %26 : vector<128x1xf32>
    %cst_16 = arith.constant -6.000000e+01 : f32
    %28 = vector.broadcast %cst_16 : f32 to vector<128x1xf32>
    %29 = arith.maximumf %27, %28 : vector<128x1xf32>
    %30 = math.exp %29 : vector<128x1xf32>
    %c0_17 = arith.constant 0 : index
    %c0_18 = arith.constant 0 : index
    %31 = vector.load %arg8[%c0_17, %c0_18] : memref<128x1xf32, #tpu.memory_space<vmem>>, vector<128x1xf32>
    %32 = vector.broadcast %25 : vector<1x1xf32> to vector<128x1xf32>
    %33 = arith.mulf %32, %31 : vector<128x1xf32>
    %cst_19 = arith.constant dense<0.000000e+00> : vector<128x1xf32>
    %34 = tpu.matmul %8, %30, %cst_19 {dimension_numbers = #tpu.dot_dimension_numbers<[0], [0], [1], [1], [0, 1, 1, 1], [], []>} : vector<128x128xf32>, vector<128x1xf32>, vector<128x1xf32> -> vector<128x1xf32>
    %35 = arith.addf %33, %34 : vector<128x1xf32>
    %c0_20 = arith.constant 0 : index
    %c0_21 = arith.constant 0 : index
    %36 = vector.load %arg8[%c0_20, %c0_21] : memref<128x1xf32, #tpu.memory_space<vmem>>, vector<128x1xf32>
    tpu.vector_store %arg8[%c0_20, %c0_21], %35 {strides = array<i32>} : memref<128x1xf32, #tpu.memory_space<vmem>>, vector<128x1xf32>,
    %c0_22 = arith.constant 0 : index
    %c0_23 = arith.constant 0 : index
    %37 = vector.load %arg5[%c0_22, %c0_23] : memref<1x128xf32, #tpu.memory_space<vmem>>, vector<1x128xf32>
    %cst_24 = arith.constant dense<0.000000e+00> : vector<128x128xf32>
    %38 = tpu.matmul %30, %37, %cst_24 {dimension_numbers = #tpu.dot_dimension_numbers<[1], [0], [0], [1], [0, 0, 1, 1], [], []>} : vector<128x1xf32>, vector<1x128xf32>, vector<128x128xf32> -> vector<128x128xf32>
    %cst_25 = arith.constant dense<0.000000e+00> : vector<1x128xf32>
    %39 = tpu.matmul %25, %37, %cst_25 {dimension_numbers = #tpu.dot_dimension_numbers<[1], [0], [0], [1], [0, 0, 1, 1], [], []>} : vector<1x1xf32>, vector<1x128xf32>, vector<1x128xf32> -> vector<1x128xf32>
    %c0_26 = arith.constant 0 : index
    %c0_27 = arith.constant 0 : index
    %40 = vector.load %arg6[%c0_26, %c0_27] : memref<128x128xf32, #tpu.memory_space<vmem>>, vector<128x128xf32>
    %41 = vector.broadcast %39 : vector<1x128xf32> to vector<128x128xf32>
    %42 = arith.mulf %41, %40 : vector<128x128xf32>
    %43 = arith.mulf %38, %11 : vector<128x128xf32>
    %cst_28 = arith.constant dense<0.000000e+00> : vector<128x128xf32>
    %44 = tpu.matmul %8, %43, %cst_28 {dimension_numbers = #tpu.dot_dimension_numbers<[0], [0], [1], [1], [0, 1, 1, 1], [], []>} : vector<128x128xf32>, vector<128x128xf32>, vector<128x128xf32> -> vector<128x128xf32>
    %45 = arith.addf %42, %44 : vector<128x128xf32>
    %c0_29 = arith.constant 0 : index
    %c0_30 = arith.constant 0 : index
    %46 = vector.load %arg6[%c0_29, %c0_30] : memref<128x128xf32, #tpu.memory_space<vmem>>, vector<128x128xf32>
    tpu.vector_store %arg6[%c0_29, %c0_30], %45 {strides = array<i32>} : memref<128x128xf32, #tpu.memory_space<vmem>>, vector<128x128xf32>,
    %c0_i32_31 = arith.constant 0 : i32
    %47 = arith.cmpi eq, %arg0, %c0_i32_31 : i32
    %48 = arith.extui %47 : i1 to i32
    %c0_i32_32 = arith.constant 0 : i32
    %49 = arith.cmpi ne, %48, %c0_i32_32 : i32
    scf.if %49 {
      %c0_33 = arith.constant 0 : index
      %c0_34 = arith.constant 0 : index
      %50 = vector.load %arg8[%c0_33, %c0_34] : memref<128x1xf32, #tpu.memory_space<vmem>>, vector<128x1xf32>
      %cst_35 = arith.constant dense<0.000000e+00> : vector<128x128xf32>
      %51 = tpu.matmul %50, %37, %cst_35 {dimension_numbers = #tpu.dot_dimension_numbers<[1], [0], [0], [1], [0, 0, 1, 1], [], []>} : vector<128x1xf32>, vector<1x128xf32>, vector<128x128xf32> -> vector<128x128xf32>
      %c0_36 = arith.constant 0 : index
      %c0_37 = arith.constant 0 : index
      %52 = vector.load %arg6[%c0_36, %c0_37] : memref<128x128xf32, #tpu.memory_space<vmem>>, vector<128x128xf32>
      %cst_38 = arith.constant 1.000000e-16 : f32
      %53 = vector.broadcast %cst_38 : f32 to vector<128x128xf32>
      %54 = arith.addf %51, %53 : vector<128x128xf32>
      %55 = arith.divf %52, %54 : vector<128x128xf32>
      %cst_39 = arith.constant 0.000000e+00 : f32
      %56 = vector.broadcast %cst_39 : f32 to vector<128x128xf32>
      %57 = arith.cmpf ogt, %55, %56 : vector<128x128xf32>
      %cst_40 = arith.constant 0.000000e+00 : f32
      %58 = vector.broadcast %cst_40 : f32 to vector<128x128xf32>
      %59 = arith.minimumf %55, %58 : vector<128x128xf32>
      %60 = math.exp %59 : vector<128x128xf32>
      %cst_41 = arith.constant 1.000000e+00 : f32
      %61 = vector.broadcast %cst_41 : f32 to vector<128x128xf32>
      %62 = arith.subf %60, %61 : vector<128x128xf32>
      %63 = arith.select %57, %55, %62 : vector<128x128xi1>, vector<128x128xf32>
      %c0_42 = arith.constant 0 : index
      %c0_43 = arith.constant 0 : index
      %64 = vector.load %arg6[%c0_42, %c0_43] : memref<128x128xf32, #tpu.memory_space<vmem>>, vector<128x128xf32>
      tpu.vector_store %arg6[%c0_42, %c0_43], %63 {strides = array<i32>} : memref<128x128xf32, #tpu.memory_space<vmem>>, vector<128x128xf32>,
    } else {
    }
    return
  }
  func.func @transform_0(%arg0: i32) -> (i32, i32) {
    %c0_i32 = arith.constant 0 : i32
    %c0_i32_0 = arith.constant 0 : i32
    return %arg0, %c0_i32 : i32, i32
  }
  func.func @transform_1(%arg0: i32) -> (i32, i32) {
    %c0_i32 = arith.constant 0 : i32
    %c0_i32_0 = arith.constant 0 : i32
    return %arg0, %c0_i32 : i32, i32
  }
  func.func @transform_2(%arg0: i32) -> (i32, i32) {
    %c0_i32 = arith.constant 0 : i32
    %c0_i32_0 = arith.constant 0 : i32
    %c0_i32_1 = arith.constant 0 : i32
    return %c0_i32, %c0_i32_0 : i32, i32
  }
  func.func @transform_3(%arg0: i32) -> (i32, i32) {
    %c0_i32 = arith.constant 0 : i32
    %c0_i32_0 = arith.constant 0 : i32
    %c0_i32_1 = arith.constant 0 : i32
    return %c0_i32, %c0_i32_0 : i32, i32
  }
  func.func @transform_4(%arg0: i32) -> (i32, i32) {
    %c0_i32 = arith.constant 0 : i32
    %c0_i32_0 = arith.constant 0 : i32
    %c0_i32_1 = arith.constant 0 : i32
    return %c0_i32, %c0_i32_0 : i32, i32
  }
  func.func @transform_5(%arg0: i32) -> (i32, i32) {
    %c0_i32 = arith.constant 0 : i32
    %c0_i32_0 = arith.constant 0 : i32
    %c0_i32_1 = arith.constant 0 : i32
    return %c0_i32, %c0_i32_0 : i32, i32
  }
}

</mosaic_0001>

<llo_original>
// kernel: kbgat_forward.5
$region0: #{kbgat_forward.5}
  #allocation0 [shape = 'u32[]', space=smem, size = 0x4, offset = 0x4, fixed_abs, tag = 'smem constant byte address 0x4 - core index']
  #allocation1 [shape = 'u32[144,128]{1,0:T(1,128)}', space=vmem, size = 0x12000, scoped, tag = 'internal scratch']
  %s0 = inlined_call_operand.vmem [shape: f32[16,32], index: 0, kind: input, shape index: {}]
  %s1 = inlined_call_operand.vmem [shape: f32[16,32], index: 1, kind: input, shape index: {}]
  %s2 = inlined_call_operand.vmem [shape: f32[1,32], index: 2, kind: input, shape index: {}]
  %s3 = inlined_call_operand.vmem [shape: f32[1,32], index: 3, kind: input, shape index: {}]
  %s4 = inlined_call_operand.hbm [shape: f32[16,32], index: 4, kind: output, shape index: {}]
  %s5 = sld [smem:[#allocation0]]
  $region26: #{kbgat_forward.5} parent=0
    _
  %s7 = ssub.s32 1, %s5
  %s8 = scalar_select 0, %s7, %s5
  $region1: #{kbgat_forward.5} parent=0
    #allocation2 [shape = 'u8[8192]{0}', space=vmem, size = 0x2000, scoped, tag = 'output window, operand 0, single buffered']
    #allocation3 [shape = 's32[1]{0}', space=sflag, size = 0x4, scoped, tag = 'scoped memory for kbgat_forward.5']
    %9 = vsyncpa [#allocation3], 0
    // Predicated region
    $region2: #{kbgat_forward.5} parent=1 // pred_check
      _
    $region3: #{kbgat_forward.5} parent=1 // pred_check_branch
      %11 = sbr.rel (0) target = $region5
    $region4: #{kbgat_forward.5} parent=1 // pred_region
      _
    $region5: #{kbgat_forward.5} parent=1 // pred_fallthru
      _
    // Predicated region
    $region6: #{kbgat_forward.5} parent=1 // pred_check
      _
    $region7: #{kbgat_forward.5} parent=1 // pred_check_branch
      %13 = sbr.rel (0) target = $region9
    $region8: #{kbgat_forward.5} parent=1 // pred_region
      _
    $region9: #{kbgat_forward.5} parent=1 // pred_fallthru
      _
    // Predicated region
    $region10: #{kbgat_forward.5} parent=1 // pred_check
      _
    $region11: #{kbgat_forward.5} parent=1 // pred_check_branch
      %15 = sbr.rel (0) target = $region13
    $region12: #{kbgat_forward.5} parent=1 // pred_region
      _
    $region13: #{kbgat_forward.5} parent=1 // pred_fallthru
      _
    // Predicated region
    $region14: #{kbgat_forward.5} parent=1 // pred_check
      _
    $region15: #{kbgat_forward.5} parent=1 // pred_check_branch
      %17 = sbr.rel (0) target = $region17
    $region16: #{kbgat_forward.5} parent=1 // pred_region
      _
    $region17: #{kbgat_forward.5} parent=1 // pred_fallthru
      _
    %v18 = vld [vmem:[%s0] sm:$0xff]
    %v19 = vld [vmem:[%s0 + $0x8] sm:$0xff]
    %v20 = vld [vmem:[%s1] sm:$0xff]
    %v21 = vld [vmem:[%s1 + $0x8] sm:$0xff]
    %v22 = vadd.f32 %v18, %v20
    %v23 = vadd.f32 %v19, %v21
    %vm24 = vcmask 261120
    %v25 = vsel %vm24, %v22, 0.0
    %v26 = vsel %vm24, %v23, 0.0
    %v27 = vadd.f32 %v25, %v26
    %v28 = vrot.slane %v27, 4
    %v29 = vadd.f32 %v27, %v28
    %v30 = vrot.slane %v29, 2
    %v31 = vadd.f32 %v29, %v30
    %v32 = vrot.slane %v31, 1
    %v33 = vadd.f32 %v31, %v32
    %v34 = vrcp.pop 16.0
    %v35 = vmul.f32 %v33, %v34
    %v36 = vsub.f32 %v22, %v35
    %v37 = vsub.f32 %v23, %v35
    %v38 = vmul.f32 %v36, %v36
    %v39 = vmul.f32 %v37, %v37
    %v40 = vsel %vm24, %v38, 0.0
    %v41 = vsel %vm24, %v39, 0.0
    %v42 = vadd.f32 %v40, %v41
    %v43 = vrot.slane %v42, 4
    %v44 = vadd.f32 %v42, %v43
    %v45 = vrot.slane %v44, 2
    %v46 = vadd.f32 %v44, %v45
    %v47 = vrot.slane %v46, 1
    %v48 = vadd.f32 %v46, %v47
    %v49 = vmul.f32 %v48, %v34
    %v50 = vadd.f32 %v49, 1e-05
    %v51 = vrsqrt.pop %v50
    %v52 = vmul.f32 %v36, %v51
    %v53 = vmul.f32 %v37, %v51
    %v54 = vld [vmem:[%s2] sm:$0x1]
    %v56 = vlaneseq
    %v57 = vshrl.u32 %v56, 7
    %v58 = vsub.s32 0, %v57
    %v59 = vrot.slane %v54, %v58
    %v61 = vmul.f32 %v52, %v59
    %v62 = vmul.f32 %v53, %v59
    %v63 = vld [vmem:[%s3] sm:$0x1]
    %v65 = vlaneseq
    %v66 = vshrl.u32 %v65, 7
    %v67 = vsub.s32 0, %v66
    %v68 = vrot.slane %v63, %v67
    %v70 = vadd.f32 %v61, %v68
    %v71 = vadd.f32 %v62, %v68
    %72 = vst.msk [vmem:[#allocation2] sm:$0xff] %vm24, %v70
    %73 = vst.msk [vmem:[#allocation2 + $0x8] sm:$0xff] %vm24, %v71
    // Predicated region
    $region18: #{kbgat_forward.5} parent=1 // pred_check
      _
    $region19: #{kbgat_forward.5} parent=1 // pred_check_branch
      %75 = sbr.rel (0) target = $region21
    $region20: #{kbgat_forward.5} parent=1 // pred_region
      %s77 = ssub.s32 256, 256
      %78 = vsyncadd [#allocation3], %s77
      %s79 = sshll.u32 [#allocation2], 4
      %s80 = int_to_ptr.vmem [resolvable:$true] %s79
      %85 = dma.vmem_to_hbm [thread:$0]  %s80, 256, %s4, [#allocation3], 128, 128, 8
    $region21: #{kbgat_forward.5} parent=1 // pred_fallthru
      _
    // Predicated region
    $region22: #{kbgat_forward.5} parent=1 // pred_check
      _
    $region23: #{kbgat_forward.5} parent=1 // pred_check_branch
      %87 = sbr.rel (0) target = $region25
    $region24: #{kbgat_forward.5} parent=1 // pred_region
      %88 = dma.done [#allocation3], 256
    $region25: #{kbgat_forward.5} parent=1 // pred_fallthru
      _
    %89 = vsyncpa [#allocation3], 1

// kernel: kbgat_forward.3
$region0: #{kbgat_forward.3}
  #allocation0 [shape = 'u32[]', space=smem, size = 0x4, offset = 0x4, fixed_abs, tag = 'smem constant byte address 0x4 - core index']
  #allocation1 [shape = 'u32[144,128]{1,0:T(1,128)}', space=vmem, size = 0x12000, scoped, tag = 'internal scratch']
  #allocation2 [shape = 'f32[1,2]{1,0:T(1,128)}', space=vmem, size = 0x200, scoped, tag = 'scratch operand']
  #allocation3 [shape = 'f32[128,2]{1,0:T(8,128)}', space=vmem, size = 0x10000, scoped, tag = 'scratch operand']
  %s0 = inlined_call_operand.vmem [shape: s32[128,1], index: 0, kind: input, shape index: {}]
  %s1 = inlined_call_operand.vmem [shape: f32[128,128], index: 1, kind: input, shape index: {}]
  %s2 = inlined_call_operand.vmem [shape: f32[128,128], index: 2, kind: input, shape index: {}]
  %s3 = inlined_call_operand.vmem [shape: f32[128,2], index: 3, kind: input, shape index: {}]
  %s4 = inlined_call_operand.vmem [shape: f32[2,128], index: 4, kind: input, shape index: {}]
  %s5 = inlined_call_operand.vmem [shape: f32[128,128], index: 5, kind: output, shape index: {}]
  %s6 = sld [smem:[#allocation0]]
  $region38: #{kbgat_forward.3} parent=0
    _
  %s8 = ssub.s32 1, %s6
  %s9 = scalar_select 0, %s8, %s6
  // Predicated region
  $region2: #{kbgat_forward.3} parent=0 // pred_check
    _
  $region3: #{kbgat_forward.3} parent=0 // pred_check_branch
    %11 = sbr.rel (0) target = $region5
  $region4: #{kbgat_forward.3} parent=0 // pred_region
    _
  $region5: #{kbgat_forward.3} parent=0 // pred_fallthru
    _
  // Predicated region
  $region6: #{kbgat_forward.3} parent=0 // pred_check
    _
  $region7: #{kbgat_forward.3} parent=0 // pred_check_branch
    %13 = sbr.rel (0) target = $region9
  $region8: #{kbgat_forward.3} parent=0 // pred_region
    _
  $region9: #{kbgat_forward.3} parent=0 // pred_fallthru
    _
  // Predicated region
  $region10: #{kbgat_forward.3} parent=0 // pred_check
    _
  $region11: #{kbgat_forward.3} parent=0 // pred_check_branch
    %15 = sbr.rel (0) target = $region13
  $region12: #{kbgat_forward.3} parent=0 // pred_region
    _
  $region13: #{kbgat_forward.3} parent=0 // pred_fallthru
    _
  // Predicated region
  $region14: #{kbgat_forward.3} parent=0 // pred_check
    _
  $region15: #{kbgat_forward.3} parent=0 // pred_check_branch
    %17 = sbr.rel (0) target = $region17
  $region16: #{kbgat_forward.3} parent=0 // pred_region
    _
  $region17: #{kbgat_forward.3} parent=0 // pred_fallthru
    _
  // Predicated region
  $region18: #{kbgat_forward.3} parent=0 // pred_check
    _
  $region19: #{kbgat_forward.3} parent=0 // pred_check_branch
    %19 = sbr.rel (0) target = $region21
  $region20: #{kbgat_forward.3} parent=0 // pred_region
    _
  $region21: #{kbgat_forward.3} parent=0 // pred_fallthru
    _
  %p20 = scmp.eq.s32.totalorder 0, 0
  // Predicated region
  $region22: #{kbgat_forward.3} parent=0 // pred_check
    %p21 = pneg %p20
  $region23: #{kbgat_forward.3} parent=0 // pred_check_branch
    %23 = sbr.rel (%p21) target = $region25
  $region24: #{kbgat_forward.3} parent=0 // pred_region
    %vm24 = vcmask 8192
    %25 = vst.msk [vmem:[#allocation2] sm:$0x1] %vm24, -1e+30
    %vm26 = vcmask 15360
    %27 = vst.msk [vmem:[#allocation3] sm:$0xff] %vm26, 0.0
    %28 = vst.msk [vmem:[#allocation3 + $0x8] sm:$0xff] %vm26, 0.0
    %29 = vst.msk [vmem:[#allocation3 + $0x10] sm:$0xff] %vm26, 0.0
    %30 = vst.msk [vmem:[#allocation3 + $0x18] sm:$0xff] %vm26, 0.0
    %31 = vst.msk [vmem:[#allocation3 + $0x20] sm:$0xff] %vm26, 0.0
    %32 = vst.msk [vmem:[#allocation3 + $0x28] sm:$0xff] %vm26, 0.0
    %33 = vst.msk [vmem:[#allocation3 + $0x30] sm:$0xff] %vm26, 0.0
    %34 = vst.msk [vmem:[#allocation3 + $0x38] sm:$0xff] %vm26, 0.0
    %35 = vst.msk [vmem:[#allocation3 + $0x40] sm:$0xff] %vm26, 0.0
    %36 = vst.msk [vmem:[#allocation3 + $0x48] sm:$0xff] %vm26, 0.0
    %37 = vst.msk [vmem:[#allocation3 + $0x50] sm:$0xff] %vm26, 0.0
    %38 = vst.msk [vmem:[#allocation3 + $0x58] sm:$0xff] %vm26, 0.0
    %39 = vst.msk [vmem:[#allocation3 + $0x60] sm:$0xff] %vm26, 0.0
    %40 = vst.msk [vmem:[#allocation3 + $0x68] sm:$0xff] %vm26, 0.0
    %41 = vst.msk [vmem:[#allocation3 + $0x70] sm:$0xff] %vm26, 0.0
    %42 = vst.msk [vmem:[#allocation3 + $0x78] sm:$0xff] %vm26, 0.0
    %43 = vst [vmem:[%s5] sm:$0xff] 0.0
    %44 = vst [vmem:[%s5 + $0x8] sm:$0xff] 0.0
    %45 = vst [vmem:[%s5 + $0x10] sm:$0xff] 0.0
    %46 = vst [vmem:[%s5 + $0x18] sm:$0xff] 0.0
    %47 = vst [vmem:[%s5 + $0x20] sm:$0xff] 0.0
    %48 = vst [vmem:[%s5 + $0x28] sm:$0xff] 0.0
    %49 = vst [vmem:[%s5 + $0x30] sm:$0xff] 0.0
    %50 = vst [vmem:[%s5 + $0x38] sm:$0xff] 0.0
    %51 = vst [vmem:[%s5 + $0x40] sm:$0xff] 0.0
    %52 = vst [vmem:[%s5 + $0x48] sm:$0xff] 0.0
    %53 = vst [vmem:[%s5 + $0x50] sm:$0xff] 0.0
    %54 = vst [vmem:[%s5 + $0x58] sm:$0xff] 0.0
    %55 = vst [vmem:[%s5 + $0x60] sm:$0xff] 0.0
    %56 = vst [vmem:[%s5 + $0x68] sm:$0xff] 0.0
    %57 = vst [vmem:[%s5 + $0x70] sm:$0xff] 0.0
    %58 = vst [vmem:[%s5 + $0x78] sm:$0xff] 0.0
  $region25: #{kbgat_forward.3} parent=0 // pred_fallthru
    _
  %v59 = vld [vmem:[%s0] sm:$0xff]
  %v60 = vld [vmem:[%s0 + $0x8] sm:$0xff]
  %v61 = vld [vmem:[%s0 + $0x10] sm:$0xff]
  %v62 = vld [vmem:[%s0 + $0x18] sm:$0xff]
  %v63 = vld [vmem:[%s0 + $0x20] sm:$0xff]
  %v64 = vld [vmem:[%s0 + $0x28] sm:$0xff]
  %v65 = vld [vmem:[%s0 + $0x30] sm:$0xff]
  %v66 = vld [vmem:[%s0 + $0x38] sm:$0xff]
  %v67 = vld [vmem:[%s0 + $0x40] sm:$0xff]
  %v68 = vld [vmem:[%s0 + $0x48] sm:$0xff]
  %v69 = vld [vmem:[%s0 + $0x50] sm:$0xff]
  %v70 = vld [vmem:[%s0 + $0x58] sm:$0xff]
  %v71 = vld [vmem:[%s0 + $0x60] sm:$0xff]
  %v72 = vld [vmem:[%s0 + $0x68] sm:$0xff]
  %v73 = vld [vmem:[%s0 + $0x70] sm:$0xff]
  %v74 = vld [vmem:[%s0 + $0x78] sm:$0xff]
  %v75 = vlaneseq
  %v76 = vand.u32 %v75, 127
  %77 = vset.pattern.permute.xlu0 0
  %78 = vperm.xlu0 %77, %v59
  %v79 = vpop.permute.xlu0 %78
  %80 = vset.pattern.permute.xlu0 0
  %81 = vperm.xlu0 %80, %v60
  %v82 = vpop.permute.xlu0 %81
  %83 = vset.pattern.permute.xlu0 0
  %84 = vperm.xlu0 %83, %v61
  %v85 = vpop.permute.xlu0 %84
  %86 = vset.pattern.permute.xlu0 0
  %87 = vperm.xlu0 %86, %v62
  %v88 = vpop.permute.xlu0 %87
  %89 = vset.pattern.permute.xlu0 0
  %90 = vperm.xlu0 %89, %v63
  %v91 = vpop.permute.xlu0 %90
  %92 = vset.pattern.permute.xlu0 0
  %93 = vperm.xlu0 %92, %v64
  %v94 = vpop.permute.xlu0 %93
  %95 = vset.pattern.permute.xlu0 0
  %96 = vperm.xlu0 %95, %v65
  %v97 = vpop.permute.xlu0 %96
  %98 = vset.pattern.permute.xlu0 0
  %99 = vperm.xlu0 %98, %v66
  %v100 = vpop.permute.xlu0 %99
  %101 = vset.pattern.permute.xlu0 0
  %102 = vperm.xlu0 %101, %v67
  %v103 = vpop.permute.xlu0 %102
  %104 = vset.pattern.permute.xlu0 0
  %105 = vperm.xlu0 %104, %v68
  %v106 = vpop.permute.xlu0 %105
  %107 = vset.pattern.permute.xlu0 0
  %108 = vperm.xlu0 %107, %v69
  %v109 = vpop.permute.xlu0 %108
  %110 = vset.pattern.permute.xlu0 0
  %111 = vperm.xlu0 %110, %v70
  %v112 = vpop.permute.xlu0 %111
  %113 = vset.pattern.permute.xlu0 0
  %114 = vperm.xlu0 %113, %v71
  %v115 = vpop.permute.xlu0 %114
  %116 = vset.pattern.permute.xlu0 0
  %117 = vperm.xlu0 %116, %v72
  %v118 = vpop.permute.xlu0 %117
  %119 = vset.pattern.permute.xlu0 0
  %120 = vperm.xlu0 %119, %v73
  %v121 = vpop.permute.xlu0 %120
  %122 = vset.pattern.permute.xlu0 0
  %123 = vperm.xlu0 %122, %v74
  %v124 = vpop.permute.xlu0 %123
  %vm125 = vcmp.eq.s32.totalorder %v76, %v79
  %vm126 = vcmp.eq.s32.totalorder %v76, %v82
  %vm127 = vcmp.eq.s32.totalorder %v76, %v85
  %vm128 = vcmp.eq.s32.totalorder %v76, %v88
  %vm129 = vcmp.eq.s32.totalorder %v76, %v91
  %vm130 = vcmp.eq.s32.totalorder %v76, %v94
  %vm131 = vcmp.eq.s32.totalorder %v76, %v97
  %vm132 = vcmp.eq.s32.totalorder %v76, %v100
  %vm133 = vcmp.eq.s32.totalorder %v76, %v103
  %vm134 = vcmp.eq.s32.totalorder %v76, %v106
  %vm135 = vcmp.eq.s32.totalorder %v76, %v109
  %vm136 = vcmp.eq.s32.totalorder %v76, %v112
  %vm137 = vcmp.eq.s32.totalorder %v76, %v115
  %vm138 = vcmp.eq.s32.totalorder %v76, %v118
  %vm139 = vcmp.eq.s32.totalorder %v76, %v121
  %vm140 = vcmp.eq.s32.totalorder %v76, %v124
  %v141 = vsel %vm125, 1, 0
  %v142 = vsel %vm126, 1, 0
  %v143 = vsel %vm127, 1, 0
  %v144 = vsel %vm128, 1, 0
  %v145 = vsel %vm129, 1, 0
  %v146 = vsel %vm130, 1, 0
  %v147 = vsel %vm131, 1, 0
  %v148 = vsel %vm132, 1, 0
  %v149 = vsel %vm133, 1, 0
  %v150 = vsel %vm134, 1, 0
  %v151 = vsel %vm135, 1, 0
  %v152 = vsel %vm136, 1, 0
  %v153 = vsel %vm137, 1, 0
  %v154 = vsel %vm138, 1, 0
  %v155 = vsel %vm139, 1, 0
  %v156 = vsel %vm140, 1, 0
  %v157 = vcvt.s32.f32 %v141
  %v158 = vcvt.s32.f32 %v142
  %v159 = vcvt.s32.f32 %v143
  %v160 = vcvt.s32.f32 %v144
  %v161 = vcvt.s32.f32 %v145
  %v162 = vcvt.s32.f32 %v146
  %v163 = vcvt.s32.f32 %v147
  %v164 = vcvt.s32.f32 %v148
  %v165 = vcvt.s32.f32 %v149
  %v166 = vcvt.s32.f32 %v150
  %v167 = vcvt.s32.f32 %v151
  %v168 = vcvt.s32.f32 %v152
  %v169 = vcvt.s32.f32 %v153
  %v170 = vcvt.s32.f32 %v154
  %v171 = vcvt.s32.f32 %v155
  %v172 = vcvt.s32.f32 %v156
  %v173 = vld [vmem:[%s1] sm:$0xff]
  %v174 = vld [vmem:[%s1 + $0x8] sm:$0xff]
  %v175 = vld [vmem:[%s1 + $0x10] sm:$0xff]
  %v176 = vld [vmem:[%s1 + $0x18] sm:$0xff]
  %v177 = vld [vmem:[%s1 + $0x20] sm:$0xff]
  %v178 = vld [vmem:[%s1 + $0x28] sm:$0xff]
  %v179 = vld [vmem:[%s1 + $0x30] sm:$0xff]
  %v180 = vld [vmem:[%s1 + $0x38] sm:$0xff]
  %v181 = vld [vmem:[%s1 + $0x40] sm:$0xff]
  %v182 = vld [vmem:[%s1 + $0x48] sm:$0xff]
  %v183 = vld [vmem:[%s1 + $0x50] sm:$0xff]
  %v184 = vld [vmem:[%s1 + $0x58] sm:$0xff]
  %v185 = vld [vmem:[%s1 + $0x60] sm:$0xff]
  %v186 = vld [vmem:[%s1 + $0x68] sm:$0xff]
  %v187 = vld [vmem:[%s1 + $0x70] sm:$0xff]
  %v188 = vld [vmem:[%s1 + $0x78] sm:$0xff]
  %v189 = vld [vmem:[%s2] sm:$0xff]
  %v190 = vld [vmem:[%s2 + $0x8] sm:$0xff]
  %v191 = vld [vmem:[%s2 + $0x10] sm:$0xff]
  %v192 = vld [vmem:[%s2 + $0x18] sm:$0xff]
  %v193 = vld [vmem:[%s2 + $0x20] sm:$0xff]
  %v194 = vld [vmem:[%s2 + $0x28] sm:$0xff]
  %v195 = vld [vmem:[%s2 + $0x30] sm:$0xff]
  %v196 = vld [vmem:[%s2 + $0x38] sm:$0xff]
  %v197 = vld [vmem:[%s2 + $0x40] sm:$0xff]
  %v198 = vld [vmem:[%s2 + $0x48] sm:$0xff]
  %v199 = vld [vmem:[%s2 + $0x50] sm:$0xff]
  %v200 = vld [vmem:[%s2 + $0x58] sm:$0xff]
  %v201 = vld [vmem:[%s2 + $0x60] sm:$0xff]
  %v202 = vld [vmem:[%s2 + $0x68] sm:$0xff]
  %v203 = vld [vmem:[%s2 + $0x70] sm:$0xff]
  %v204 = vld [vmem:[%s2 + $0x78] sm:$0xff]
  %205 = vmatprep.subr.mxu0 0.0
  %206 = vmatpush1.msra.mxu0 %v204
  %207 = vmatprep.subr.mxu0 0.0
  %208 = vmatpush1.msra.mxu0 %v203
  %209 = vmatprep.subr.mxu0 0.0
  %210 = vmatpush1.msra.mxu0 %v202
  %211 = vmatprep.subr.mxu0 0.0
  %212 = vmatpush1.msra.mxu0 %v201
  %213 = vmatprep.subr.mxu0 0.0
  %214 = vmatpush1.msra.mxu0 %v200
  %215 = vmatprep.subr.mxu0 0.0
  %216 = vmatpush1.msra.mxu0 %v199
  %217 = vmatprep.subr.mxu0 0.0
  %218 = vmatpush1.msra.mxu0 %v198
  %219 = vmatprep.subr.mxu0 0.0
  %220 = vmatpush1.msra.mxu0 %v197
  %221 = vmatprep.subr.mxu0 0.0
  %222 = vmatpush1.msra.mxu0 %v196
  %223 = vmatprep.subr.mxu0 0.0
  %224 = vmatpush1.msra.mxu0 %v195
  %225 = vmatprep.subr.mxu0 0.0
  %226 = vmatpush1.msra.mxu0 %v194
  %227 = vmatprep.subr.mxu0 0.0
  %228 = vmatpush1.msra.mxu0 %v193
  %229 = vmatprep.subr.mxu0 0.0
  %230 = vmatpush1.msra.mxu0 %v192
  %231 = vmatprep.subr.mxu0 0.0
  %232 = vmatpush1.msra.mxu0 %v191
  %233 = vmatprep.subr.mxu0 0.0
  %234 = vmatpush1.msra.mxu0 %v190
  %235 = vmatprep.subr.mxu0 0.0
  %236 = vmatpush1.msra.mxu0 %v189
  %237 = vmatprep.subr.mxu0 0.0
  %238 = vmatpush2.msra.mxu0 0.0
  %239 = vmatprep.subr.mxu0 0.0
  %240 = vmatpush2.msra.mxu0 0.0
  %241 = vmatprep.subr.mxu0 0.0
  %242 = vmatpush2.msra.mxu0 0.0
  %243 = vmatprep.subr.mxu0 0.0
  %244 = vmatpush2.msra.mxu0 0.0
  %245 = vmatprep.subr.mxu0 0.0
  %246 = vmatpush2.msra.mxu0 0.0
  %247 = vmatprep.subr.mxu0 0.0
  %248 = vmatpush2.msra.mxu0 0.0
  %249 = vmatprep.subr.mxu0 0.0
  %250 = vmatpush2.msra.mxu0 0.0
  %251 = vmatprep.subr.mxu0 0.0
  %252 = vmatpush2.msra.mxu0 0.0
  %253 = vmatprep.subr.mxu0 0.0
  %254 = vmatpush2.msra.mxu0 0.0
  %255 = vmatprep.subr.mxu0 0.0
  %256 = vmatpush2.msra.mxu0 0.0
  %257 = vmatprep.subr.mxu0 0.0
  %258 = vmatpush2.msra.mxu0 0.0
  %259 = vmatprep.subr.mxu0 0.0
  %260 = vmatpush2.msra.mxu0 0.0
  %261 = vmatprep.subr.mxu0 0.0
  %262 = vmatpush2.msra.mxu0 0.0
  %263 = vmatprep.subr.mxu0 0.0
  %264 = vmatpush2.msra.mxu0 0.0
  %265 = vmatprep.subr.mxu0 0.0
  %266 = vmatpush2.msra.mxu0 0.0
  %267 = vmatprep.subr.mxu0 0.0
  %268 = vmatpush2.msra.mxu0 0.0
  %269 = vmatprep.mubr.f32.mxu0 0.0
  %270 = vmatmul.mubr.f32.gmra.mxu0 %v173
  %v271 = vpop.f32.mrf.mxu0
  %v272 = vadd.f32 0.0, %v271
  %v273 = vpop.f32.mrf.mxu0
  %274 = vmatprep.mubr.f32.mxu0 0.0
  %275 = vmatmul.mubr.f32.gmra.mxu0 %v174
  %v276 = vpop.f32.mrf.mxu0
  %v277 = vadd.f32 0.0, %v276
  %v278 = vpop.f32.mrf.mxu0
  %279 = vmatprep.mubr.f32.mxu0 0.0
  %280 = vmatmul.mubr.f32.gmra.mxu0 %v175
  %v281 = vpop.f32.mrf.mxu0
  %v282 = vadd.f32 0.0, %v281
  %v283 = vpop.f32.mrf.mxu0
  %284 = vmatprep.mubr.f32.mxu0 0.0
  %285 = vmatmul.mubr.f32.gmra.mxu0 %v176
  %v286 = vpop.f32.mrf.mxu0
  %v287 = vadd.f32 0.0, %v286
  %v288 = vpop.f32.mrf.mxu0
  %289 = vmatprep.mubr.f32.mxu0 0.0
  %290 = vmatmul.mubr.f32.gmra.mxu0 %v177
  %v291 = vpop.f32.mrf.mxu0
  %v292 = vadd.f32 0.0, %v291
  %v293 = vpop.f32.mrf.mxu0
  %294 = vmatprep.mubr.f32.mxu0 0.0
  %295 = vmatmul.mubr.f32.gmra.mxu0 %v178
  %v296 = vpop.f32.mrf.mxu0
  %v297 = vadd.f32 0.0, %v296
  %v298 = vpop.f32.mrf.mxu0
  %299 = vmatprep.mubr.f32.mxu0 0.0
  %300 = vmatmul.mubr.f32.gmra.mxu0 %v179
  %v301 = vpop.f32.mrf.mxu0
  %v302 = vadd.f32 0.0, %v301
  %v303 = vpop.f32.mrf.mxu0
  %304 = vmatprep.mubr.f32.mxu0 0.0
  %305 = vmatmul.mubr.f32.gmra.mxu0 %v180
  %v306 = vpop.f32.mrf.mxu0
  %v307 = vadd.f32 0.0, %v306
  %v308 = vpop.f32.mrf.mxu0
  %309 = vmatprep.mubr.f32.mxu0 0.0
  %310 = vmatmul.mubr.f32.gmra.mxu0 %v181
  %v311 = vpop.f32.mrf.mxu0
  %v312 = vadd.f32 0.0, %v311
  %v313 = vpop.f32.mrf.mxu0
  %314 = vmatprep.mubr.f32.mxu0 0.0
  %315 = vmatmul.mubr.f32.gmra.mxu0 %v182
  %v316 = vpop.f32.mrf.mxu0
  %v317 = vadd.f32 0.0, %v316
  %v318 = vpop.f32.mrf.mxu0
  %319 = vmatprep.mubr.f32.mxu0 0.0
  %320 = vmatmul.mubr.f32.gmra.mxu0 %v183
  %v321 = vpop.f32.mrf.mxu0
  %v322 = vadd.f32 0.0, %v321
  %v323 = vpop.f32.mrf.mxu0
  %324 = vmatprep.mubr.f32.mxu0 0.0
  %325 = vmatmul.mubr.f32.gmra.mxu0 %v184
  %v326 = vpop.f32.mrf.mxu0
  %v327 = vadd.f32 0.0, %v326
  %v328 = vpop.f32.mrf.mxu0
  %329 = vmatprep.mubr.f32.mxu0 0.0
  %330 = vmatmul.mubr.f32.gmra.mxu0 %v185
  %v331 = vpop.f32.mrf.mxu0
  %v332 = vadd.f32 0.0, %v331
  %v333 = vpop.f32.mrf.mxu0
  %334 = vmatprep.mubr.f32.mxu0 0.0
  %335 = vmatmul.mubr.f32.gmra.mxu0 %v186
  %v336 = vpop.f32.mrf.mxu0
  %v337 = vadd.f32 0.0, %v336
  %v338 = vpop.f32.mrf.mxu0
  %339 = vmatprep.mubr.f32.mxu0 0.0
  %340 = vmatmul.mubr.f32.gmra.mxu0 %v187
  %v341 = vpop.f32.mrf.mxu0
  %v342 = vadd.f32 0.0, %v341
  %v343 = vpop.f32.mrf.mxu0
  %344 = vmatprep.mubr.f32.mxu0 0.0
  %345 = vmatmul.mubr.f32.gmra.mxu0 %v188
  %v346 = vpop.f32.mrf.mxu0
  %v347 = vadd.f32 0.0, %v346
  %v348 = vpop.f32.mrf.mxu0
  %349 = vdwg.mxu0
  %v350 = vld [vmem:[%s3] sm:$0xff]
  %v351 = vld [vmem:[%s3 + $0x8] sm:$0xff]
  %v352 = vld [vmem:[%s3 + $0x10] sm:$0xff]
  %v353 = vld [vmem:[%s3 + $0x18] sm:$0xff]
  %v354 = vld [vmem:[%s3 + $0x20] sm:$0xff]
  %v355 = vld [vmem:[%s3 + $0x28] sm:$0xff]
  %v356 = vld [vmem:[%s3 + $0x30] sm:$0xff]
  %v357 = vld [vmem:[%s3 + $0x38] sm:$0xff]
  %v358 = vld [vmem:[%s3 + $0x40] sm:$0xff]
  %v359 = vld [vmem:[%s3 + $0x48] sm:$0xff]
  %v360 = vld [vmem:[%s3 + $0x50] sm:$0xff]
  %v361 = vld [vmem:[%s3 + $0x58] sm:$0xff]
  %v362 = vld [vmem:[%s3 + $0x60] sm:$0xff]
  %v363 = vld [vmem:[%s3 + $0x68] sm:$0xff]
  %v364 = vld [vmem:[%s3 + $0x70] sm:$0xff]
  %v365 = vld [vmem:[%s3 + $0x78] sm:$0xff]
  %366 = vmatprep.subr.mxu0 0.0
  %367 = vmatpush1.msra.mxu0 %v365
  %368 = vmatprep.subr.mxu0 0.0
  %369 = vmatpush1.msra.mxu0 %v364
  %370 = vmatprep.subr.mxu0 0.0
  %371 = vmatpush1.msra.mxu0 %v363
  %372 = vmatprep.subr.mxu0 0.0
  %373 = vmatpush1.msra.mxu0 %v362
  %374 = vmatprep.subr.mxu0 0.0
  %375 = vmatpush1.msra.mxu0 %v361
  %376 = vmatprep.subr.mxu0 0.0
  %377 = vmatpush1.msra.mxu0 %v360
  %378 = vmatprep.subr.mxu0 0.0
  %379 = vmatpush1.msra.mxu0 %v359
  %380 = vmatprep.subr.mxu0 0.0
  %381 = vmatpush1.msra.mxu0 %v358
  %382 = vmatprep.subr.mxu0 0.0
  %383 = vmatpush1.msra.mxu0 %v357
  %384 = vmatprep.subr.mxu0 0.0
  %385 = vmatpush1.msra.mxu0 %v356
  %386 = vmatprep.subr.mxu0 0.0
  %387 = vmatpush1.msra.mxu0 %v355
  %388 = vmatprep.subr.mxu0 0.0
  %389 = vmatpush1.msra.mxu0 %v354
  %390 = vmatprep.subr.mxu0 0.0
  %391 = vmatpush1.msra.mxu0 %v353
  %392 = vmatprep.subr.mxu0 0.0
  %393 = vmatpush1.msra.mxu0 %v352
  %394 = vmatprep.subr.mxu0 0.0
  %395 = vmatpush1.msra.mxu0 %v351
  %396 = vmatprep.subr.mxu0 0.0
  %397 = vmatpush1.msra.mxu0 %v350
  %398 = vmatprep.subr.mxu0 0.0
  %399 = vmatpush2.msra.mxu0 0.0
  %400 = vmatprep.subr.mxu0 0.0
  %401 = vmatpush2.msra.mxu0 0.0
  %402 = vmatprep.subr.mxu0 0.0
  %403 = vmatpush2.msra.mxu0 0.0
  %404 = vmatprep.subr.mxu0 0.0
  %405 = vmatpush2.msra.mxu0 0.0
  %406 = vmatprep.subr.mxu0 0.0
  %407 = vmatpush2.msra.mxu0 0.0
  %408 = vmatprep.subr.mxu0 0.0
  %409 = vmatpush2.msra.mxu0 0.0
  %410 = vmatprep.subr.mxu0 0.0
  %411 = vmatpush2.msra.mxu0 0.0
  %412 = vmatprep.subr.mxu0 0.0
  %413 = vmatpush2.msra.mxu0 0.0
  %414 = vmatprep.subr.mxu0 0.0
  %415 = vmatpush2.msra.mxu0 0.0
  %416 = vmatprep.subr.mxu0 0.0
  %417 = vmatpush2.msra.mxu0 0.0
  %418 = vmatprep.subr.mxu0 0.0
  %419 = vmatpush2.msra.mxu0 0.0
  %420 = vmatprep.subr.mxu0 0.0
  %421 = vmatpush2.msra.mxu0 0.0
  %422 = vmatprep.subr.mxu0 0.0
  %423 = vmatpush2.msra.mxu0 0.0
  %424 = vmatprep.subr.mxu0 0.0
  %425 = vmatpush2.msra.mxu0 0.0
  %426 = vmatprep.subr.mxu0 0.0
  %427 = vmatpush2.msra.mxu0 0.0
  %428 = vmatprep.subr.mxu0 0.0
  %429 = vmatpush2.msra.mxu0 0.0
  %430 = vmatprep.mubr.f32.mxu0 0.0
  %431 = vmatmul.mubr.f32.gmra.mxu0 %v272
  %v432 = vpop.f32.mrf.mxu0
  %v433 = vadd.f32 0.0, %v432
  %v434 = vpop.f32.mrf.mxu0
  %435 = vmatprep.mubr.f32.mxu0 0.0
  %436 = vmatmul.mubr.f32.gmra.mxu0 %v277
  %v437 = vpop.f32.mrf.mxu0
  %v438 = vadd.f32 0.0, %v437
  %v439 = vpop.f32.mrf.mxu0
  %440 = vmatprep.mubr.f32.mxu0 0.0
  %441 = vmatmul.mubr.f32.gmra.mxu0 %v282
  %v442 = vpop.f32.mrf.mxu0
  %v443 = vadd.f32 0.0, %v442
  %v444 = vpop.f32.mrf.mxu0
  %445 = vmatprep.mubr.f32.mxu0 0.0
  %446 = vmatmul.mubr.f32.gmra.mxu0 %v287
  %v447 = vpop.f32.mrf.mxu0
  %v448 = vadd.f32 0.0, %v447
  %v449 = vpop.f32.mrf.mxu0
  %450 = vmatprep.mubr.f32.mxu0 0.0
  %451 = vmatmul.mubr.f32.gmra.mxu0 %v292
  %v452 = vpop.f32.mrf.mxu0
  %v453 = vadd.f32 0.0, %v452
  %v454 = vpop.f32.mrf.mxu0
  %455 = vmatprep.mubr.f32.mxu0 0.0
  %456 = vmatmul.mubr.f32.gmra.mxu0 %v297
  %v457 = vpop.f32.mrf.mxu0
  %v458 = vadd.f32 0.0, %v457
  %v459 = vpop.f32.mrf.mxu0
  %460 = vmatprep.mubr.f32.mxu0 0.0
  %461 = vmatmul.mubr.f32.gmra.mxu0 %v302
  %v462 = vpop.f32.mrf.mxu0
  %v463 = vadd.f32 0.0, %v462
  %v464 = vpop.f32.mrf.mxu0
  %465 = vmatprep.mubr.f32.mxu0 0.0
  %466 = vmatmul.mubr.f32.gmra.mxu0 %v307
  %v467 = vpop.f32.mrf.mxu0
  %v468 = vadd.f32 0.0, %v467
  %v469 = vpop.f32.mrf.mxu0
  %470 = vmatprep.mubr.f32.mxu0 0.0
  %471 = vmatmul.mubr.f32.gmra.mxu0 %v312
  %v472 = vpop.f32.mrf.mxu0
  %v473 = vadd.f32 0.0, %v472
  %v474 = vpop.f32.mrf.mxu0
  %475 = vmatprep.mubr.f32.mxu0 0.0
  %476 = vmatmul.mubr.f32.gmra.mxu0 %v317
  %v477 = vpop.f32.mrf.mxu0
  %v478 = vadd.f32 0.0, %v477
  %v479 = vpop.f32.mrf.mxu0
  %480 = vmatprep.mubr.f32.mxu0 0.0
  %481 = vmatmul.mubr.f32.gmra.mxu0 %v322
  %v482 = vpop.f32.mrf.mxu0
  %v483 = vadd.f32 0.0, %v482
  %v484 = vpop.f32.mrf.mxu0
  %485 = vmatprep.mubr.f32.mxu0 0.0
  %486 = vmatmul.mubr.f32.gmra.mxu0 %v327
  %v487 = vpop.f32.mrf.mxu0
  %v488 = vadd.f32 0.0, %v487
  %v489 = vpop.f32.mrf.mxu0
  %490 = vmatprep.mubr.f32.mxu0 0.0
  %491 = vmatmul.mubr.f32.gmra.mxu0 %v332
  %v492 = vpop.f32.mrf.mxu0
  %v493 = vadd.f32 0.0, %v492
  %v494 = vpop.f32.mrf.mxu0
  %495 = vmatprep.mubr.f32.mxu0 0.0
  %496 = vmatmul.mubr.f32.gmra.mxu0 %v337
  %v497 = vpop.f32.mrf.mxu0
  %v498 = vadd.f32 0.0, %v497
  %v499 = vpop.f32.mrf.mxu0
  %500 = vmatprep.mubr.f32.mxu0 0.0
  %501 = vmatmul.mubr.f32.gmra.mxu0 %v342
  %v502 = vpop.f32.mrf.mxu0
  %v503 = vadd.f32 0.0, %v502
  %v504 = vpop.f32.mrf.mxu0
  %505 = vmatprep.mubr.f32.mxu0 0.0
  %506 = vmatmul.mubr.f32.gmra.mxu0 %v347
  %v507 = vpop.f32.mrf.mxu0
  %v508 = vadd.f32 0.0, %v507
  %v509 = vpop.f32.mrf.mxu0
  %510 = vdwg.mxu0
  %vm511 = vcmp.gt.f32.partialorder %v433, 0.0
  %vm512 = vcmp.gt.f32.partialorder %v438, 0.0
  %vm513 = vcmp.gt.f32.partialorder %v443, 0.0
  %vm514 = vcmp.gt.f32.partialorder %v448, 0.0
  %vm515 = vcmp.gt.f32.partialorder %v453, 0.0
  %vm516 = vcmp.gt.f32.partialorder %v458, 0.0
  %vm517 = vcmp.gt.f32.partialorder %v463, 0.0
  %vm518 = vcmp.gt.f32.partialorder %v468, 0.0
  %vm519 = vcmp.gt.f32.partialorder %v473, 0.0
  %vm520 = vcmp.gt.f32.partialorder %v478, 0.0
  %vm521 = vcmp.gt.f32.partialorder %v483, 0.0
  %vm522 = vcmp.gt.f32.partialorder %v488, 0.0
  %vm523 = vcmp.gt.f32.partialorder %v493, 0.0
  %vm524 = vcmp.gt.f32.partialorder %v498, 0.0
  %vm525 = vcmp.gt.f32.partialorder %v503, 0.0
  %vm526 = vcmp.gt.f32.partialorder %v508, 0.0
  %v527 = vmul.f32 %v433, 0.2
  %v528 = vmul.f32 %v438, 0.2
  %v529 = vmul.f32 %v443, 0.2
  %v530 = vmul.f32 %v448, 0.2
  %v531 = vmul.f32 %v453, 0.2
  %v532 = vmul.f32 %v458, 0.2
  %v533 = vmul.f32 %v463, 0.2
  %v534 = vmul.f32 %v468, 0.2
  %v535 = vmul.f32 %v473, 0.2
  %v536 = vmul.f32 %v478, 0.2
  %v537 = vmul.f32 %v483, 0.2
  %v538 = vmul.f32 %v488, 0.2
  %v539 = vmul.f32 %v493, 0.2
  %v540 = vmul.f32 %v498, 0.2
  %v541 = vmul.f32 %v503, 0.2
  %v542 = vmul.f32 %v508, 0.2
  %v543 = vsel %vm511, %v433, %v527
  %v544 = vsel %vm512, %v438, %v528
  %v545 = vsel %vm513, %v443, %v529
  %v546 = vsel %vm514, %v448, %v530
  %v547 = vsel %vm515, %v453, %v531
  %v548 = vsel %vm516, %v458, %v532
  %v549 = vsel %vm517, %v463, %v533
  %v550 = vsel %vm518, %v468, %v534
  %v551 = vsel %vm519, %v473, %v535
  %v552 = vsel %vm520, %v478, %v536
  %v553 = vsel %vm521, %v483, %v537
  %v554 = vsel %vm522, %v488, %v538
  %v555 = vsel %vm523, %v493, %v539
  %v556 = vsel %vm524, %v498, %v540
  %v557 = vsel %vm525, %v503, %v541
  %v558 = vsel %vm526, %v508, %v542
  %v559 = vld [vmem:[#allocation2] sm:$0x1]
  %vm560 = vcmask 15360
  %v561 = vsel %vm560, %v543, -inf
  %v562 = vsel %vm560, %v544, -inf
  %v563 = vsel %vm560, %v545, -inf
  %v564 = vsel %vm560, %v546, -inf
  %v565 = vsel %vm560, %v547, -inf
  %v566 = vmax.f32 %v561, %v565
  %v567 = vsel %vm560, %v548, -inf
  %v568 = vmax.f32 %v562, %v567
  %v569 = vsel %vm560, %v549, -inf
  %v570 = vmax.f32 %v563, %v569
  %v571 = vsel %vm560, %v550, -inf
  %v572 = vmax.f32 %v564, %v571
  %v573 = vsel %vm560, %v551, -inf
  %v574 = vmax.f32 %v566, %v573
  %v575 = vsel %vm560, %v552, -inf
  %v576 = vmax.f32 %v568, %v575
  %v577 = vsel %vm560, %v553, -inf
  %v578 = vmax.f32 %v570, %v577
  %v579 = vsel %vm560, %v554, -inf
  %v580 = vmax.f32 %v572, %v579
  %v581 = vsel %vm560, %v555, -inf
  %v582 = vmax.f32 %v574, %v581
  %v583 = vsel %vm560, %v556, -inf
  %v584 = vmax.f32 %v576, %v583
  %v585 = vsel %vm560, %v557, -inf
  %v586 = vmax.f32 %v578, %v585
  %v587 = vsel %vm560, %v558, -inf
  %v588 = vmax.f32 %v580, %v587
  %v589 = vmax.f32 %v582, %v584
  %v590 = vmax.f32 %v586, %v588
  %v591 = vmax.f32 %v589, %v590
  %v592 = vrot.slane %v591, 4
  %v593 = vmax.f32 %v591, %v592
  %v594 = vrot.slane %v593, 2
  %v595 = vmax.f32 %v593, %v594
  %v596 = vrot.slane %v595, 1
  %v597 = vmax.f32 %v595, %v596
  %v598 = vmax.f32 %v559, %v597
  %vm599 = vcmask 8192
  %600 = vst.msk [vmem:[#allocation2] sm:$0x1] %vm599, %v598
  %v601 = vsub.f32 %v559, %v598
  %v602 = vmul.f32 %v601, 1.442695
  %v603 = vpow.pop %v602
  %v605 = vlaneseq
  %v606 = vshrl.u32 %v605, 7
  %v607 = vsub.s32 0, %v606
  %v608 = vrot.slane %v598, %v607
  %v610 = vsub.f32 %v543, %v608
  %v611 = vsub.f32 %v544, %v608
  %v612 = vsub.f32 %v545, %v608
  %v613 = vsub.f32 %v546, %v608
  %v614 = vsub.f32 %v547, %v608
  %v615 = vsub.f32 %v548, %v608
  %v616 = vsub.f32 %v549, %v608
  %v617 = vsub.f32 %v550, %v608
  %v618 = vsub.f32 %v551, %v608
  %v619 = vsub.f32 %v552, %v608
  %v620 = vsub.f32 %v553, %v608
  %v621 = vsub.f32 %v554, %v608
  %v622 = vsub.f32 %v555, %v608
  %v623 = vsub.f32 %v556, %v608
  %v624 = vsub.f32 %v557, %v608
  %v625 = vsub.f32 %v558, %v608
  %v626 = vmax.f32 %v610, -60.0
  %v627 = vmax.f32 %v611, -60.0
  %v628 = vmax.f32 %v612, -60.0
  %v629 = vmax.f32 %v613, -60.0
  %v630 = vmax.f32 %v614, -60.0
  %v631 = vmax.f32 %v615, -60.0
  %v632 = vmax.f32 %v616, -60.0
  %v633 = vmax.f32 %v617, -60.0
  %v634 = vmax.f32 %v618, -60.0
  %v635 = vmax.f32 %v619, -60.0
  %v636 = vmax.f32 %v620, -60.0
  %v637 = vmax.f32 %v621, -60.0
  %v638 = vmax.f32 %v622, -60.0
  %v639 = vmax.f32 %v623, -60.0
  %v640 = vmax.f32 %v624, -60.0
  %v641 = vmax.f32 %v625, -60.0
  %v642 = vmul.f32 %v626, 1.442695
  %v643 = vpow.pop %v642
  %v644 = vmul.f32 %v627, 1.442695
  %v645 = vpow.pop %v644
  %v646 = vmul.f32 %v628, 1.442695
  %v647 = vpow.pop %v646
  %v648 = vmul.f32 %v629, 1.442695
  %v649 = vpow.pop %v648
  %v650 = vmul.f32 %v630, 1.442695
  %v651 = vpow.pop %v650
  %v652 = vmul.f32 %v631, 1.442695
  %v653 = vpow.pop %v652
  %v654 = vmul.f32 %v632, 1.442695
  %v655 = vpow.pop %v654
  %v656 = vmul.f32 %v633, 1.442695
  %v657 = vpow.pop %v656
  %v658 = vmul.f32 %v634, 1.442695
  %v659 = vpow.pop %v658
  %v660 = vmul.f32 %v635, 1.442695
  %v661 = vpow.pop %v660
  %v662 = vmul.f32 %v636, 1.442695
  %v663 = vpow.pop %v662
  %v664 = vmul.f32 %v637, 1.442695
  %v665 = vpow.pop %v664
  %v666 = vmul.f32 %v638, 1.442695
  %v667 = vpow.pop %v666
  %v668 = vmul.f32 %v639, 1.442695
  %v669 = vpow.pop %v668
  %v670 = vmul.f32 %v640, 1.442695
  %v671 = vpow.pop %v670
  %v672 = vmul.f32 %v641, 1.442695
  %v673 = vpow.pop %v672
  %v674 = vld [vmem:[#allocation3] sm:$0xff]
  %v675 = vld [vmem:[#allocation3 + $0x8] sm:$0xff]
  %v676 = vld [vmem:[#allocation3 + $0x10] sm:$0xff]
  %v677 = vld [vmem:[#allocation3 + $0x18] sm:$0xff]
  %v678 = vld [vmem:[#allocation3 + $0x20] sm:$0xff]
  %v679 = vld [vmem:[#allocation3 + $0x28] sm:$0xff]
  %v680 = vld [vmem:[#allocation3 + $0x30] sm:$0xff]
  %v681 = vld [vmem:[#allocation3 + $0x38] sm:$0xff]
  %v682 = vld [vmem:[#allocation3 + $0x40] sm:$0xff]
  %v683 = vld [vmem:[#allocation3 + $0x48] sm:$0xff]
  %v684 = vld [vmem:[#allocation3 + $0x50] sm:$0xff]
  %v685 = vld [vmem:[#allocation3 + $0x58] sm:$0xff]
  %v686 = vld [vmem:[#allocation3 + $0x60] sm:$0xff]
  %v687 = vld [vmem:[#allocation3 + $0x68] sm:$0xff]
  %v688 = vld [vmem:[#allocation3 + $0x70] sm:$0xff]
  %v689 = vld [vmem:[#allocation3 + $0x78] sm:$0xff]
  %v691 = vlaneseq
  %v692 = vshrl.u32 %v691, 7
  %v693 = vsub.s32 0, %v692
  %v694 = vrot.slane %v603, %v693
  %v696 = vmul.f32 %v694, %v674
  %v697 = vmul.f32 %v694, %v675
  %v698 = vmul.f32 %v694, %v676
  %v699 = vmul.f32 %v694, %v677
  %v700 = vmul.f32 %v694, %v678
  %v701 = vmul.f32 %v694, %v679
  %v702 = vmul.f32 %v694, %v680
  %v703 = vmul.f32 %v694, %v681
  %v704 = vmul.f32 %v694, %v682
  %v705 = vmul.f32 %v694, %v683
  %v706 = vmul.f32 %v694, %v684
  %v707 = vmul.f32 %v694, %v685
  %v708 = vmul.f32 %v694, %v686
  %v709 = vmul.f32 %v694, %v687
  %v710 = vmul.f32 %v694, %v688
  %v711 = vmul.f32 %v694, %v689
  %712 = vxpose.xlu0.b32.start [1/16] %v157, 128
  %713 = vxpose.xlu0.b32.cont [2/16] %v158, 128
  %714 = vxpose.xlu0.b32.cont [3/16] %v159, 128
  %715 = vxpose.xlu0.b32.cont [4/16] %v160, 128
  %716 = vxpose.xlu0.b32.cont [5/16] %v161, 128
  %717 = vxpose.xlu0.b32.cont [6/16] %v162, 128
  %718 = vxpose.xlu0.b32.cont [7/16] %v163, 128
  %719 = vxpose.xlu0.b32.cont [8/16] %v164, 128
  %720 = vxpose.xlu0.b32.cont [9/16] %v165, 128
  %721 = vxpose.xlu0.b32.cont [10/16] %v166, 128
  %722 = vxpose.xlu0.b32.cont [11/16] %v167, 128
  %723 = vxpose.xlu0.b32.cont [12/16] %v168, 128
  %724 = vxpose.xlu0.b32.cont [13/16] %v169, 128
  %725 = vxpose.xlu0.b32.cont [14/16] %v170, 128
  %726 = vxpose.xlu0.b32.cont [15/16] %v171, 128
  %727 = vxpose.xlu0.b32.end [16/16] %v172, 128
  %v728 = vpop.trf.xlu0
  %v729 = vpop.trf.xlu0
  %v730 = vpop.trf.xlu0
  %v731 = vpop.trf.xlu0
  %v732 = vpop.trf.xlu0
  %v733 = vpop.trf.xlu0
  %v734 = vpop.trf.xlu0
  %v735 = vpop.trf.xlu0
  %v736 = vpop.trf.xlu0
  %v737 = vpop.trf.xlu0
  %v738 = vpop.trf.xlu0
  %v739 = vpop.trf.xlu0
  %v740 = vpop.trf.xlu0
  %v741 = vpop.trf.xlu0
  %v742 = vpop.trf.xlu0
  %v743 = vpop.trf.xlu0
  %744 = vmatprep.subr.mxu0 0.0
  %745 = vmatpush1.msra.mxu0 %v673
  %746 = vmatprep.subr.mxu0 0.0
  %747 = vmatpush1.msra.mxu0 %v671
  %748 = vmatprep.subr.mxu0 0.0
  %749 = vmatpush1.msra.mxu0 %v669
  %750 = vmatprep.subr.mxu0 0.0
  %751 = vmatpush1.msra.mxu0 %v667
  %752 = vmatprep.subr.mxu0 0.0
  %753 = vmatpush1.msra.mxu0 %v665
  %754 = vmatprep.subr.mxu0 0.0
  %755 = vmatpush1.msra.mxu0 %v663
  %756 = vmatprep.subr.mxu0 0.0
  %757 = vmatpush1.msra.mxu0 %v661
  %758 = vmatprep.subr.mxu0 0.0
  %759 = vmatpush1.msra.mxu0 %v659
  %760 = vmatprep.subr.mxu0 0.0
  %761 = vmatpush1.msra.mxu0 %v657
  %762 = vmatprep.subr.mxu0 0.0
  %763 = vmatpush1.msra.mxu0 %v655
  %764 = vmatprep.subr.mxu0 0.0
  %765 = vmatpush1.msra.mxu0 %v653
  %766 = vmatprep.subr.mxu0 0.0
  %767 = vmatpush1.msra.mxu0 %v651
  %768 = vmatprep.subr.mxu0 0.0
  %769 = vmatpush1.msra.mxu0 %v649
  %770 = vmatprep.subr.mxu0 0.0
  %771 = vmatpush1.msra.mxu0 %v647
  %772 = vmatprep.subr.mxu0 0.0
  %773 = vmatpush1.msra.mxu0 %v645
  %774 = vmatprep.subr.mxu0 0.0
  %775 = vmatpush1.msra.mxu0 %v643
  %776 = vmatprep.subr.mxu0 0.0
  %777 = vmatpush2.msra.mxu0 0.0
  %778 = vmatprep.subr.mxu0 0.0
  %779 = vmatpush2.msra.mxu0 0.0
  %780 = vmatprep.subr.mxu0 0.0
  %781 = vmatpush2.msra.mxu0 0.0
  %782 = vmatprep.subr.mxu0 0.0
  %783 = vmatpush2.msra.mxu0 0.0
  %784 = vmatprep.subr.mxu0 0.0
  %785 = vmatpush2.msra.mxu0 0.0
  %786 = vmatprep.subr.mxu0 0.0
  %787 = vmatpush2.msra.mxu0 0.0
  %788 = vmatprep.subr.mxu0 0.0
  %789 = vmatpush2.msra.mxu0 0.0
  %790 = vmatprep.subr.mxu0 0.0
  %791 = vmatpush2.msra.mxu0 0.0
  %792 = vmatprep.subr.mxu0 0.0
  %793 = vmatpush2.msra.mxu0 0.0
  %794 = vmatprep.subr.mxu0 0.0
  %795 = vmatpush2.msra.mxu0 0.0
  %796 = vmatprep.subr.mxu0 0.0
  %797 = vmatpush2.msra.mxu0 0.0
  %798 = vmatprep.subr.mxu0 0.0
  %799 = vmatpush2.msra.mxu0 0.0
  %800 = vmatprep.subr.mxu0 0.0
  %801 = vmatpush2.msra.mxu0 0.0
  %802 = vmatprep.subr.mxu0 0.0
  %803 = vmatpush2.msra.mxu0 0.0
  %804 = vmatprep.subr.mxu0 0.0
  %805 = vmatpush2.msra.mxu0 0.0
  %806 = vmatprep.subr.mxu0 0.0
  %807 = vmatpush2.msra.mxu0 0.0
  %808 = vmatprep.mubr.f32.mxu0 0.0
  %809 = vmatmul.mubr.f32.gmra.mxu0 %v728
  %v810 = vpop.f32.mrf.mxu0
  %v811 = vadd.f32 0.0, %v810
  %v812 = vpop.f32.mrf.mxu0
  %813 = vmatprep.mubr.f32.mxu0 0.0
  %814 = vmatmul.mubr.f32.gmra.mxu0 %v729
  %v815 = vpop.f32.mrf.mxu0
  %v816 = vadd.f32 0.0, %v815
  %v817 = vpop.f32.mrf.mxu0
  %818 = vmatprep.mubr.f32.mxu0 0.0
  %819 = vmatmul.mubr.f32.gmra.mxu0 %v730
  %v820 = vpop.f32.mrf.mxu0
  %v821 = vadd.f32 0.0, %v820
  %v822 = vpop.f32.mrf.mxu0
  %823 = vmatprep.mubr.f32.mxu0 0.0
  %824 = vmatmul.mubr.f32.gmra.mxu0 %v731
  %v825 = vpop.f32.mrf.mxu0
  %v826 = vadd.f32 0.0, %v825
  %v827 = vpop.f32.mrf.mxu0
  %828 = vmatprep.mubr.f32.mxu0 0.0
  %829 = vmatmul.mubr.f32.gmra.mxu0 %v732
  %v830 = vpop.f32.mrf.mxu0
  %v831 = vadd.f32 0.0, %v830
  %v832 = vpop.f32.mrf.mxu0
  %833 = vmatprep.mubr.f32.mxu0 0.0
  %834 = vmatmul.mubr.f32.gmra.mxu0 %v733
  %v835 = vpop.f32.mrf.mxu0
  %v836 = vadd.f32 0.0, %v835
  %v837 = vpop.f32.mrf.mxu0
  %838 = vmatprep.mubr.f32.mxu0 0.0
  %839 = vmatmul.mubr.f32.gmra.mxu0 %v734
  %v840 = vpop.f32.mrf.mxu0
  %v841 = vadd.f32 0.0, %v840
  %v842 = vpop.f32.mrf.mxu0
  %843 = vmatprep.mubr.f32.mxu0 0.0
  %844 = vmatmul.mubr.f32.gmra.mxu0 %v735
  %v845 = vpop.f32.mrf.mxu0
  %v846 = vadd.f32 0.0, %v845
  %v847 = vpop.f32.mrf.mxu0
  %848 = vmatprep.mubr.f32.mxu0 0.0
  %849 = vmatmul.mubr.f32.gmra.mxu0 %v736
  %v850 = vpop.f32.mrf.mxu0
  %v851 = vadd.f32 0.0, %v850
  %v852 = vpop.f32.mrf.mxu0
  %853 = vmatprep.mubr.f32.mxu0 0.0
  %854 = vmatmul.mubr.f32.gmra.mxu0 %v737
  %v855 = vpop.f32.mrf.mxu0
  %v856 = vadd.f32 0.0, %v855
  %v857 = vpop.f32.mrf.mxu0
  %858 = vmatprep.mubr.f32.mxu0 0.0
  %859 = vmatmul.mubr.f32.gmra.mxu0 %v738
  %v860 = vpop.f32.mrf.mxu0
  %v861 = vadd.f32 0.0, %v860
  %v862 = vpop.f32.mrf.mxu0
  %863 = vmatprep.mubr.f32.mxu0 0.0
  %864 = vmatmul.mubr.f32.gmra.mxu0 %v739
  %v865 = vpop.f32.mrf.mxu0
  %v866 = vadd.f32 0.0, %v865
  %v867 = vpop.f32.mrf.mxu0
  %868 = vmatprep.mubr.f32.mxu0 0.0
  %869 = vmatmul.mubr.f32.gmra.mxu0 %v740
  %v870 = vpop.f32.mrf.mxu0
  %v871 = vadd.f32 0.0, %v870
  %v872 = vpop.f32.mrf.mxu0
  %873 = vmatprep.mubr.f32.mxu0 0.0
  %874 = vmatmul.mubr.f32.gmra.mxu0 %v741
  %v875 = vpop.f32.mrf.mxu0
  %v876 = vadd.f32 0.0, %v875
  %v877 = vpop.f32.mrf.mxu0
  %878 = vmatprep.mubr.f32.mxu0 0.0
  %879 = vmatmul.mubr.f32.gmra.mxu0 %v742
  %v880 = vpop.f32.mrf.mxu0
  %v881 = vadd.f32 0.0, %v880
  %v882 = vpop.f32.mrf.mxu0
  %883 = vmatprep.mubr.f32.mxu0 0.0
  %884 = vmatmul.mubr.f32.gmra.mxu0 %v743
  %v885 = vpop.f32.mrf.mxu0
  %v886 = vadd.f32 0.0, %v885
  %v887 = vpop.f32.mrf.mxu0
  %888 = vdwg.mxu0
  %v889 = vadd.f32 %v696, %v811
  %v890 = vadd.f32 %v697, %v816
  %v891 = vadd.f32 %v698, %v821
  %v892 = vadd.f32 %v699, %v826
  %v893 = vadd.f32 %v700, %v831
  %v894 = vadd.f32 %v701, %v836
  %v895 = vadd.f32 %v702, %v841
  %v896 = vadd.f32 %v703, %v846
  %v897 = vadd.f32 %v704, %v851
  %v898 = vadd.f32 %v705, %v856
  %v899 = vadd.f32 %v706, %v861
  %v900 = vadd.f32 %v707, %v866
  %v901 = vadd.f32 %v708, %v871
  %v902 = vadd.f32 %v709, %v876
  %v903 = vadd.f32 %v710, %v881
  %v904 = vadd.f32 %v711, %v886
  %905 = vst.msk [vmem:[#allocation3] sm:$0xff] %vm560, %v889
  %906 = vst.msk [vmem:[#allocation3 + $0x8] sm:$0xff] %vm560, %v890
  %907 = vst.msk [vmem:[#allocation3 + $0x10] sm:$0xff] %vm560, %v891
  %908 = vst.msk [vmem:[#allocation3 + $0x18] sm:$0xff] %vm560, %v892
  %909 = vst.msk [vmem:[#allocation3 + $0x20] sm:$0xff] %vm560, %v893
  %910 = vst.msk [vmem:[#allocation3 + $0x28] sm:$0xff] %vm560, %v894
  %911 = vst.msk [vmem:[#allocation3 + $0x30] sm:$0xff] %vm560, %v895
  %912 = vst.msk [vmem:[#allocation3 + $0x38] sm:$0xff] %vm560, %v896
  %913 = vst.msk [vmem:[#allocation3 + $0x40] sm:$0xff] %vm560, %v897
  %914 = vst.msk [vmem:[#allocation3 + $0x48] sm:$0xff] %vm560, %v898
  %915 = vst.msk [vmem:[#allocation3 + $0x50] sm:$0xff] %vm560, %v899
  %916 = vst.msk [vmem:[#allocation3 + $0x58] sm:$0xff] %vm560, %v900
  %917 = vst.msk [vmem:[#allocation3 + $0x60] sm:$0xff] %vm560, %v901
  %918 = vst.msk [vmem:[#allocation3 + $0x68] sm:$0xff] %vm560, %v902
  %919 = vst.msk [vmem:[#allocation3 + $0x70] sm:$0xff] %vm560, %v903
  %920 = vst.msk [vmem:[#allocation3 + $0x78] sm:$0xff] %vm560, %v904
  %v921 = vld [vmem:[%s4] sm:$0x3]
  %v923 = vsel %vm560, %v643, 0
  %v926 = vsel %vm560, %v645, 0
  %v929 = vsel %vm560, %v647, 0
  %v932 = vsel %vm560, %v649, 0
  %v935 = vsel %vm560, %v651, 0
  %v938 = vsel %vm560, %v653, 0
  %v941 = vsel %vm560, %v655, 0
  %v944 = vsel %vm560, %v657, 0
  %v947 = vsel %vm560, %v659, 0
  %v950 = vsel %vm560, %v661, 0
  %v953 = vsel %vm560, %v663, 0
  %v956 = vsel %vm560, %v665, 0
  %v959 = vsel %vm560, %v667, 0
  %v962 = vsel %vm560, %v669, 0
  %v965 = vsel %vm560, %v671, 0
  %v968 = vsel %vm560, %v673, 0
  %vm970 = vcmask 1041408
  %v972 = vsel %vm970, %v921, 0
  %974 = vmatprep.subr.mxu0 0.0
  %975 = vmatpush1.msra.mxu0 0.0
  %976 = vmatprep.subr.mxu0 0.0
  %977 = vmatpush1.msra.mxu0 0.0
  %978 = vmatprep.subr.mxu0 0.0
  %979 = vmatpush1.msra.mxu0 0.0
  %980 = vmatprep.subr.mxu0 0.0
  %981 = vmatpush1.msra.mxu0 0.0
  %982 = vmatprep.subr.mxu0 0.0
  %983 = vmatpush1.msra.mxu0 0.0
  %984 = vmatprep.subr.mxu0 0.0
  %985 = vmatpush1.msra.mxu0 0.0
  %986 = vmatprep.subr.mxu0 0.0
  %987 = vmatpush1.msra.mxu0 0.0
  %988 = vmatprep.subr.mxu0 0.0
  %989 = vmatpush1.msra.mxu0 0.0
  %990 = vmatprep.subr.mxu0 0.0
  %991 = vmatpush1.msra.mxu0 0.0
  %992 = vmatprep.subr.mxu0 0.0
  %993 = vmatpush1.msra.mxu0 0.0
  %994 = vmatprep.subr.mxu0 0.0
  %995 = vmatpush1.msra.mxu0 0.0
  %996 = vmatprep.subr.mxu0 0.0
  %997 = vmatpush1.msra.mxu0 0.0
  %998 = vmatprep.subr.mxu0 0.0
  %999 = vmatpush1.msra.mxu0 0.0
  %1000 = vmatprep.subr.mxu0 0.0
  %1001 = vmatpush1.msra.mxu0 0.0
  %1002 = vmatprep.subr.mxu0 0.0
  %1003 = vmatpush1.msra.mxu0 0.0
  %1004 = vmatprep.subr.mxu0 0.0
  %1005 = vmatpush1.msra.mxu0 %v972
  %1006 = vmatprep.subr.mxu0 0.0
  %1007 = vmatpush2.msra.mxu0 0.0
  %1008 = vmatprep.subr.mxu0 0.0
  %1009 = vmatpush2.msra.mxu0 0.0
  %1010 = vmatprep.subr.mxu0 0.0
  %1011 = vmatpush2.msra.mxu0 0.0
  %1012 = vmatprep.subr.mxu0 0.0
  %1013 = vmatpush2.msra.mxu0 0.0
  %1014 = vmatprep.subr.mxu0 0.0
  %1015 = vmatpush2.msra.mxu0 0.0
  %1016 = vmatprep.subr.mxu0 0.0
  %1017 = vmatpush2.msra.mxu0 0.0
  %1018 = vmatprep.subr.mxu0 0.0
  %1019 = vmatpush2.msra.mxu0 0.0
  %1020 = vmatprep.subr.mxu0 0.0
  %1021 = vmatpush2.msra.mxu0 0.0
  %1022 = vmatprep.subr.mxu0 0.0
  %1023 = vmatpush2.msra.mxu0 0.0
  %1024 = vmatprep.subr.mxu0 0.0
  %1025 = vmatpush2.msra.mxu0 0.0
  %1026 = vmatprep.subr.mxu0 0.0
  %1027 = vmatpush2.msra.mxu0 0.0
  %1028 = vmatprep.subr.mxu0 0.0
  %1029 = vmatpush2.msra.mxu0 0.0
  %1030 = vmatprep.subr.mxu0 0.0
  %1031 = vmatpush2.msra.mxu0 0.0
  %1032 = vmatprep.subr.mxu0 0.0
  %1033 = vmatpush2.msra.mxu0 0.0
  %1034 = vmatprep.subr.mxu0 0.0
  %1035 = vmatpush2.msra.mxu0 0.0
  %1036 = vmatprep.subr.mxu0 0.0
  %1037 = vmatpush2.msra.mxu0 0.0
  %1038 = vmatprep.mubr.f32.mxu0 0.0
  %1039 = vmatmul.mubr.f32.gmra.mxu0 %v923
  %v1040 = vpop.f32.mrf.mxu0
  %v1041 = vadd.f32 0.0, %v1040
  %v1042 = vpop.f32.mrf.mxu0
  %1043 = vmatprep.mubr.f32.mxu0 0.0
  %1044 = vmatmul.mubr.f32.gmra.mxu0 %v926
  %v1045 = vpop.f32.mrf.mxu0
  %v1046 = vadd.f32 0.0, %v1045
  %v1047 = vpop.f32.mrf.mxu0
  %1048 = vmatprep.mubr.f32.mxu0 0.0
  %1049 = vmatmul.mubr.f32.gmra.mxu0 %v929
  %v1050 = vpop.f32.mrf.mxu0
  %v1051 = vadd.f32 0.0, %v1050
  %v1052 = vpop.f32.mrf.mxu0
  %1053 = vmatprep.mubr.f32.mxu0 0.0
  %1054 = vmatmul.mubr.f32.gmra.mxu0 %v932
  %v1055 = vpop.f32.mrf.mxu0
  %v1056 = vadd.f32 0.0, %v1055
  %v1057 = vpop.f32.mrf.mxu0
  %1058 = vmatprep.mubr.f32.mxu0 0.0
  %1059 = vmatmul.mubr.f32.gmra.mxu0 %v935
  %v1060 = vpop.f32.mrf.mxu0
  %v1061 = vadd.f32 0.0, %v1060
  %v1062 = vpop.f32.mrf.mxu0
  %1063 = vmatprep.mubr.f32.mxu0 0.0
  %1064 = vmatmul.mubr.f32.gmra.mxu0 %v938
  %v1065 = vpop.f32.mrf.mxu0
  %v1066 = vadd.f32 0.0, %v1065
  %v1067 = vpop.f32.mrf.mxu0
  %1068 = vmatprep.mubr.f32.mxu0 0.0
  %1069 = vmatmul.mubr.f32.gmra.mxu0 %v941
  %v1070 = vpop.f32.mrf.mxu0
  %v1071 = vadd.f32 0.0, %v1070
  %v1072 = vpop.f32.mrf.mxu0
  %1073 = vmatprep.mubr.f32.mxu0 0.0
  %1074 = vmatmul.mubr.f32.gmra.mxu0 %v944
  %v1075 = vpop.f32.mrf.mxu0
  %v1076 = vadd.f32 0.0, %v1075
  %v1077 = vpop.f32.mrf.mxu0
  %1078 = vmatprep.mubr.f32.mxu0 0.0
  %1079 = vmatmul.mubr.f32.gmra.mxu0 %v947
  %v1080 = vpop.f32.mrf.mxu0
  %v1081 = vadd.f32 0.0, %v1080
  %v1082 = vpop.f32.mrf.mxu0
  %1083 = vmatprep.mubr.f32.mxu0 0.0
  %1084 = vmatmul.mubr.f32.gmra.mxu0 %v950
  %v1085 = vpop.f32.mrf.mxu0
  %v1086 = vadd.f32 0.0, %v1085
  %v1087 = vpop.f32.mrf.mxu0
  %1088 = vmatprep.mubr.f32.mxu0 0.0
  %1089 = vmatmul.mubr.f32.gmra.mxu0 %v953
  %v1090 = vpop.f32.mrf.mxu0
  %v1091 = vadd.f32 0.0, %v1090
  %v1092 = vpop.f32.mrf.mxu0
  %1093 = vmatprep.mubr.f32.mxu0 0.0
  %1094 = vmatmul.mubr.f32.gmra.mxu0 %v956
  %v1095 = vpop.f32.mrf.mxu0
  %v1096 = vadd.f32 0.0, %v1095
  %v1097 = vpop.f32.mrf.mxu0
  %1098 = vmatprep.mubr.f32.mxu0 0.0
  %1099 = vmatmul.mubr.f32.gmra.mxu0 %v959
  %v1100 = vpop.f32.mrf.mxu0
  %v1101 = vadd.f32 0.0, %v1100
  %v1102 = vpop.f32.mrf.mxu0
  %1103 = vmatprep.mubr.f32.mxu0 0.0
  %1104 = vmatmul.mubr.f32.gmra.mxu0 %v962
  %v1105 = vpop.f32.mrf.mxu0
  %v1106 = vadd.f32 0.0, %v1105
  %v1107 = vpop.f32.mrf.mxu0
  %1108 = vmatprep.mubr.f32.mxu0 0.0
  %1109 = vmatmul.mubr.f32.gmra.mxu0 %v965
  %v1110 = vpop.f32.mrf.mxu0
  %v1111 = vadd.f32 0.0, %v1110
  %v1112 = vpop.f32.mrf.mxu0
  %1113 = vmatprep.mubr.f32.mxu0 0.0
  %1114 = vmatmul.mubr.f32.gmra.mxu0 %v968
  %v1115 = vpop.f32.mrf.mxu0
  %v1116 = vadd.f32 0.0, %v1115
  %v1117 = vpop.f32.mrf.mxu0
  %1118 = vdwg.mxu0
  %v1119 = vsel %vm560, %v603, 0
  %1121 = vmatprep.subr.mxu0 0.0
  %1122 = vmatpush1.msra.mxu0 0.0
  %1123 = vmatprep.subr.mxu0 0.0
  %1124 = vmatpush1.msra.mxu0 0.0
  %1125 = vmatprep.subr.mxu0 0.0
  %1126 = vmatpush1.msra.mxu0 0.0
  %1127 = vmatprep.subr.mxu0 0.0
  %1128 = vmatpush1.msra.mxu0 0.0
  %1129 = vmatprep.subr.mxu0 0.0
  %1130 = vmatpush1.msra.mxu0 0.0
  %1131 = vmatprep.subr.mxu0 0.0
  %1132 = vmatpush1.msra.mxu0 0.0
  %1133 = vmatprep.subr.mxu0 0.0
  %1134 = vmatpush1.msra.mxu0 0.0
  %1135 = vmatprep.subr.mxu0 0.0
  %1136 = vmatpush1.msra.mxu0 0.0
  %1137 = vmatprep.subr.mxu0 0.0
  %1138 = vmatpush1.msra.mxu0 0.0
  %1139 = vmatprep.subr.mxu0 0.0
  %1140 = vmatpush1.msra.mxu0 0.0
  %1141 = vmatprep.subr.mxu0 0.0
  %1142 = vmatpush1.msra.mxu0 0.0
  %1143 = vmatprep.subr.mxu0 0.0
  %1144 = vmatpush1.msra.mxu0 0.0
  %1145 = vmatprep.subr.mxu0 0.0
  %1146 = vmatpush1.msra.mxu0 0.0
  %1147 = vmatprep.subr.mxu0 0.0
  %1148 = vmatpush1.msra.mxu0 0.0
  %1149 = vmatprep.subr.mxu0 0.0
  %1150 = vmatpush1.msra.mxu0 0.0
  %1151 = vmatprep.subr.mxu0 0.0
  %1152 = vmatpush1.msra.mxu0 %v972
  %1153 = vmatprep.subr.mxu0 0.0
  %1154 = vmatpush2.msra.mxu0 0.0
  %1155 = vmatprep.subr.mxu0 0.0
  %1156 = vmatpush2.msra.mxu0 0.0
  %1157 = vmatprep.subr.mxu0 0.0
  %1158 = vmatpush2.msra.mxu0 0.0
  %1159 = vmatprep.subr.mxu0 0.0
  %1160 = vmatpush2.msra.mxu0 0.0
  %1161 = vmatprep.subr.mxu0 0.0
  %1162 = vmatpush2.msra.mxu0 0.0
  %1163 = vmatprep.subr.mxu0 0.0
  %1164 = vmatpush2.msra.mxu0 0.0
  %1165 = vmatprep.subr.mxu0 0.0
  %1166 = vmatpush2.msra.mxu0 0.0
  %1167 = vmatprep.subr.mxu0 0.0
  %1168 = vmatpush2.msra.mxu0 0.0
  %1169 = vmatprep.subr.mxu0 0.0
  %1170 = vmatpush2.msra.mxu0 0.0
  %1171 = vmatprep.subr.mxu0 0.0
  %1172 = vmatpush2.msra.mxu0 0.0
  %1173 = vmatprep.subr.mxu0 0.0
  %1174 = vmatpush2.msra.mxu0 0.0
  %1175 = vmatprep.subr.mxu0 0.0
  %1176 = vmatpush2.msra.mxu0 0.0
  %1177 = vmatprep.subr.mxu0 0.0
  %1178 = vmatpush2.msra.mxu0 0.0
  %1179 = vmatprep.subr.mxu0 0.0
  %1180 = vmatpush2.msra.mxu0 0.0
  %1181 = vmatprep.subr.mxu0 0.0
  %1182 = vmatpush2.msra.mxu0 0.0
  %1183 = vmatprep.subr.mxu0 0.0
  %1184 = vmatpush2.msra.mxu0 0.0
  %1185 = vmatprep.mubr.f32.mxu0 0.0
  %1186 = vmatmul.mubr.f32.gmra.mxu0 %v1119
  %v1187 = vpop.f32.mrf.mxu0
  %v1188 = vadd.f32 0.0, %v1187
  %v1189 = vpop.f32.mrf.mxu0
  %1190 = vdwg.mxu0
  %v1191 = vld [vmem:[%s5] sm:$0xff]
  %v1192 = vld [vmem:[%s5 + $0x8] sm:$0xff]
  %v1193 = vld [vmem:[%s5 + $0x10] sm:$0xff]
  %v1194 = vld [vmem:[%s5 + $0x18] sm:$0xff]
  %v1195 = vld [vmem:[%s5 + $0x20] sm:$0xff]
  %v1196 = vld [vmem:[%s5 + $0x28] sm:$0xff]
  %v1197 = vld [vmem:[%s5 + $0x30] sm:$0xff]
  %v1198 = vld [vmem:[%s5 + $0x38] sm:$0xff]
  %v1199 = vld [vmem:[%s5 + $0x40] sm:$0xff]
  %v1200 = vld [vmem:[%s5 + $0x48] sm:$0xff]
  %v1201 = vld [vmem:[%s5 + $0x50] sm:$0xff]
  %v1202 = vld [vmem:[%s5 + $0x58] sm:$0xff]
  %v1203 = vld [vmem:[%s5 + $0x60] sm:$0xff]
  %v1204 = vld [vmem:[%s5 + $0x68] sm:$0xff]
  %v1205 = vld [vmem:[%s5 + $0x70] sm:$0xff]
  %v1206 = vld [vmem:[%s5 + $0x78] sm:$0xff]
  %v1207 = vlaneseq
  %v1208 = vshrl.u32 %v1207, 7
  %v1209 = vsub.s32 0, %v1208
  %v1210 = vrot.slane %v1188, %v1209
  %v1211 = vmul.f32 %v1210, %v1191
  %v1212 = vmul.f32 %v1210, %v1192
  %v1213 = vmul.f32 %v1210, %v1193
  %v1214 = vmul.f32 %v1210, %v1194
  %v1215 = vmul.f32 %v1210, %v1195
  %v1216 = vmul.f32 %v1210, %v1196
  %v1217 = vmul.f32 %v1210, %v1197
  %v1218 = vmul.f32 %v1210, %v1198
  %v1219 = vmul.f32 %v1210, %v1199
  %v1220 = vmul.f32 %v1210, %v1200
  %v1221 = vmul.f32 %v1210, %v1201
  %v1222 = vmul.f32 %v1210, %v1202
  %v1223 = vmul.f32 %v1210, %v1203
  %v1224 = vmul.f32 %v1210, %v1204
  %v1225 = vmul.f32 %v1210, %v1205
  %v1226 = vmul.f32 %v1210, %v1206
  %v1227 = vmul.f32 %v1041, %v272
  %v1228 = vmul.f32 %v1046, %v277
  %v1229 = vmul.f32 %v1051, %v282
  %v1230 = vmul.f32 %v1056, %v287
  %v1231 = vmul.f32 %v1061, %v292
  %v1232 = vmul.f32 %v1066, %v297
  %v1233 = vmul.f32 %v1071, %v302
  %v1234 = vmul.f32 %v1076, %v307
  %v1235 = vmul.f32 %v1081, %v312
  %v1236 = vmul.f32 %v1086, %v317
  %v1237 = vmul.f32 %v1091, %v322
  %v1238 = vmul.f32 %v1096, %v327
  %v1239 = vmul.f32 %v1101, %v332
  %v1240 = vmul.f32 %v1106, %v337
  %v1241 = vmul.f32 %v1111, %v342
  %v1242 = vmul.f32 %v1116, %v347
  %1243 = vmatprep.subr.mxu0 0.0
  %1244 = vmatpush1.msra.mxu0 %v1242
  %1245 = vmatprep.subr.mxu0 0.0
  %1246 = vmatpush1.msra.mxu0 %v1241
  %1247 = vmatprep.subr.mxu0 0.0
  %1248 = vmatpush1.msra.mxu0 %v1240
  %1249 = vmatprep.subr.mxu0 0.0
  %1250 = vmatpush1.msra.mxu0 %v1239
  %1251 = vmatprep.subr.mxu0 0.0
  %1252 = vmatpush1.msra.mxu0 %v1238
  %1253 = vmatprep.subr.mxu0 0.0
  %1254 = vmatpush1.msra.mxu0 %v1237
  %1255 = vmatprep.subr.mxu0 0.0
  %1256 = vmatpush1.msra.mxu0 %v1236
  %1257 = vmatprep.subr.mxu0 0.0
  %1258 = vmatpush1.msra.mxu0 %v1235
  %1259 = vmatprep.subr.mxu0 0.0
  %1260 = vmatpush1.msra.mxu0 %v1234
  %1261 = vmatprep.subr.mxu0 0.0
  %1262 = vmatpush1.msra.mxu0 %v1233
  %1263 = vmatprep.subr.mxu0 0.0
  %1264 = vmatpush1.msra.mxu0 %v1232
  %1265 = vmatprep.subr.mxu0 0.0
  %1266 = vmatpush1.msra.mxu0 %v1231
  %1267 = vmatprep.subr.mxu0 0.0
  %1268 = vmatpush1.msra.mxu0 %v1230
  %1269 = vmatprep.subr.mxu0 0.0
  %1270 = vmatpush1.msra.mxu0 %v1229
  %1271 = vmatprep.subr.mxu0 0.0
  %1272 = vmatpush1.msra.mxu0 %v1228
  %1273 = vmatprep.subr.mxu0 0.0
  %1274 = vmatpush1.msra.mxu0 %v1227
  %1275 = vmatprep.subr.mxu0 0.0
  %1276 = vmatpush2.msra.mxu0 0.0
  %1277 = vmatprep.subr.mxu0 0.0
  %1278 = vmatpush2.msra.mxu0 0.0
  %1279 = vmatprep.subr.mxu0 0.0
  %1280 = vmatpush2.msra.mxu0 0.0
  %1281 = vmatprep.subr.mxu0 0.0
  %1282 = vmatpush2.msra.mxu0 0.0
  %1283 = vmatprep.subr.mxu0 0.0
  %1284 = vmatpush2.msra.mxu0 0.0
  %1285 = vmatprep.subr.mxu0 0.0
  %1286 = vmatpush2.msra.mxu0 0.0
  %1287 = vmatprep.subr.mxu0 0.0
  %1288 = vmatpush2.msra.mxu0 0.0
  %1289 = vmatprep.subr.mxu0 0.0
  %1290 = vmatpush2.msra.mxu0 0.0
  %1291 = vmatprep.subr.mxu0 0.0
  %1292 = vmatpush2.msra.mxu0 0.0
  %1293 = vmatprep.subr.mxu0 0.0
  %1294 = vmatpush2.msra.mxu0 0.0
  %1295 = vmatprep.subr.mxu0 0.0
  %1296 = vmatpush2.msra.mxu0 0.0
  %1297 = vmatprep.subr.mxu0 0.0
  %1298 = vmatpush2.msra.mxu0 0.0
  %1299 = vmatprep.subr.mxu0 0.0
  %1300 = vmatpush2.msra.mxu0 0.0
  %1301 = vmatprep.subr.mxu0 0.0
  %1302 = vmatpush2.msra.mxu0 0.0
  %1303 = vmatprep.subr.mxu0 0.0
  %1304 = vmatpush2.msra.mxu0 0.0
  %1305 = vmatprep.subr.mxu0 0.0
  %1306 = vmatpush2.msra.mxu0 0.0
  %1307 = vmatprep.mubr.f32.mxu0 0.0
  %1308 = vmatmul.mubr.f32.gmra.mxu0 %v728
  %v1309 = vpop.f32.mrf.mxu0
  %v1310 = vadd.f32 0.0, %v1309
  %v1311 = vpop.f32.mrf.mxu0
  %1312 = vmatprep.mubr.f32.mxu0 0.0
  %1313 = vmatmul.mubr.f32.gmra.mxu0 %v729
  %v1314 = vpop.f32.mrf.mxu0
  %v1315 = vadd.f32 0.0, %v1314
  %v1316 = vpop.f32.mrf.mxu0
  %1317 = vmatprep.mubr.f32.mxu0 0.0
  %1318 = vmatmul.mubr.f32.gmra.mxu0 %v730
  %v1319 = vpop.f32.mrf.mxu0
  %v1320 = vadd.f32 0.0, %v1319
  %v1321 = vpop.f32.mrf.mxu0
  %1322 = vmatprep.mubr.f32.mxu0 0.0
  %1323 = vmatmul.mubr.f32.gmra.mxu0 %v731
  %v1324 = vpop.f32.mrf.mxu0
  %v1325 = vadd.f32 0.0, %v1324
  %v1326 = vpop.f32.mrf.mxu0
  %1327 = vmatprep.mubr.f32.mxu0 0.0
  %1328 = vmatmul.mubr.f32.gmra.mxu0 %v732
  %v1329 = vpop.f32.mrf.mxu0
  %v1330 = vadd.f32 0.0, %v1329
  %v1331 = vpop.f32.mrf.mxu0
  %1332 = vmatprep.mubr.f32.mxu0 0.0
  %1333 = vmatmul.mubr.f32.gmra.mxu0 %v733
  %v1334 = vpop.f32.mrf.mxu0
  %v1335 = vadd.f32 0.0, %v1334
  %v1336 = vpop.f32.mrf.mxu0
  %1337 = vmatprep.mubr.f32.mxu0 0.0
  %1338 = vmatmul.mubr.f32.gmra.mxu0 %v734
  %v1339 = vpop.f32.mrf.mxu0
  %v1340 = vadd.f32 0.0, %v1339
  %v1341 = vpop.f32.mrf.mxu0
  %1342 = vmatprep.mubr.f32.mxu0 0.0
  %1343 = vmatmul.mubr.f32.gmra.mxu0 %v735
  %v1344 = vpop.f32.mrf.mxu0
  %v1345 = vadd.f32 0.0, %v1344
  %v1346 = vpop.f32.mrf.mxu0
  %1347 = vmatprep.mubr.f32.mxu0 0.0
  %1348 = vmatmul.mubr.f32.gmra.mxu0 %v736
  %v1349 = vpop.f32.mrf.mxu0
  %v1350 = vadd.f32 0.0, %v1349
  %v1351 = vpop.f32.mrf.mxu0
  %1352 = vmatprep.mubr.f32.mxu0 0.0
  %1353 = vmatmul.mubr.f32.gmra.mxu0 %v737
  %v1354 = vpop.f32.mrf.mxu0
  %v1355 = vadd.f32 0.0, %v1354
  %v1356 = vpop.f32.mrf.mxu0
  %1357 = vmatprep.mubr.f32.mxu0 0.0
  %1358 = vmatmul.mubr.f32.gmra.mxu0 %v738
  %v1359 = vpop.f32.mrf.mxu0
  %v1360 = vadd.f32 0.0, %v1359
  %v1361 = vpop.f32.mrf.mxu0
  %1362 = vmatprep.mubr.f32.mxu0 0.0
  %1363 = vmatmul.mubr.f32.gmra.mxu0 %v739
  %v1364 = vpop.f32.mrf.mxu0
  %v1365 = vadd.f32 0.0, %v1364
  %v1366 = vpop.f32.mrf.mxu0
  %1367 = vmatprep.mubr.f32.mxu0 0.0
  %1368 = vmatmul.mubr.f32.gmra.mxu0 %v740
  %v1369 = vpop.f32.mrf.mxu0
  %v1370 = vadd.f32 0.0, %v1369
  %v1371 = vpop.f32.mrf.mxu0
  %1372 = vmatprep.mubr.f32.mxu0 0.0
  %1373 = vmatmul.mubr.f32.gmra.mxu0 %v741
  %v1374 = vpop.f32.mrf.mxu0
  %v1375 = vadd.f32 0.0, %v1374
  %v1376 = vpop.f32.mrf.mxu0
  %1377 = vmatprep.mubr.f32.mxu0 0.0
  %1378 = vmatmul.mubr.f32.gmra.mxu0 %v742
  %v1379 = vpop.f32.mrf.mxu0
  %v1380 = vadd.f32 0.0, %v1379
  %v1381 = vpop.f32.mrf.mxu0
  %1382 = vmatprep.mubr.f32.mxu0 0.0
  %1383 = vmatmul.mubr.f32.gmra.mxu0 %v743
  %v1384 = vpop.f32.mrf.mxu0
  %v1385 = vadd.f32 0.0, %v1384
  %v1386 = vpop.f32.mrf.mxu0
  %1387 = vdwg.mxu0
  %v1388 = vadd.f32 %v1211, %v1310
  %v1389 = vadd.f32 %v1212, %v1315
  %v1390 = vadd.f32 %v1213, %v1320
  %v1391 = vadd.f32 %v1214, %v1325
  %v1392 = vadd.f32 %v1215, %v1330
  %v1393 = vadd.f32 %v1216, %v1335
  %v1394 = vadd.f32 %v1217, %v1340
  %v1395 = vadd.f32 %v1218, %v1345
  %v1396 = vadd.f32 %v1219, %v1350
  %v1397 = vadd.f32 %v1220, %v1355
  %v1398 = vadd.f32 %v1221, %v1360
  %v1399 = vadd.f32 %v1222, %v1365
  %v1400 = vadd.f32 %v1223, %v1370
  %v1401 = vadd.f32 %v1224, %v1375
  %v1402 = vadd.f32 %v1225, %v1380
  %v1403 = vadd.f32 %v1226, %v1385
  %1404 = vst [vmem:[%s5] sm:$0xff] %v1388
  %1405 = vst [vmem:[%s5 + $0x8] sm:$0xff] %v1389
  %1406 = vst [vmem:[%s5 + $0x10] sm:$0xff] %v1390
  %1407 = vst [vmem:[%s5 + $0x18] sm:$0xff] %v1391
  %1408 = vst [vmem:[%s5 + $0x20] sm:$0xff] %v1392
  %1409 = vst [vmem:[%s5 + $0x28] sm:$0xff] %v1393
  %1410 = vst [vmem:[%s5 + $0x30] sm:$0xff] %v1394
  %1411 = vst [vmem:[%s5 + $0x38] sm:$0xff] %v1395
  %1412 = vst [vmem:[%s5 + $0x40] sm:$0xff] %v1396
  %1413 = vst [vmem:[%s5 + $0x48] sm:$0xff] %v1397
  %1414 = vst [vmem:[%s5 + $0x50] sm:$0xff] %v1398
  %1415 = vst [vmem:[%s5 + $0x58] sm:$0xff] %v1399
  %1416 = vst [vmem:[%s5 + $0x60] sm:$0xff] %v1400
  %1417 = vst [vmem:[%s5 + $0x68] sm:$0xff] %v1401
  %1418 = vst [vmem:[%s5 + $0x70] sm:$0xff] %v1402
  %1419 = vst [vmem:[%s5 + $0x78] sm:$0xff] %v1403
  // Predicated region
  $region26: #{kbgat_forward.3} parent=0 // pred_check
    %p1420 = pneg %p20
  $region27: #{kbgat_forward.3} parent=0 // pred_check_branch
    %1422 = sbr.rel (%p1420) target = $region29
  $region28: #{kbgat_forward.3} parent=0 // pred_region
    %v1423 = vld [vmem:[#allocation3] sm:$0xff]
    %v1424 = vld [vmem:[#allocation3 + $0x8] sm:$0xff]
    %v1425 = vld [vmem:[#allocation3 + $0x10] sm:$0xff]
    %v1426 = vld [vmem:[#allocation3 + $0x18] sm:$0xff]
    %v1427 = vld [vmem:[#allocation3 + $0x20] sm:$0xff]
    %v1428 = vld [vmem:[#allocation3 + $0x28] sm:$0xff]
    %v1429 = vld [vmem:[#allocation3 + $0x30] sm:$0xff]
    %v1430 = vld [vmem:[#allocation3 + $0x38] sm:$0xff]
    %v1431 = vld [vmem:[#allocation3 + $0x40] sm:$0xff]
    %v1432 = vld [vmem:[#allocation3 + $0x48] sm:$0xff]
    %v1433 = vld [vmem:[#allocation3 + $0x50] sm:$0xff]
    %v1434 = vld [vmem:[#allocation3 + $0x58] sm:$0xff]
    %v1435 = vld [vmem:[#allocation3 + $0x60] sm:$0xff]
    %v1436 = vld [vmem:[#allocation3 + $0x68] sm:$0xff]
    %v1437 = vld [vmem:[#allocation3 + $0x70] sm:$0xff]
    %v1438 = vld [vmem:[#allocation3 + $0x78] sm:$0xff]
    %v1439 = vld [vmem:[%s5] sm:$0xff]
    %v1440 = vld [vmem:[%s5 + $0x8] sm:$0xff]
    %v1441 = vld [vmem:[%s5 + $0x10] sm:$0xff]
    %v1442 = vld [vmem:[%s5 + $0x18] sm:$0xff]
    %v1443 = vld [vmem:[%s5 + $0x20] sm:$0xff]
    %v1444 = vld [vmem:[%s5 + $0x28] sm:$0xff]
    %v1445 = vld [vmem:[%s5 + $0x30] sm:$0xff]
    %v1446 = vld [vmem:[%s5 + $0x38] sm:$0xff]
    %v1447 = vld [vmem:[%s5 + $0x40] sm:$0xff]
    %v1448 = vld [vmem:[%s5 + $0x48] sm:$0xff]
    %v1449 = vld [vmem:[%s5 + $0x50] sm:$0xff]
    %v1450 = vld [vmem:[%s5 + $0x58] sm:$0xff]
    %v1451 = vld [vmem:[%s5 + $0x60] sm:$0xff]
    %v1452 = vld [vmem:[%s5 + $0x68] sm:$0xff]
    %v1453 = vld [vmem:[%s5 + $0x70] sm:$0xff]
    %v1454 = vld [vmem:[%s5 + $0x78] sm:$0xff]
    %v1456 = vsel %vm560, %v1423, 0
    %v1459 = vsel %vm560, %v1424, 0
    %v1462 = vsel %vm560, %v1425, 0
    %v1465 = vsel %vm560, %v1426, 0
    %v1468 = vsel %vm560, %v1427, 0
    %v1471 = vsel %vm560, %v1428, 0
    %v1474 = vsel %vm560, %v1429, 0
    %v1477 = vsel %vm560, %v1430, 0
    %v1480 = vsel %vm560, %v1431, 0
    %v1483 = vsel %vm560, %v1432, 0
    %v1486 = vsel %vm560, %v1433, 0
    %v1489 = vsel %vm560, %v1434, 0
    %v1492 = vsel %vm560, %v1435, 0
    %v1495 = vsel %vm560, %v1436, 0
    %v1498 = vsel %vm560, %v1437, 0
    %v1501 = vsel %vm560, %v1438, 0
    %1503 = vmatprep.subr.mxu0 0.0
    %1504 = vmatpush1.msra.mxu0 0.0
    %1505 = vmatprep.subr.mxu0 0.0
    %1506 = vmatpush1.msra.mxu0 0.0
    %1507 = vmatprep.subr.mxu0 0.0
    %1508 = vmatpush1.msra.mxu0 0.0
    %1509 = vmatprep.subr.mxu0 0.0
    %1510 = vmatpush1.msra.mxu0 0.0
    %1511 = vmatprep.subr.mxu0 0.0
    %1512 = vmatpush1.msra.mxu0 0.0
    %1513 = vmatprep.subr.mxu0 0.0
    %1514 = vmatpush1.msra.mxu0 0.0
    %1515 = vmatprep.subr.mxu0 0.0
    %1516 = vmatpush1.msra.mxu0 0.0
    %1517 = vmatprep.subr.mxu0 0.0
    %1518 = vmatpush1.msra.mxu0 0.0
    %1519 = vmatprep.subr.mxu0 0.0
    %1520 = vmatpush1.msra.mxu0 0.0
    %1521 = vmatprep.subr.mxu0 0.0
    %1522 = vmatpush1.msra.mxu0 0.0
    %1523 = vmatprep.subr.mxu0 0.0
    %1524 = vmatpush1.msra.mxu0 0.0
    %1525 = vmatprep.subr.mxu0 0.0
    %1526 = vmatpush1.msra.mxu0 0.0
    %1527 = vmatprep.subr.mxu0 0.0
    %1528 = vmatpush1.msra.mxu0 0.0
    %1529 = vmatprep.subr.mxu0 0.0
    %1530 = vmatpush1.msra.mxu0 0.0
    %1531 = vmatprep.subr.mxu0 0.0
    %1532 = vmatpush1.msra.mxu0 0.0
    %1533 = vmatprep.subr.mxu0 0.0
    %1534 = vmatpush1.msra.mxu0 %v972
    %1535 = vmatprep.subr.mxu0 0.0
    %1536 = vmatpush2.msra.mxu0 0.0
    %1537 = vmatprep.subr.mxu0 0.0
    %1538 = vmatpush2.msra.mxu0 0.0
    %1539 = vmatprep.subr.mxu0 0.0
    %1540 = vmatpush2.msra.mxu0 0.0
    %1541 = vmatprep.subr.mxu0 0.0
    %1542 = vmatpush2.msra.mxu0 0.0
    %1543 = vmatprep.subr.mxu0 0.0
    %1544 = vmatpush2.msra.mxu0 0.0
    %1545 = vmatprep.subr.mxu0 0.0
    %1546 = vmatpush2.msra.mxu0 0.0
    %1547 = vmatprep.subr.mxu0 0.0
    %1548 = vmatpush2.msra.mxu0 0.0
    %1549 = vmatprep.subr.mxu0 0.0
    %1550 = vmatpush2.msra.mxu0 0.0
    %1551 = vmatprep.subr.mxu0 0.0
    %1552 = vmatpush2.msra.mxu0 0.0
    %1553 = vmatprep.subr.mxu0 0.0
    %1554 = vmatpush2.msra.mxu0 0.0
    %1555 = vmatprep.subr.mxu0 0.0
    %1556 = vmatpush2.msra.mxu0 0.0
    %1557 = vmatprep.subr.mxu0 0.0
    %1558 = vmatpush2.msra.mxu0 0.0
    %1559 = vmatprep.subr.mxu0 0.0
    %1560 = vmatpush2.msra.mxu0 0.0
    %1561 = vmatprep.subr.mxu0 0.0
    %1562 = vmatpush2.msra.mxu0 0.0
    %1563 = vmatprep.subr.mxu0 0.0
    %1564 = vmatpush2.msra.mxu0 0.0
    %1565 = vmatprep.subr.mxu0 0.0
    %1566 = vmatpush2.msra.mxu0 0.0
    %1567 = vmatprep.mubr.f32.mxu0 0.0
    %1568 = vmatmul.mubr.f32.gmra.mxu0 %v1456
    %v1569 = vpop.f32.mrf.mxu0
    %v1570 = vadd.f32 1e-16, %v1569
    %v1571 = vpop.f32.mrf.mxu0
    %1572 = vmatprep.mubr.f32.mxu0 0.0
    %1573 = vmatmul.mubr.f32.gmra.mxu0 %v1459
    %v1574 = vpop.f32.mrf.mxu0
    %v1575 = vadd.f32 1e-16, %v1574
    %v1576 = vpop.f32.mrf.mxu0
    %1577 = vmatprep.mubr.f32.mxu0 0.0
    %1578 = vmatmul.mubr.f32.gmra.mxu0 %v1462
    %v1579 = vpop.f32.mrf.mxu0
    %v1580 = vadd.f32 1e-16, %v1579
    %v1581 = vpop.f32.mrf.mxu0
    %1582 = vmatprep.mubr.f32.mxu0 0.0
    %1583 = vmatmul.mubr.f32.gmra.mxu0 %v1465
    %v1584 = vpop.f32.mrf.mxu0
    %v1585 = vadd.f32 1e-16, %v1584
    %v1586 = vpop.f32.mrf.mxu0
    %1587 = vmatprep.mubr.f32.mxu0 0.0
    %1588 = vmatmul.mubr.f32.gmra.mxu0 %v1468
    %v1589 = vpop.f32.mrf.mxu0
    %v1590 = vadd.f32 1e-16, %v1589
    %v1591 = vpop.f32.mrf.mxu0
    %1592 = vmatprep.mubr.f32.mxu0 0.0
    %1593 = vmatmul.mubr.f32.gmra.mxu0 %v1471
    %v1594 = vpop.f32.mrf.mxu0
    %v1595 = vadd.f32 1e-16, %v1594
    %v1596 = vpop.f32.mrf.mxu0
    %1597 = vmatprep.mubr.f32.mxu0 0.0
    %1598 = vmatmul.mubr.f32.gmra.mxu0 %v1474
    %v1599 = vpop.f32.mrf.mxu0
    %v1600 = vadd.f32 1e-16, %v1599
    %v1601 = vpop.f32.mrf.mxu0
    %1602 = vmatprep.mubr.f32.mxu0 0.0
    %1603 = vmatmul.mubr.f32.gmra.mxu0 %v1477
    %v1604 = vpop.f32.mrf.mxu0
    %v1605 = vadd.f32 1e-16, %v1604
    %v1606 = vpop.f32.mrf.mxu0
    %1607 = vmatprep.mubr.f32.mxu0 0.0
    %1608 = vmatmul.mubr.f32.gmra.mxu0 %v1480
    %v1609 = vpop.f32.mrf.mxu0
    %v1610 = vadd.f32 1e-16, %v1609
    %v1611 = vpop.f32.mrf.mxu0
    %1612 = vmatprep.mubr.f32.mxu0 0.0
    %1613 = vmatmul.mubr.f32.gmra.mxu0 %v1483
    %v1614 = vpop.f32.mrf.mxu0
    %v1615 = vadd.f32 1e-16, %v1614
    %v1616 = vpop.f32.mrf.mxu0
    %1617 = vmatprep.mubr.f32.mxu0 0.0
    %1618 = vmatmul.mubr.f32.gmra.mxu0 %v1486
    %v1619 = vpop.f32.mrf.mxu0
    %v1620 = vadd.f32 1e-16, %v1619
    %v1621 = vpop.f32.mrf.mxu0
    %1622 = vmatprep.mubr.f32.mxu0 0.0
    %1623 = vmatmul.mubr.f32.gmra.mxu0 %v1489
    %v1624 = vpop.f32.mrf.mxu0
    %v1625 = vadd.f32 1e-16, %v1624
    %v1626 = vpop.f32.mrf.mxu0
    %1627 = vmatprep.mubr.f32.mxu0 0.0
    %1628 = vmatmul.mubr.f32.gmra.mxu0 %v1492
    %v1629 = vpop.f32.mrf.mxu0
    %v1630 = vadd.f32 1e-16, %v1629
    %v1631 = vpop.f32.mrf.mxu0
    %1632 = vmatprep.mubr.f32.mxu0 0.0
    %1633 = vmatmul.mubr.f32.gmra.mxu0 %v1495
    %v1634 = vpop.f32.mrf.mxu0
    %v1635 = vadd.f32 1e-16, %v1634
    %v1636 = vpop.f32.mrf.mxu0
    %1637 = vmatprep.mubr.f32.mxu0 0.0
    %1638 = vmatmul.mubr.f32.gmra.mxu0 %v1498
    %v1639 = vpop.f32.mrf.mxu0
    %v1640 = vadd.f32 1e-16, %v1639
    %v1641 = vpop.f32.mrf.mxu0
    %1642 = vmatprep.mubr.f32.mxu0 0.0
    %1643 = vmatmul.mubr.f32.gmra.mxu0 %v1501
    %v1644 = vpop.f32.mrf.mxu0
    %v1645 = vadd.f32 1e-16, %v1644
    %v1646 = vpop.f32.mrf.mxu0
    %1647 = vdwg.mxu0
    %v1648 = vrcp.pop %v1570
    %v1649 = vmul.f32 %v1439, %v1648
    %v1650 = vrcp.pop %v1575
    %v1651 = vmul.f32 %v1440, %v1650
    %v1652 = vrcp.pop %v1580
    %v1653 = vmul.f32 %v1441, %v1652
    %v1654 = vrcp.pop %v1585
    %v1655 = vmul.f32 %v1442, %v1654
    %v1656 = vrcp.pop %v1590
    %v1657 = vmul.f32 %v1443, %v1656
    %v1658 = vrcp.pop %v1595
    %v1659 = vmul.f32 %v1444, %v1658
    %v1660 = vrcp.pop %v1600
    %v1661 = vmul.f32 %v1445, %v1660
    %v1662 = vrcp.pop %v1605
    %v1663 = vmul.f32 %v1446, %v1662
    %v1664 = vrcp.pop %v1610
    %v1665 = vmul.f32 %v1447, %v1664
    %v1666 = vrcp.pop %v1615
    %v1667 = vmul.f32 %v1448, %v1666
    %v1668 = vrcp.pop %v1620
    %v1669 = vmul.f32 %v1449, %v1668
    %v1670 = vrcp.pop %v1625
    %v1671 = vmul.f32 %v1450, %v1670
    %v1672 = vrcp.pop %v1630
    %v1673 = vmul.f32 %v1451, %v1672
    %v1674 = vrcp.pop %v1635
    %v1675 = vmul.f32 %v1452, %v1674
    %v1676 = vrcp.pop %v1640
    %v1677 = vmul.f32 %v1453, %v1676
    %v1678 = vrcp.pop %v1645
    %v1679 = vmul.f32 %v1454, %v1678
    %vm1680 = vcmp.gt.f32.partialorder %v1649, 0.0
    %vm1681 = vcmp.gt.f32.partialorder %v1651, 0.0
    %vm1682 = vcmp.gt.f32.partialorder %v1653, 0.0
    %vm1683 = vcmp.gt.f32.partialorder %v1655, 0.0
    %vm1684 = vcmp.gt.f32.partialorder %v1657, 0.0
    %vm1685 = vcmp.gt.f32.partialorder %v1659, 0.0
    %vm1686 = vcmp.gt.f32.partialorder %v1661, 0.0
    %vm1687 = vcmp.gt.f32.partialorder %v1663, 0.0
    %vm1688 = vcmp.gt.f32.partialorder %v1665, 0.0
    %vm1689 = vcmp.gt.f32.partialorder %v1667, 0.0
    %vm1690 = vcmp.gt.f32.partialorder %v1669, 0.0
    %vm1691 = vcmp.gt.f32.partialorder %v1671, 0.0
    %vm1692 = vcmp.gt.f32.partialorder %v1673, 0.0
    %vm1693 = vcmp.gt.f32.partialorder %v1675, 0.0
    %vm1694 = vcmp.gt.f32.partialorder %v1677, 0.0
    %vm1695 = vcmp.gt.f32.partialorder %v1679, 0.0
    %v1696 = vmin.f32 %v1649, 0.0
    %v1697 = vmin.f32 %v1651, 0.0
    %v1698 = vmin.f32 %v1653, 0.0
    %v1699 = vmin.f32 %v1655, 0.0
    %v1700 = vmin.f32 %v1657, 0.0
    %v1701 = vmin.f32 %v1659, 0.0
    %v1702 = vmin.f32 %v1661, 0.0
    %v1703 = vmin.f32 %v1663, 0.0
    %v1704 = vmin.f32 %v1665, 0.0
    %v1705 = vmin.f32 %v1667, 0.0
    %v1706 = vmin.f32 %v1669, 0.0
    %v1707 = vmin.f32 %v1671, 0.0
    %v1708 = vmin.f32 %v1673, 0.0
    %v1709 = vmin.f32 %v1675, 0.0
    %v1710 = vmin.f32 %v1677, 0.0
    %v1711 = vmin.f32 %v1679, 0.0
    %v1712 = vmul.f32 %v1696, 1.442695
    %v1713 = vpow.pop %v1712
    %v1714 = vmul.f32 %v1697, 1.442695
    %v1715 = vpow.pop %v1714
    %v1716 = vmul.f32 %v1698, 1.442695
    %v1717 = vpow.pop %v1716
    %v1718 = vmul.f32 %v1699, 1.442695
    %v1719 = vpow.pop %v1718
    %v1720 = vmul.f32 %v1700, 1.442695
    %v1721 = vpow.pop %v1720
    %v1722 = vmul.f32 %v1701, 1.442695
    %v1723 = vpow.pop %v1722
    %v1724 = vmul.f32 %v1702, 1.442695
    %v1725 = vpow.pop %v1724
    %v1726 = vmul.f32 %v1703, 1.442695
    %v1727 = vpow.pop %v1726
    %v1728 = vmul.f32 %v1704, 1.442695
    %v1729 = vpow.pop %v1728
    %v1730 = vmul.f32 %v1705, 1.442695
    %v1731 = vpow.pop %v1730
    %v1732 = vmul.f32 %v1706, 1.442695
    %v1733 = vpow.pop %v1732
    %v1734 = vmul.f32 %v1707, 1.442695
    %v1735 = vpow.pop %v1734
    %v1736 = vmul.f32 %v1708, 1.442695
    %v1737 = vpow.pop %v1736
    %v1738 = vmul.f32 %v1709, 1.442695
    %v1739 = vpow.pop %v1738
    %v1740 = vmul.f32 %v1710, 1.442695
    %v1741 = vpow.pop %v1740
    %v1742 = vmul.f32 %v1711, 1.442695
    %v1743 = vpow.pop %v1742
    %v1744 = vsub.f32 %v1713, 1.0
    %v1745 = vsub.f32 %v1715, 1.0
    %v1746 = vsub.f32 %v1717, 1.0
    %v1747 = vsub.f32 %v1719, 1.0
    %v1748 = vsub.f32 %v1721, 1.0
    %v1749 = vsub.f32 %v1723, 1.0
    %v1750 = vsub.f32 %v1725, 1.0
    %v1751 = vsub.f32 %v1727, 1.0
    %v1752 = vsub.f32 %v1729, 1.0
    %v1753 = vsub.f32 %v1731, 1.0
    %v1754 = vsub.f32 %v1733, 1.0
    %v1755 = vsub.f32 %v1735, 1.0
    %v1756 = vsub.f32 %v1737, 1.0
    %v1757 = vsub.f32 %v1739, 1.0
    %v1758 = vsub.f32 %v1741, 1.0
    %v1759 = vsub.f32 %v1743, 1.0
    %v1760 = vsel %vm1680, %v1649, %v1744
    %v1761 = vsel %vm1681, %v1651, %v1745
    %v1762 = vsel %vm1682, %v1653, %v1746
    %v1763 = vsel %vm1683, %v1655, %v1747
    %v1764 = vsel %vm1684, %v1657, %v1748
    %v1765 = vsel %vm1685, %v1659, %v1749
    %v1766 = vsel %vm1686, %v1661, %v1750
    %v1767 = vsel %vm1687, %v1663, %v1751
    %v1768 = vsel %vm1688, %v1665, %v1752
    %v1769 = vsel %vm1689, %v1667, %v1753
    %v1770 = vsel %vm1690, %v1669, %v1754
    %v1771 = vsel %vm1691, %v1671, %v1755
    %v1772 = vsel %vm1692, %v1673, %v1756
    %v1773 = vsel %vm1693, %v1675, %v1757
    %v1774 = vsel %vm1694, %v1677, %v1758
    %v1775 = vsel %vm1695, %v1679, %v1759
    %1776 = vst [vmem:[%s5] sm:$0xff] %v1760
    %1777 = vst [vmem:[%s5 + $0x8] sm:$0xff] %v1761
    %1778 = vst [vmem:[%s5 + $0x10] sm:$0xff] %v1762
    %1779 = vst [vmem:[%s5 + $0x18] sm:$0xff] %v1763
    %1780 = vst [vmem:[%s5 + $0x20] sm:$0xff] %v1764
    %1781 = vst [vmem:[%s5 + $0x28] sm:$0xff] %v1765
    %1782 = vst [vmem:[%s5 + $0x30] sm:$0xff] %v1766
    %1783 = vst [vmem:[%s5 + $0x38] sm:$0xff] %v1767
    %1784 = vst [vmem:[%s5 + $0x40] sm:$0xff] %v1768
    %1785 = vst [vmem:[%s5 + $0x48] sm:$0xff] %v1769
    %1786 = vst [vmem:[%s5 + $0x50] sm:$0xff] %v1770
    %1787 = vst [vmem:[%s5 + $0x58] sm:$0xff] %v1771
    %1788 = vst [vmem:[%s5 + $0x60] sm:$0xff] %v1772
    %1789 = vst [vmem:[%s5 + $0x68] sm:$0xff] %v1773
    %1790 = vst [vmem:[%s5 + $0x70] sm:$0xff] %v1774
    %1791 = vst [vmem:[%s5 + $0x78] sm:$0xff] %v1775
  $region29: #{kbgat_forward.3} parent=0 // pred_fallthru
    _
  // Predicated region
  $region30: #{kbgat_forward.3} parent=0 // pred_check
    _
  $region31: #{kbgat_forward.3} parent=0 // pred_check_branch
    %1793 = sbr.rel (0) target = $region33
  $region32: #{kbgat_forward.3} parent=0 // pred_region
    _
  $region33: #{kbgat_forward.3} parent=0 // pred_fallthru
    _
  // Predicated region
  $region34: #{kbgat_forward.3} parent=0 // pred_check
    _
  $region35: #{kbgat_forward.3} parent=0 // pred_check_branch
    %1795 = sbr.rel (0) target = $region37
  $region36: #{kbgat_forward.3} parent=0 // pred_region
    _
  $region37: #{kbgat_forward.3} parent=0 // pred_fallthru
    _

// kernel: kbgat_forward.4
$region0: #{kbgat_forward.4}
  #allocation0 [shape = 'u32[]', space=smem, size = 0x4, offset = 0x4, fixed_abs, tag = 'smem constant byte address 0x4 - core index']
  #allocation1 [shape = 'u32[144,128]{1,0:T(1,128)}', space=vmem, size = 0x12000, scoped, tag = 'internal scratch']
  #allocation2 [shape = 'f32[1,1]{1,0:T(1,128)}', space=vmem, size = 0x200, scoped, tag = 'scratch operand']
  #allocation3 [shape = 'f32[128,1]{1,0:T(8,128)}', space=vmem, size = 0x10000, scoped, tag = 'scratch operand']
  %s0 = inlined_call_operand.vmem [shape: s32[128,1], index: 0, kind: input, shape index: {}]
  %s1 = inlined_call_operand.vmem [shape: f32[128,128], index: 1, kind: input, shape index: {}]
  %s2 = inlined_call_operand.vmem [shape: f32[128,128], index: 2, kind: input, shape index: {}]
  %s3 = inlined_call_operand.vmem [shape: f32[128,1], index: 3, kind: input, shape index: {}]
  %s4 = inlined_call_operand.vmem [shape: f32[1,128], index: 4, kind: input, shape index: {}]
  %s5 = inlined_call_operand.vmem [shape: f32[128,128], index: 5, kind: output, shape index: {}]
  %s6 = sld [smem:[#allocation0]]
  $region38: #{kbgat_forward.4} parent=0
    _
  %s8 = ssub.s32 1, %s6
  %s9 = scalar_select 0, %s8, %s6
  // Predicated region
  $region2: #{kbgat_forward.4} parent=0 // pred_check
    _
  $region3: #{kbgat_forward.4} parent=0 // pred_check_branch
    %11 = sbr.rel (0) target = $region5
  $region4: #{kbgat_forward.4} parent=0 // pred_region
    _
  $region5: #{kbgat_forward.4} parent=0 // pred_fallthru
    _
  // Predicated region
  $region6: #{kbgat_forward.4} parent=0 // pred_check
    _
  $region7: #{kbgat_forward.4} parent=0 // pred_check_branch
    %13 = sbr.rel (0) target = $region9
  $region8: #{kbgat_forward.4} parent=0 // pred_region
    _
  $region9: #{kbgat_forward.4} parent=0 // pred_fallthru
    _
  // Predicated region
  $region10: #{kbgat_forward.4} parent=0 // pred_check
    _
  $region11: #{kbgat_forward.4} parent=0 // pred_check_branch
    %15 = sbr.rel (0) target = $region13
  $region12: #{kbgat_forward.4} parent=0 // pred_region
    _
  $region13: #{kbgat_forward.4} parent=0 // pred_fallthru
    _
  // Predicated region
  $region14: #{kbgat_forward.4} parent=0 // pred_check
    _
  $region15: #{kbgat_forward.4} parent=0 // pred_check_branch
    %17 = sbr.rel (0) target = $region17
  $region16: #{kbgat_forward.4} parent=0 // pred_region
    _
  $region17: #{kbgat_forward.4} parent=0 // pred_fallthru
    _
  // Predicated region
  $region18: #{kbgat_forward.4} parent=0 // pred_check
    _
  $region19: #{kbgat_forward.4} parent=0 // pred_check_branch
    %19 = sbr.rel (0) target = $region21
  $region20: #{kbgat_forward.4} parent=0 // pred_region
    _
  $region21: #{kbgat_forward.4} parent=0 // pred_fallthru
    _
  %p20 = scmp.eq.s32.totalorder 0, 0
  // Predicated region
  $region22: #{kbgat_forward.4} parent=0 // pred_check
    %p21 = pneg %p20
  $region23: #{kbgat_forward.4} parent=0 // pred_check_branch
    %23 = sbr.rel (%p21) target = $region25
  $region24: #{kbgat_forward.4} parent=0 // pred_region
    %vm24 = vcmask 0
    %25 = vst.msk [vmem:[#allocation2] sm:$0x1] %vm24, -1e+30
    %vm26 = vcmask 7168
    %27 = vst.msk [vmem:[#allocation3] sm:$0xff] %vm26, 0.0
    %28 = vst.msk [vmem:[#allocation3 + $0x8] sm:$0xff] %vm26, 0.0
    %29 = vst.msk [vmem:[#allocation3 + $0x10] sm:$0xff] %vm26, 0.0
    %30 = vst.msk [vmem:[#allocation3 + $0x18] sm:$0xff] %vm26, 0.0
    %31 = vst.msk [vmem:[#allocation3 + $0x20] sm:$0xff] %vm26, 0.0
    %32 = vst.msk [vmem:[#allocation3 + $0x28] sm:$0xff] %vm26, 0.0
    %33 = vst.msk [vmem:[#allocation3 + $0x30] sm:$0xff] %vm26, 0.0
    %34 = vst.msk [vmem:[#allocation3 + $0x38] sm:$0xff] %vm26, 0.0
    %35 = vst.msk [vmem:[#allocation3 + $0x40] sm:$0xff] %vm26, 0.0
    %36 = vst.msk [vmem:[#allocation3 + $0x48] sm:$0xff] %vm26, 0.0
    %37 = vst.msk [vmem:[#allocation3 + $0x50] sm:$0xff] %vm26, 0.0
    %38 = vst.msk [vmem:[#allocation3 + $0x58] sm:$0xff] %vm26, 0.0
    %39 = vst.msk [vmem:[#allocation3 + $0x60] sm:$0xff] %vm26, 0.0
    %40 = vst.msk [vmem:[#allocation3 + $0x68] sm:$0xff] %vm26, 0.0
    %41 = vst.msk [vmem:[#allocation3 + $0x70] sm:$0xff] %vm26, 0.0
    %42 = vst.msk [vmem:[#allocation3 + $0x78] sm:$0xff] %vm26, 0.0
    %43 = vst [vmem:[%s5] sm:$0xff] 0.0
    %44 = vst [vmem:[%s5 + $0x8] sm:$0xff] 0.0
    %45 = vst [vmem:[%s5 + $0x10] sm:$0xff] 0.0
    %46 = vst [vmem:[%s5 + $0x18] sm:$0xff] 0.0
    %47 = vst [vmem:[%s5 + $0x20] sm:$0xff] 0.0
    %48 = vst [vmem:[%s5 + $0x28] sm:$0xff] 0.0
    %49 = vst [vmem:[%s5 + $0x30] sm:$0xff] 0.0
    %50 = vst [vmem:[%s5 + $0x38] sm:$0xff] 0.0
    %51 = vst [vmem:[%s5 + $0x40] sm:$0xff] 0.0
    %52 = vst [vmem:[%s5 + $0x48] sm:$0xff] 0.0
    %53 = vst [vmem:[%s5 + $0x50] sm:$0xff] 0.0
    %54 = vst [vmem:[%s5 + $0x58] sm:$0xff] 0.0
    %55 = vst [vmem:[%s5 + $0x60] sm:$0xff] 0.0
    %56 = vst [vmem:[%s5 + $0x68] sm:$0xff] 0.0
    %57 = vst [vmem:[%s5 + $0x70] sm:$0xff] 0.0
    %58 = vst [vmem:[%s5 + $0x78] sm:$0xff] 0.0
  $region25: #{kbgat_forward.4} parent=0 // pred_fallthru
    _
  %v59 = vld [vmem:[%s0] sm:$0xff]
  %v60 = vld [vmem:[%s0 + $0x8] sm:$0xff]
  %v61 = vld [vmem:[%s0 + $0x10] sm:$0xff]
  %v62 = vld [vmem:[%s0 + $0x18] sm:$0xff]
  %v63 = vld [vmem:[%s0 + $0x20] sm:$0xff]
  %v64 = vld [vmem:[%s0 + $0x28] sm:$0xff]
  %v65 = vld [vmem:[%s0 + $0x30] sm:$0xff]
  %v66 = vld [vmem:[%s0 + $0x38] sm:$0xff]
  %v67 = vld [vmem:[%s0 + $0x40] sm:$0xff]
  %v68 = vld [vmem:[%s0 + $0x48] sm:$0xff]
  %v69 = vld [vmem:[%s0 + $0x50] sm:$0xff]
  %v70 = vld [vmem:[%s0 + $0x58] sm:$0xff]
  %v71 = vld [vmem:[%s0 + $0x60] sm:$0xff]
  %v72 = vld [vmem:[%s0 + $0x68] sm:$0xff]
  %v73 = vld [vmem:[%s0 + $0x70] sm:$0xff]
  %v74 = vld [vmem:[%s0 + $0x78] sm:$0xff]
  %v75 = vlaneseq
  %v76 = vand.u32 %v75, 127
  %77 = vset.pattern.permute.xlu0 0
  %78 = vperm.xlu0 %77, %v59
  %v79 = vpop.permute.xlu0 %78
  %80 = vset.pattern.permute.xlu0 0
  %81 = vperm.xlu0 %80, %v60
  %v82 = vpop.permute.xlu0 %81
  %83 = vset.pattern.permute.xlu0 0
  %84 = vperm.xlu0 %83, %v61
  %v85 = vpop.permute.xlu0 %84
  %86 = vset.pattern.permute.xlu0 0
  %87 = vperm.xlu0 %86, %v62
  %v88 = vpop.permute.xlu0 %87
  %89 = vset.pattern.permute.xlu0 0
  %90 = vperm.xlu0 %89, %v63
  %v91 = vpop.permute.xlu0 %90
  %92 = vset.pattern.permute.xlu0 0
  %93 = vperm.xlu0 %92, %v64
  %v94 = vpop.permute.xlu0 %93
  %95 = vset.pattern.permute.xlu0 0
  %96 = vperm.xlu0 %95, %v65
  %v97 = vpop.permute.xlu0 %96
  %98 = vset.pattern.permute.xlu0 0
  %99 = vperm.xlu0 %98, %v66
  %v100 = vpop.permute.xlu0 %99
  %101 = vset.pattern.permute.xlu0 0
  %102 = vperm.xlu0 %101, %v67
  %v103 = vpop.permute.xlu0 %102
  %104 = vset.pattern.permute.xlu0 0
  %105 = vperm.xlu0 %104, %v68
  %v106 = vpop.permute.xlu0 %105
  %107 = vset.pattern.permute.xlu0 0
  %108 = vperm.xlu0 %107, %v69
  %v109 = vpop.permute.xlu0 %108
  %110 = vset.pattern.permute.xlu0 0
  %111 = vperm.xlu0 %110, %v70
  %v112 = vpop.permute.xlu0 %111
  %113 = vset.pattern.permute.xlu0 0
  %114 = vperm.xlu0 %113, %v71
  %v115 = vpop.permute.xlu0 %114
  %116 = vset.pattern.permute.xlu0 0
  %117 = vperm.xlu0 %116, %v72
  %v118 = vpop.permute.xlu0 %117
  %119 = vset.pattern.permute.xlu0 0
  %120 = vperm.xlu0 %119, %v73
  %v121 = vpop.permute.xlu0 %120
  %122 = vset.pattern.permute.xlu0 0
  %123 = vperm.xlu0 %122, %v74
  %v124 = vpop.permute.xlu0 %123
  %vm125 = vcmp.eq.s32.totalorder %v76, %v79
  %vm126 = vcmp.eq.s32.totalorder %v76, %v82
  %vm127 = vcmp.eq.s32.totalorder %v76, %v85
  %vm128 = vcmp.eq.s32.totalorder %v76, %v88
  %vm129 = vcmp.eq.s32.totalorder %v76, %v91
  %vm130 = vcmp.eq.s32.totalorder %v76, %v94
  %vm131 = vcmp.eq.s32.totalorder %v76, %v97
  %vm132 = vcmp.eq.s32.totalorder %v76, %v100
  %vm133 = vcmp.eq.s32.totalorder %v76, %v103
  %vm134 = vcmp.eq.s32.totalorder %v76, %v106
  %vm135 = vcmp.eq.s32.totalorder %v76, %v109
  %vm136 = vcmp.eq.s32.totalorder %v76, %v112
  %vm137 = vcmp.eq.s32.totalorder %v76, %v115
  %vm138 = vcmp.eq.s32.totalorder %v76, %v118
  %vm139 = vcmp.eq.s32.totalorder %v76, %v121
  %vm140 = vcmp.eq.s32.totalorder %v76, %v124
  %v141 = vsel %vm125, 1, 0
  %v142 = vsel %vm126, 1, 0
  %v143 = vsel %vm127, 1, 0
  %v144 = vsel %vm128, 1, 0
  %v145 = vsel %vm129, 1, 0
  %v146 = vsel %vm130, 1, 0
  %v147 = vsel %vm131, 1, 0
  %v148 = vsel %vm132, 1, 0
  %v149 = vsel %vm133, 1, 0
  %v150 = vsel %vm134, 1, 0
  %v151 = vsel %vm135, 1, 0
  %v152 = vsel %vm136, 1, 0
  %v153 = vsel %vm137, 1, 0
  %v154 = vsel %vm138, 1, 0
  %v155 = vsel %vm139, 1, 0
  %v156 = vsel %vm140, 1, 0
  %v157 = vcvt.s32.f32 %v141
  %v158 = vcvt.s32.f32 %v142
  %v159 = vcvt.s32.f32 %v143
  %v160 = vcvt.s32.f32 %v144
  %v161 = vcvt.s32.f32 %v145
  %v162 = vcvt.s32.f32 %v146
  %v163 = vcvt.s32.f32 %v147
  %v164 = vcvt.s32.f32 %v148
  %v165 = vcvt.s32.f32 %v149
  %v166 = vcvt.s32.f32 %v150
  %v167 = vcvt.s32.f32 %v151
  %v168 = vcvt.s32.f32 %v152
  %v169 = vcvt.s32.f32 %v153
  %v170 = vcvt.s32.f32 %v154
  %v171 = vcvt.s32.f32 %v155
  %v172 = vcvt.s32.f32 %v156
  %v173 = vld [vmem:[%s1] sm:$0xff]
  %v174 = vld [vmem:[%s1 + $0x8] sm:$0xff]
  %v175 = vld [vmem:[%s1 + $0x10] sm:$0xff]
  %v176 = vld [vmem:[%s1 + $0x18] sm:$0xff]
  %v177 = vld [vmem:[%s1 + $0x20] sm:$0xff]
  %v178 = vld [vmem:[%s1 + $0x28] sm:$0xff]
  %v179 = vld [vmem:[%s1 + $0x30] sm:$0xff]
  %v180 = vld [vmem:[%s1 + $0x38] sm:$0xff]
  %v181 = vld [vmem:[%s1 + $0x40] sm:$0xff]
  %v182 = vld [vmem:[%s1 + $0x48] sm:$0xff]
  %v183 = vld [vmem:[%s1 + $0x50] sm:$0xff]
  %v184 = vld [vmem:[%s1 + $0x58] sm:$0xff]
  %v185 = vld [vmem:[%s1 + $0x60] sm:$0xff]
  %v186 = vld [vmem:[%s1 + $0x68] sm:$0xff]
  %v187 = vld [vmem:[%s1 + $0x70] sm:$0xff]
  %v188 = vld [vmem:[%s1 + $0x78] sm:$0xff]
  %v189 = vld [vmem:[%s2] sm:$0xff]
  %v190 = vld [vmem:[%s2 + $0x8] sm:$0xff]
  %v191 = vld [vmem:[%s2 + $0x10] sm:$0xff]
  %v192 = vld [vmem:[%s2 + $0x18] sm:$0xff]
  %v193 = vld [vmem:[%s2 + $0x20] sm:$0xff]
  %v194 = vld [vmem:[%s2 + $0x28] sm:$0xff]
  %v195 = vld [vmem:[%s2 + $0x30] sm:$0xff]
  %v196 = vld [vmem:[%s2 + $0x38] sm:$0xff]
  %v197 = vld [vmem:[%s2 + $0x40] sm:$0xff]
  %v198 = vld [vmem:[%s2 + $0x48] sm:$0xff]
  %v199 = vld [vmem:[%s2 + $0x50] sm:$0xff]
  %v200 = vld [vmem:[%s2 + $0x58] sm:$0xff]
  %v201 = vld [vmem:[%s2 + $0x60] sm:$0xff]
  %v202 = vld [vmem:[%s2 + $0x68] sm:$0xff]
  %v203 = vld [vmem:[%s2 + $0x70] sm:$0xff]
  %v204 = vld [vmem:[%s2 + $0x78] sm:$0xff]
  %205 = vmatprep.subr.mxu0 0.0
  %206 = vmatpush1.msra.mxu0 %v204
  %207 = vmatprep.subr.mxu0 0.0
  %208 = vmatpush1.msra.mxu0 %v203
  %209 = vmatprep.subr.mxu0 0.0
  %210 = vmatpush1.msra.mxu0 %v202
  %211 = vmatprep.subr.mxu0 0.0
  %212 = vmatpush1.msra.mxu0 %v201
  %213 = vmatprep.subr.mxu0 0.0
  %214 = vmatpush1.msra.mxu0 %v200
  %215 = vmatprep.subr.mxu0 0.0
  %216 = vmatpush1.msra.mxu0 %v199
  %217 = vmatprep.subr.mxu0 0.0
  %218 = vmatpush1.msra.mxu0 %v198
  %219 = vmatprep.subr.mxu0 0.0
  %220 = vmatpush1.msra.mxu0 %v197
  %221 = vmatprep.subr.mxu0 0.0
  %222 = vmatpush1.msra.mxu0 %v196
  %223 = vmatprep.subr.mxu0 0.0
  %224 = vmatpush1.msra.mxu0 %v195
  %225 = vmatprep.subr.mxu0 0.0
  %226 = vmatpush1.msra.mxu0 %v194
  %227 = vmatprep.subr.mxu0 0.0
  %228 = vmatpush1.msra.mxu0 %v193
  %229 = vmatprep.subr.mxu0 0.0
  %230 = vmatpush1.msra.mxu0 %v192
  %231 = vmatprep.subr.mxu0 0.0
  %232 = vmatpush1.msra.mxu0 %v191
  %233 = vmatprep.subr.mxu0 0.0
  %234 = vmatpush1.msra.mxu0 %v190
  %235 = vmatprep.subr.mxu0 0.0
  %236 = vmatpush1.msra.mxu0 %v189
  %237 = vmatprep.subr.mxu0 0.0
  %238 = vmatpush2.msra.mxu0 0.0
  %239 = vmatprep.subr.mxu0 0.0
  %240 = vmatpush2.msra.mxu0 0.0
  %241 = vmatprep.subr.mxu0 0.0
  %242 = vmatpush2.msra.mxu0 0.0
  %243 = vmatprep.subr.mxu0 0.0
  %244 = vmatpush2.msra.mxu0 0.0
  %245 = vmatprep.subr.mxu0 0.0
  %246 = vmatpush2.msra.mxu0 0.0
  %247 = vmatprep.subr.mxu0 0.0
  %248 = vmatpush2.msra.mxu0 0.0
  %249 = vmatprep.subr.mxu0 0.0
  %250 = vmatpush2.msra.mxu0 0.0
  %251 = vmatprep.subr.mxu0 0.0
  %252 = vmatpush2.msra.mxu0 0.0
  %253 = vmatprep.subr.mxu0 0.0
  %254 = vmatpush2.msra.mxu0 0.0
  %255 = vmatprep.subr.mxu0 0.0
  %256 = vmatpush2.msra.mxu0 0.0
  %257 = vmatprep.subr.mxu0 0.0
  %258 = vmatpush2.msra.mxu0 0.0
  %259 = vmatprep.subr.mxu0 0.0
  %260 = vmatpush2.msra.mxu0 0.0
  %261 = vmatprep.subr.mxu0 0.0
  %262 = vmatpush2.msra.mxu0 0.0
  %263 = vmatprep.subr.mxu0 0.0
  %264 = vmatpush2.msra.mxu0 0.0
  %265 = vmatprep.subr.mxu0 0.0
  %266 = vmatpush2.msra.mxu0 0.0
  %267 = vmatprep.subr.mxu0 0.0
  %268 = vmatpush2.msra.mxu0 0.0
  %269 = vmatprep.mubr.f32.mxu0 0.0
  %270 = vmatmul.mubr.f32.gmra.mxu0 %v173
  %v271 = vpop.f32.mrf.mxu0
  %v272 = vadd.f32 0.0, %v271
  %v273 = vpop.f32.mrf.mxu0
  %274 = vmatprep.mubr.f32.mxu0 0.0
  %275 = vmatmul.mubr.f32.gmra.mxu0 %v174
  %v276 = vpop.f32.mrf.mxu0
  %v277 = vadd.f32 0.0, %v276
  %v278 = vpop.f32.mrf.mxu0
  %279 = vmatprep.mubr.f32.mxu0 0.0
  %280 = vmatmul.mubr.f32.gmra.mxu0 %v175
  %v281 = vpop.f32.mrf.mxu0
  %v282 = vadd.f32 0.0, %v281
  %v283 = vpop.f32.mrf.mxu0
  %284 = vmatprep.mubr.f32.mxu0 0.0
  %285 = vmatmul.mubr.f32.gmra.mxu0 %v176
  %v286 = vpop.f32.mrf.mxu0
  %v287 = vadd.f32 0.0, %v286
  %v288 = vpop.f32.mrf.mxu0
  %289 = vmatprep.mubr.f32.mxu0 0.0
  %290 = vmatmul.mubr.f32.gmra.mxu0 %v177
  %v291 = vpop.f32.mrf.mxu0
  %v292 = vadd.f32 0.0, %v291
  %v293 = vpop.f32.mrf.mxu0
  %294 = vmatprep.mubr.f32.mxu0 0.0
  %295 = vmatmul.mubr.f32.gmra.mxu0 %v178
  %v296 = vpop.f32.mrf.mxu0
  %v297 = vadd.f32 0.0, %v296
  %v298 = vpop.f32.mrf.mxu0
  %299 = vmatprep.mubr.f32.mxu0 0.0
  %300 = vmatmul.mubr.f32.gmra.mxu0 %v179
  %v301 = vpop.f32.mrf.mxu0
  %v302 = vadd.f32 0.0, %v301
  %v303 = vpop.f32.mrf.mxu0
  %304 = vmatprep.mubr.f32.mxu0 0.0
  %305 = vmatmul.mubr.f32.gmra.mxu0 %v180
  %v306 = vpop.f32.mrf.mxu0
  %v307 = vadd.f32 0.0, %v306
  %v308 = vpop.f32.mrf.mxu0
  %309 = vmatprep.mubr.f32.mxu0 0.0
  %310 = vmatmul.mubr.f32.gmra.mxu0 %v181
  %v311 = vpop.f32.mrf.mxu0
  %v312 = vadd.f32 0.0, %v311
  %v313 = vpop.f32.mrf.mxu0
  %314 = vmatprep.mubr.f32.mxu0 0.0
  %315 = vmatmul.mubr.f32.gmra.mxu0 %v182
  %v316 = vpop.f32.mrf.mxu0
  %v317 = vadd.f32 0.0, %v316
  %v318 = vpop.f32.mrf.mxu0
  %319 = vmatprep.mubr.f32.mxu0 0.0
  %320 = vmatmul.mubr.f32.gmra.mxu0 %v183
  %v321 = vpop.f32.mrf.mxu0
  %v322 = vadd.f32 0.0, %v321
  %v323 = vpop.f32.mrf.mxu0
  %324 = vmatprep.mubr.f32.mxu0 0.0
  %325 = vmatmul.mubr.f32.gmra.mxu0 %v184
  %v326 = vpop.f32.mrf.mxu0
  %v327 = vadd.f32 0.0, %v326
  %v328 = vpop.f32.mrf.mxu0
  %329 = vmatprep.mubr.f32.mxu0 0.0
  %330 = vmatmul.mubr.f32.gmra.mxu0 %v185
  %v331 = vpop.f32.mrf.mxu0
  %v332 = vadd.f32 0.0, %v331
  %v333 = vpop.f32.mrf.mxu0
  %334 = vmatprep.mubr.f32.mxu0 0.0
  %335 = vmatmul.mubr.f32.gmra.mxu0 %v186
  %v336 = vpop.f32.mrf.mxu0
  %v337 = vadd.f32 0.0, %v336
  %v338 = vpop.f32.mrf.mxu0
  %339 = vmatprep.mubr.f32.mxu0 0.0
  %340 = vmatmul.mubr.f32.gmra.mxu0 %v187
  %v341 = vpop.f32.mrf.mxu0
  %v342 = vadd.f32 0.0, %v341
  %v343 = vpop.f32.mrf.mxu0
  %344 = vmatprep.mubr.f32.mxu0 0.0
  %345 = vmatmul.mubr.f32.gmra.mxu0 %v188
  %v346 = vpop.f32.mrf.mxu0
  %v347 = vadd.f32 0.0, %v346
  %v348 = vpop.f32.mrf.mxu0
  %349 = vdwg.mxu0
  %v350 = vld [vmem:[%s3] sm:$0xff]
  %v351 = vld [vmem:[%s3 + $0x8] sm:$0xff]
  %v352 = vld [vmem:[%s3 + $0x10] sm:$0xff]
  %v353 = vld [vmem:[%s3 + $0x18] sm:$0xff]
  %v354 = vld [vmem:[%s3 + $0x20] sm:$0xff]
  %v355 = vld [vmem:[%s3 + $0x28] sm:$0xff]
  %v356 = vld [vmem:[%s3 + $0x30] sm:$0xff]
  %v357 = vld [vmem:[%s3 + $0x38] sm:$0xff]
  %v358 = vld [vmem:[%s3 + $0x40] sm:$0xff]
  %v359 = vld [vmem:[%s3 + $0x48] sm:$0xff]
  %v360 = vld [vmem:[%s3 + $0x50] sm:$0xff]
  %v361 = vld [vmem:[%s3 + $0x58] sm:$0xff]
  %v362 = vld [vmem:[%s3 + $0x60] sm:$0xff]
  %v363 = vld [vmem:[%s3 + $0x68] sm:$0xff]
  %v364 = vld [vmem:[%s3 + $0x70] sm:$0xff]
  %v365 = vld [vmem:[%s3 + $0x78] sm:$0xff]
  %366 = vmatprep.subr.mxu0 0.0
  %367 = vmatpush1.msra.mxu0 %v365
  %368 = vmatprep.subr.mxu0 0.0
  %369 = vmatpush1.msra.mxu0 %v364
  %370 = vmatprep.subr.mxu0 0.0
  %371 = vmatpush1.msra.mxu0 %v363
  %372 = vmatprep.subr.mxu0 0.0
  %373 = vmatpush1.msra.mxu0 %v362
  %374 = vmatprep.subr.mxu0 0.0
  %375 = vmatpush1.msra.mxu0 %v361
  %376 = vmatprep.subr.mxu0 0.0
  %377 = vmatpush1.msra.mxu0 %v360
  %378 = vmatprep.subr.mxu0 0.0
  %379 = vmatpush1.msra.mxu0 %v359
  %380 = vmatprep.subr.mxu0 0.0
  %381 = vmatpush1.msra.mxu0 %v358
  %382 = vmatprep.subr.mxu0 0.0
  %383 = vmatpush1.msra.mxu0 %v357
  %384 = vmatprep.subr.mxu0 0.0
  %385 = vmatpush1.msra.mxu0 %v356
  %386 = vmatprep.subr.mxu0 0.0
  %387 = vmatpush1.msra.mxu0 %v355
  %388 = vmatprep.subr.mxu0 0.0
  %389 = vmatpush1.msra.mxu0 %v354
  %390 = vmatprep.subr.mxu0 0.0
  %391 = vmatpush1.msra.mxu0 %v353
  %392 = vmatprep.subr.mxu0 0.0
  %393 = vmatpush1.msra.mxu0 %v352
  %394 = vmatprep.subr.mxu0 0.0
  %395 = vmatpush1.msra.mxu0 %v351
  %396 = vmatprep.subr.mxu0 0.0
  %397 = vmatpush1.msra.mxu0 %v350
  %398 = vmatprep.subr.mxu0 0.0
  %399 = vmatpush2.msra.mxu0 0.0
  %400 = vmatprep.subr.mxu0 0.0
  %401 = vmatpush2.msra.mxu0 0.0
  %402 = vmatprep.subr.mxu0 0.0
  %403 = vmatpush2.msra.mxu0 0.0
  %404 = vmatprep.subr.mxu0 0.0
  %405 = vmatpush2.msra.mxu0 0.0
  %406 = vmatprep.subr.mxu0 0.0
  %407 = vmatpush2.msra.mxu0 0.0
  %408 = vmatprep.subr.mxu0 0.0
  %409 = vmatpush2.msra.mxu0 0.0
  %410 = vmatprep.subr.mxu0 0.0
  %411 = vmatpush2.msra.mxu0 0.0
  %412 = vmatprep.subr.mxu0 0.0
  %413 = vmatpush2.msra.mxu0 0.0
  %414 = vmatprep.subr.mxu0 0.0
  %415 = vmatpush2.msra.mxu0 0.0
  %416 = vmatprep.subr.mxu0 0.0
  %417 = vmatpush2.msra.mxu0 0.0
  %418 = vmatprep.subr.mxu0 0.0
  %419 = vmatpush2.msra.mxu0 0.0
  %420 = vmatprep.subr.mxu0 0.0
  %421 = vmatpush2.msra.mxu0 0.0
  %422 = vmatprep.subr.mxu0 0.0
  %423 = vmatpush2.msra.mxu0 0.0
  %424 = vmatprep.subr.mxu0 0.0
  %425 = vmatpush2.msra.mxu0 0.0
  %426 = vmatprep.subr.mxu0 0.0
  %427 = vmatpush2.msra.mxu0 0.0
  %428 = vmatprep.subr.mxu0 0.0
  %429 = vmatpush2.msra.mxu0 0.0
  %430 = vmatprep.mubr.f32.mxu0 0.0
  %431 = vmatmul.mubr.f32.gmra.mxu0 %v272
  %v432 = vpop.f32.mrf.mxu0
  %v433 = vadd.f32 0.0, %v432
  %v434 = vpop.f32.mrf.mxu0
  %435 = vmatprep.mubr.f32.mxu0 0.0
  %436 = vmatmul.mubr.f32.gmra.mxu0 %v277
  %v437 = vpop.f32.mrf.mxu0
  %v438 = vadd.f32 0.0, %v437
  %v439 = vpop.f32.mrf.mxu0
  %440 = vmatprep.mubr.f32.mxu0 0.0
  %441 = vmatmul.mubr.f32.gmra.mxu0 %v282
  %v442 = vpop.f32.mrf.mxu0
  %v443 = vadd.f32 0.0, %v442
  %v444 = vpop.f32.mrf.mxu0
  %445 = vmatprep.mubr.f32.mxu0 0.0
  %446 = vmatmul.mubr.f32.gmra.mxu0 %v287
  %v447 = vpop.f32.mrf.mxu0
  %v448 = vadd.f32 0.0, %v447
  %v449 = vpop.f32.mrf.mxu0
  %450 = vmatprep.mubr.f32.mxu0 0.0
  %451 = vmatmul.mubr.f32.gmra.mxu0 %v292
  %v452 = vpop.f32.mrf.mxu0
  %v453 = vadd.f32 0.0, %v452
  %v454 = vpop.f32.mrf.mxu0
  %455 = vmatprep.mubr.f32.mxu0 0.0
  %456 = vmatmul.mubr.f32.gmra.mxu0 %v297
  %v457 = vpop.f32.mrf.mxu0
  %v458 = vadd.f32 0.0, %v457
  %v459 = vpop.f32.mrf.mxu0
  %460 = vmatprep.mubr.f32.mxu0 0.0
  %461 = vmatmul.mubr.f32.gmra.mxu0 %v302
  %v462 = vpop.f32.mrf.mxu0
  %v463 = vadd.f32 0.0, %v462
  %v464 = vpop.f32.mrf.mxu0
  %465 = vmatprep.mubr.f32.mxu0 0.0
  %466 = vmatmul.mubr.f32.gmra.mxu0 %v307
  %v467 = vpop.f32.mrf.mxu0
  %v468 = vadd.f32 0.0, %v467
  %v469 = vpop.f32.mrf.mxu0
  %470 = vmatprep.mubr.f32.mxu0 0.0
  %471 = vmatmul.mubr.f32.gmra.mxu0 %v312
  %v472 = vpop.f32.mrf.mxu0
  %v473 = vadd.f32 0.0, %v472
  %v474 = vpop.f32.mrf.mxu0
  %475 = vmatprep.mubr.f32.mxu0 0.0
  %476 = vmatmul.mubr.f32.gmra.mxu0 %v317
  %v477 = vpop.f32.mrf.mxu0
  %v478 = vadd.f32 0.0, %v477
  %v479 = vpop.f32.mrf.mxu0
  %480 = vmatprep.mubr.f32.mxu0 0.0
  %481 = vmatmul.mubr.f32.gmra.mxu0 %v322
  %v482 = vpop.f32.mrf.mxu0
  %v483 = vadd.f32 0.0, %v482
  %v484 = vpop.f32.mrf.mxu0
  %485 = vmatprep.mubr.f32.mxu0 0.0
  %486 = vmatmul.mubr.f32.gmra.mxu0 %v327
  %v487 = vpop.f32.mrf.mxu0
  %v488 = vadd.f32 0.0, %v487
  %v489 = vpop.f32.mrf.mxu0
  %490 = vmatprep.mubr.f32.mxu0 0.0
  %491 = vmatmul.mubr.f32.gmra.mxu0 %v332
  %v492 = vpop.f32.mrf.mxu0
  %v493 = vadd.f32 0.0, %v492
  %v494 = vpop.f32.mrf.mxu0
  %495 = vmatprep.mubr.f32.mxu0 0.0
  %496 = vmatmul.mubr.f32.gmra.mxu0 %v337
  %v497 = vpop.f32.mrf.mxu0
  %v498 = vadd.f32 0.0, %v497
  %v499 = vpop.f32.mrf.mxu0
  %500 = vmatprep.mubr.f32.mxu0 0.0
  %501 = vmatmul.mubr.f32.gmra.mxu0 %v342
  %v502 = vpop.f32.mrf.mxu0
  %v503 = vadd.f32 0.0, %v502
  %v504 = vpop.f32.mrf.mxu0
  %505 = vmatprep.mubr.f32.mxu0 0.0
  %506 = vmatmul.mubr.f32.gmra.mxu0 %v347
  %v507 = vpop.f32.mrf.mxu0
  %v508 = vadd.f32 0.0, %v507
  %v509 = vpop.f32.mrf.mxu0
  %510 = vdwg.mxu0
  %vm511 = vcmp.gt.f32.partialorder %v433, 0.0
  %vm512 = vcmp.gt.f32.partialorder %v438, 0.0
  %vm513 = vcmp.gt.f32.partialorder %v443, 0.0
  %vm514 = vcmp.gt.f32.partialorder %v448, 0.0
  %vm515 = vcmp.gt.f32.partialorder %v453, 0.0
  %vm516 = vcmp.gt.f32.partialorder %v458, 0.0
  %vm517 = vcmp.gt.f32.partialorder %v463, 0.0
  %vm518 = vcmp.gt.f32.partialorder %v468, 0.0
  %vm519 = vcmp.gt.f32.partialorder %v473, 0.0
  %vm520 = vcmp.gt.f32.partialorder %v478, 0.0
  %vm521 = vcmp.gt.f32.partialorder %v483, 0.0
  %vm522 = vcmp.gt.f32.partialorder %v488, 0.0
  %vm523 = vcmp.gt.f32.partialorder %v493, 0.0
  %vm524 = vcmp.gt.f32.partialorder %v498, 0.0
  %vm525 = vcmp.gt.f32.partialorder %v503, 0.0
  %vm526 = vcmp.gt.f32.partialorder %v508, 0.0
  %v527 = vmul.f32 %v433, 0.2
  %v528 = vmul.f32 %v438, 0.2
  %v529 = vmul.f32 %v443, 0.2
  %v530 = vmul.f32 %v448, 0.2
  %v531 = vmul.f32 %v453, 0.2
  %v532 = vmul.f32 %v458, 0.2
  %v533 = vmul.f32 %v463, 0.2
  %v534 = vmul.f32 %v468, 0.2
  %v535 = vmul.f32 %v473, 0.2
  %v536 = vmul.f32 %v478, 0.2
  %v537 = vmul.f32 %v483, 0.2
  %v538 = vmul.f32 %v488, 0.2
  %v539 = vmul.f32 %v493, 0.2
  %v540 = vmul.f32 %v498, 0.2
  %v541 = vmul.f32 %v503, 0.2
  %v542 = vmul.f32 %v508, 0.2
  %v543 = vsel %vm511, %v433, %v527
  %v544 = vsel %vm512, %v438, %v528
  %v545 = vsel %vm513, %v443, %v529
  %v546 = vsel %vm514, %v448, %v530
  %v547 = vsel %vm515, %v453, %v531
  %v548 = vsel %vm516, %v458, %v532
  %v549 = vsel %vm517, %v463, %v533
  %v550 = vsel %vm518, %v468, %v534
  %v551 = vsel %vm519, %v473, %v535
  %v552 = vsel %vm520, %v478, %v536
  %v553 = vsel %vm521, %v483, %v537
  %v554 = vsel %vm522, %v488, %v538
  %v555 = vsel %vm523, %v493, %v539
  %v556 = vsel %vm524, %v498, %v540
  %v557 = vsel %vm525, %v503, %v541
  %v558 = vsel %vm526, %v508, %v542
  %v559 = vld [vmem:[#allocation2] sm:$0x1]
  %vm560 = vcmask 7168
  %v561 = vsel %vm560, %v543, -inf
  %v562 = vsel %vm560, %v544, -inf
  %v563 = vsel %vm560, %v545, -inf
  %v564 = vsel %vm560, %v546, -inf
  %v565 = vsel %vm560, %v547, -inf
  %v566 = vmax.f32 %v561, %v565
  %v567 = vsel %vm560, %v548, -inf
  %v568 = vmax.f32 %v562, %v567
  %v569 = vsel %vm560, %v549, -inf
  %v570 = vmax.f32 %v563, %v569
  %v571 = vsel %vm560, %v550, -inf
  %v572 = vmax.f32 %v564, %v571
  %v573 = vsel %vm560, %v551, -inf
  %v574 = vmax.f32 %v566, %v573
  %v575 = vsel %vm560, %v552, -inf
  %v576 = vmax.f32 %v568, %v575
  %v577 = vsel %vm560, %v553, -inf
  %v578 = vmax.f32 %v570, %v577
  %v579 = vsel %vm560, %v554, -inf
  %v580 = vmax.f32 %v572, %v579
  %v581 = vsel %vm560, %v555, -inf
  %v582 = vmax.f32 %v574, %v581
  %v583 = vsel %vm560, %v556, -inf
  %v584 = vmax.f32 %v576, %v583
  %v585 = vsel %vm560, %v557, -inf
  %v586 = vmax.f32 %v578, %v585
  %v587 = vsel %vm560, %v558, -inf
  %v588 = vmax.f32 %v580, %v587
  %v589 = vmax.f32 %v582, %v584
  %v590 = vmax.f32 %v586, %v588
  %v591 = vmax.f32 %v589, %v590
  %v592 = vrot.slane %v591, 4
  %v593 = vmax.f32 %v591, %v592
  %v594 = vrot.slane %v593, 2
  %v595 = vmax.f32 %v593, %v594
  %v596 = vrot.slane %v595, 1
  %v597 = vmax.f32 %v595, %v596
  %v598 = vmax.f32 %v559, %v597
  %vm599 = vcmask 0
  %600 = vst.msk [vmem:[#allocation2] sm:$0x1] %vm599, %v598
  %v601 = vsub.f32 %v559, %v598
  %v602 = vmul.f32 %v601, 1.442695
  %v603 = vpow.pop %v602
  %v605 = vlaneseq
  %v606 = vshrl.u32 %v605, 7
  %v607 = vsub.s32 0, %v606
  %v608 = vrot.slane %v598, %v607
  %v610 = vsub.f32 %v543, %v608
  %v611 = vsub.f32 %v544, %v608
  %v612 = vsub.f32 %v545, %v608
  %v613 = vsub.f32 %v546, %v608
  %v614 = vsub.f32 %v547, %v608
  %v615 = vsub.f32 %v548, %v608
  %v616 = vsub.f32 %v549, %v608
  %v617 = vsub.f32 %v550, %v608
  %v618 = vsub.f32 %v551, %v608
  %v619 = vsub.f32 %v552, %v608
  %v620 = vsub.f32 %v553, %v608
  %v621 = vsub.f32 %v554, %v608
  %v622 = vsub.f32 %v555, %v608
  %v623 = vsub.f32 %v556, %v608
  %v624 = vsub.f32 %v557, %v608
  %v625 = vsub.f32 %v558, %v608
  %v626 = vmax.f32 %v610, -60.0
  %v627 = vmax.f32 %v611, -60.0
  %v628 = vmax.f32 %v612, -60.0
  %v629 = vmax.f32 %v613, -60.0
  %v630 = vmax.f32 %v614, -60.0
  %v631 = vmax.f32 %v615, -60.0
  %v632 = vmax.f32 %v616, -60.0
  %v633 = vmax.f32 %v617, -60.0
  %v634 = vmax.f32 %v618, -60.0
  %v635 = vmax.f32 %v619, -60.0
  %v636 = vmax.f32 %v620, -60.0
  %v637 = vmax.f32 %v621, -60.0
  %v638 = vmax.f32 %v622, -60.0
  %v639 = vmax.f32 %v623, -60.0
  %v640 = vmax.f32 %v624, -60.0
  %v641 = vmax.f32 %v625, -60.0
  %v642 = vmul.f32 %v626, 1.442695
  %v643 = vpow.pop %v642
  %v644 = vmul.f32 %v627, 1.442695
  %v645 = vpow.pop %v644
  %v646 = vmul.f32 %v628, 1.442695
  %v647 = vpow.pop %v646
  %v648 = vmul.f32 %v629, 1.442695
  %v649 = vpow.pop %v648
  %v650 = vmul.f32 %v630, 1.442695
  %v651 = vpow.pop %v650
  %v652 = vmul.f32 %v631, 1.442695
  %v653 = vpow.pop %v652
  %v654 = vmul.f32 %v632, 1.442695
  %v655 = vpow.pop %v654
  %v656 = vmul.f32 %v633, 1.442695
  %v657 = vpow.pop %v656
  %v658 = vmul.f32 %v634, 1.442695
  %v659 = vpow.pop %v658
  %v660 = vmul.f32 %v635, 1.442695
  %v661 = vpow.pop %v660
  %v662 = vmul.f32 %v636, 1.442695
  %v663 = vpow.pop %v662
  %v664 = vmul.f32 %v637, 1.442695
  %v665 = vpow.pop %v664
  %v666 = vmul.f32 %v638, 1.442695
  %v667 = vpow.pop %v666
  %v668 = vmul.f32 %v639, 1.442695
  %v669 = vpow.pop %v668
  %v670 = vmul.f32 %v640, 1.442695
  %v671 = vpow.pop %v670
  %v672 = vmul.f32 %v641, 1.442695
  %v673 = vpow.pop %v672
  %v674 = vld [vmem:[#allocation3] sm:$0xff]
  %v675 = vld [vmem:[#allocation3 + $0x8] sm:$0xff]
  %v676 = vld [vmem:[#allocation3 + $0x10] sm:$0xff]
  %v677 = vld [vmem:[#allocation3 + $0x18] sm:$0xff]
  %v678 = vld [vmem:[#allocation3 + $0x20] sm:$0xff]
  %v679 = vld [vmem:[#allocation3 + $0x28] sm:$0xff]
  %v680 = vld [vmem:[#allocation3 + $0x30] sm:$0xff]
  %v681 = vld [vmem:[#allocation3 + $0x38] sm:$0xff]
  %v682 = vld [vmem:[#allocation3 + $0x40] sm:$0xff]
  %v683 = vld [vmem:[#allocation3 + $0x48] sm:$0xff]
  %v684 = vld [vmem:[#allocation3 + $0x50] sm:$0xff]
  %v685 = vld [vmem:[#allocation3 + $0x58] sm:$0xff]
  %v686 = vld [vmem:[#allocation3 + $0x60] sm:$0xff]
  %v687 = vld [vmem:[#allocation3 + $0x68] sm:$0xff]
  %v688 = vld [vmem:[#allocation3 + $0x70] sm:$0xff]
  %v689 = vld [vmem:[#allocation3 + $0x78] sm:$0xff]
  %v691 = vlaneseq
  %v692 = vshrl.u32 %v691, 7
  %v693 = vsub.s32 0, %v692
  %v694 = vrot.slane %v603, %v693
  %v696 = vmul.f32 %v694, %v674
  %v697 = vmul.f32 %v694, %v675
  %v698 = vmul.f32 %v694, %v676
  %v699 = vmul.f32 %v694, %v677
  %v700 = vmul.f32 %v694, %v678
  %v701 = vmul.f32 %v694, %v679
  %v702 = vmul.f32 %v694, %v680
  %v703 = vmul.f32 %v694, %v681
  %v704 = vmul.f32 %v694, %v682
  %v705 = vmul.f32 %v694, %v683
  %v706 = vmul.f32 %v694, %v684
  %v707 = vmul.f32 %v694, %v685
  %v708 = vmul.f32 %v694, %v686
  %v709 = vmul.f32 %v694, %v687
  %v710 = vmul.f32 %v694, %v688
  %v711 = vmul.f32 %v694, %v689
  %712 = vxpose.xlu0.b32.start [1/16] %v157, 128
  %713 = vxpose.xlu0.b32.cont [2/16] %v158, 128
  %714 = vxpose.xlu0.b32.cont [3/16] %v159, 128
  %715 = vxpose.xlu0.b32.cont [4/16] %v160, 128
  %716 = vxpose.xlu0.b32.cont [5/16] %v161, 128
  %717 = vxpose.xlu0.b32.cont [6/16] %v162, 128
  %718 = vxpose.xlu0.b32.cont [7/16] %v163, 128
  %719 = vxpose.xlu0.b32.cont [8/16] %v164, 128
  %720 = vxpose.xlu0.b32.cont [9/16] %v165, 128
  %721 = vxpose.xlu0.b32.cont [10/16] %v166, 128
  %722 = vxpose.xlu0.b32.cont [11/16] %v167, 128
  %723 = vxpose.xlu0.b32.cont [12/16] %v168, 128
  %724 = vxpose.xlu0.b32.cont [13/16] %v169, 128
  %725 = vxpose.xlu0.b32.cont [14/16] %v170, 128
  %726 = vxpose.xlu0.b32.cont [15/16] %v171, 128
  %727 = vxpose.xlu0.b32.end [16/16] %v172, 128
  %v728 = vpop.trf.xlu0
  %v729 = vpop.trf.xlu0
  %v730 = vpop.trf.xlu0
  %v731 = vpop.trf.xlu0
  %v732 = vpop.trf.xlu0
  %v733 = vpop.trf.xlu0
  %v734 = vpop.trf.xlu0
  %v735 = vpop.trf.xlu0
  %v736 = vpop.trf.xlu0
  %v737 = vpop.trf.xlu0
  %v738 = vpop.trf.xlu0
  %v739 = vpop.trf.xlu0
  %v740 = vpop.trf.xlu0
  %v741 = vpop.trf.xlu0
  %v742 = vpop.trf.xlu0
  %v743 = vpop.trf.xlu0
  %744 = vmatprep.subr.mxu0 0.0
  %745 = vmatpush1.msra.mxu0 %v673
  %746 = vmatprep.subr.mxu0 0.0
  %747 = vmatpush1.msra.mxu0 %v671
  %748 = vmatprep.subr.mxu0 0.0
  %749 = vmatpush1.msra.mxu0 %v669
  %750 = vmatprep.subr.mxu0 0.0
  %751 = vmatpush1.msra.mxu0 %v667
  %752 = vmatprep.subr.mxu0 0.0
  %753 = vmatpush1.msra.mxu0 %v665
  %754 = vmatprep.subr.mxu0 0.0
  %755 = vmatpush1.msra.mxu0 %v663
  %756 = vmatprep.subr.mxu0 0.0
  %757 = vmatpush1.msra.mxu0 %v661
  %758 = vmatprep.subr.mxu0 0.0
  %759 = vmatpush1.msra.mxu0 %v659
  %760 = vmatprep.subr.mxu0 0.0
  %761 = vmatpush1.msra.mxu0 %v657
  %762 = vmatprep.subr.mxu0 0.0
  %763 = vmatpush1.msra.mxu0 %v655
  %764 = vmatprep.subr.mxu0 0.0
  %765 = vmatpush1.msra.mxu0 %v653
  %766 = vmatprep.subr.mxu0 0.0
  %767 = vmatpush1.msra.mxu0 %v651
  %768 = vmatprep.subr.mxu0 0.0
  %769 = vmatpush1.msra.mxu0 %v649
  %770 = vmatprep.subr.mxu0 0.0
  %771 = vmatpush1.msra.mxu0 %v647
  %772 = vmatprep.subr.mxu0 0.0
  %773 = vmatpush1.msra.mxu0 %v645
  %774 = vmatprep.subr.mxu0 0.0
  %775 = vmatpush1.msra.mxu0 %v643
  %776 = vmatprep.subr.mxu0 0.0
  %777 = vmatpush2.msra.mxu0 0.0
  %778 = vmatprep.subr.mxu0 0.0
  %779 = vmatpush2.msra.mxu0 0.0
  %780 = vmatprep.subr.mxu0 0.0
  %781 = vmatpush2.msra.mxu0 0.0
  %782 = vmatprep.subr.mxu0 0.0
  %783 = vmatpush2.msra.mxu0 0.0
  %784 = vmatprep.subr.mxu0 0.0
  %785 = vmatpush2.msra.mxu0 0.0
  %786 = vmatprep.subr.mxu0 0.0
  %787 = vmatpush2.msra.mxu0 0.0
  %788 = vmatprep.subr.mxu0 0.0
  %789 = vmatpush2.msra.mxu0 0.0
  %790 = vmatprep.subr.mxu0 0.0
  %791 = vmatpush2.msra.mxu0 0.0
  %792 = vmatprep.subr.mxu0 0.0
  %793 = vmatpush2.msra.mxu0 0.0
  %794 = vmatprep.subr.mxu0 0.0
  %795 = vmatpush2.msra.mxu0 0.0
  %796 = vmatprep.subr.mxu0 0.0
  %797 = vmatpush2.msra.mxu0 0.0
  %798 = vmatprep.subr.mxu0 0.0
  %799 = vmatpush2.msra.mxu0 0.0
  %800 = vmatprep.subr.mxu0 0.0
  %801 = vmatpush2.msra.mxu0 0.0
  %802 = vmatprep.subr.mxu0 0.0
  %803 = vmatpush2.msra.mxu0 0.0
  %804 = vmatprep.subr.mxu0 0.0
  %805 = vmatpush2.msra.mxu0 0.0
  %806 = vmatprep.subr.mxu0 0.0
  %807 = vmatpush2.msra.mxu0 0.0
  %808 = vmatprep.mubr.f32.mxu0 0.0
  %809 = vmatmul.mubr.f32.gmra.mxu0 %v728
  %v810 = vpop.f32.mrf.mxu0
  %v811 = vadd.f32 0.0, %v810
  %v812 = vpop.f32.mrf.mxu0
  %813 = vmatprep.mubr.f32.mxu0 0.0
  %814 = vmatmul.mubr.f32.gmra.mxu0 %v729
  %v815 = vpop.f32.mrf.mxu0
  %v816 = vadd.f32 0.0, %v815
  %v817 = vpop.f32.mrf.mxu0
  %818 = vmatprep.mubr.f32.mxu0 0.0
  %819 = vmatmul.mubr.f32.gmra.mxu0 %v730
  %v820 = vpop.f32.mrf.mxu0
  %v821 = vadd.f32 0.0, %v820
  %v822 = vpop.f32.mrf.mxu0
  %823 = vmatprep.mubr.f32.mxu0 0.0
  %824 = vmatmul.mubr.f32.gmra.mxu0 %v731
  %v825 = vpop.f32.mrf.mxu0
  %v826 = vadd.f32 0.0, %v825
  %v827 = vpop.f32.mrf.mxu0
  %828 = vmatprep.mubr.f32.mxu0 0.0
  %829 = vmatmul.mubr.f32.gmra.mxu0 %v732
  %v830 = vpop.f32.mrf.mxu0
  %v831 = vadd.f32 0.0, %v830
  %v832 = vpop.f32.mrf.mxu0
  %833 = vmatprep.mubr.f32.mxu0 0.0
  %834 = vmatmul.mubr.f32.gmra.mxu0 %v733
  %v835 = vpop.f32.mrf.mxu0
  %v836 = vadd.f32 0.0, %v835
  %v837 = vpop.f32.mrf.mxu0
  %838 = vmatprep.mubr.f32.mxu0 0.0
  %839 = vmatmul.mubr.f32.gmra.mxu0 %v734
  %v840 = vpop.f32.mrf.mxu0
  %v841 = vadd.f32 0.0, %v840
  %v842 = vpop.f32.mrf.mxu0
  %843 = vmatprep.mubr.f32.mxu0 0.0
  %844 = vmatmul.mubr.f32.gmra.mxu0 %v735
  %v845 = vpop.f32.mrf.mxu0
  %v846 = vadd.f32 0.0, %v845
  %v847 = vpop.f32.mrf.mxu0
  %848 = vmatprep.mubr.f32.mxu0 0.0
  %849 = vmatmul.mubr.f32.gmra.mxu0 %v736
  %v850 = vpop.f32.mrf.mxu0
  %v851 = vadd.f32 0.0, %v850
  %v852 = vpop.f32.mrf.mxu0
  %853 = vmatprep.mubr.f32.mxu0 0.0
  %854 = vmatmul.mubr.f32.gmra.mxu0 %v737
  %v855 = vpop.f32.mrf.mxu0
  %v856 = vadd.f32 0.0, %v855
  %v857 = vpop.f32.mrf.mxu0
  %858 = vmatprep.mubr.f32.mxu0 0.0
  %859 = vmatmul.mubr.f32.gmra.mxu0 %v738
  %v860 = vpop.f32.mrf.mxu0
  %v861 = vadd.f32 0.0, %v860
  %v862 = vpop.f32.mrf.mxu0
  %863 = vmatprep.mubr.f32.mxu0 0.0
  %864 = vmatmul.mubr.f32.gmra.mxu0 %v739
  %v865 = vpop.f32.mrf.mxu0
  %v866 = vadd.f32 0.0, %v865
  %v867 = vpop.f32.mrf.mxu0
  %868 = vmatprep.mubr.f32.mxu0 0.0
  %869 = vmatmul.mubr.f32.gmra.mxu0 %v740
  %v870 = vpop.f32.mrf.mxu0
  %v871 = vadd.f32 0.0, %v870
  %v872 = vpop.f32.mrf.mxu0
  %873 = vmatprep.mubr.f32.mxu0 0.0
  %874 = vmatmul.mubr.f32.gmra.mxu0 %v741
  %v875 = vpop.f32.mrf.mxu0
  %v876 = vadd.f32 0.0, %v875
  %v877 = vpop.f32.mrf.mxu0
  %878 = vmatprep.mubr.f32.mxu0 0.0
  %879 = vmatmul.mubr.f32.gmra.mxu0 %v742
  %v880 = vpop.f32.mrf.mxu0
  %v881 = vadd.f32 0.0, %v880
  %v882 = vpop.f32.mrf.mxu0
  %883 = vmatprep.mubr.f32.mxu0 0.0
  %884 = vmatmul.mubr.f32.gmra.mxu0 %v743
  %v885 = vpop.f32.mrf.mxu0
  %v886 = vadd.f32 0.0, %v885
  %v887 = vpop.f32.mrf.mxu0
  %888 = vdwg.mxu0
  %v889 = vadd.f32 %v696, %v811
  %v890 = vadd.f32 %v697, %v816
  %v891 = vadd.f32 %v698, %v821
  %v892 = vadd.f32 %v699, %v826
  %v893 = vadd.f32 %v700, %v831
  %v894 = vadd.f32 %v701, %v836
  %v895 = vadd.f32 %v702, %v841
  %v896 = vadd.f32 %v703, %v846
  %v897 = vadd.f32 %v704, %v851
  %v898 = vadd.f32 %v705, %v856
  %v899 = vadd.f32 %v706, %v861
  %v900 = vadd.f32 %v707, %v866
  %v901 = vadd.f32 %v708, %v871
  %v902 = vadd.f32 %v709, %v876
  %v903 = vadd.f32 %v710, %v881
  %v904 = vadd.f32 %v711, %v886
  %905 = vst.msk [vmem:[#allocation3] sm:$0xff] %vm560, %v889
  %906 = vst.msk [vmem:[#allocation3 + $0x8] sm:$0xff] %vm560, %v890
  %907 = vst.msk [vmem:[#allocation3 + $0x10] sm:$0xff] %vm560, %v891
  %908 = vst.msk [vmem:[#allocation3 + $0x18] sm:$0xff] %vm560, %v892
  %909 = vst.msk [vmem:[#allocation3 + $0x20] sm:$0xff] %vm560, %v893
  %910 = vst.msk [vmem:[#allocation3 + $0x28] sm:$0xff] %vm560, %v894
  %911 = vst.msk [vmem:[#allocation3 + $0x30] sm:$0xff] %vm560, %v895
  %912 = vst.msk [vmem:[#allocation3 + $0x38] sm:$0xff] %vm560, %v896
  %913 = vst.msk [vmem:[#allocation3 + $0x40] sm:$0xff] %vm560, %v897
  %914 = vst.msk [vmem:[#allocation3 + $0x48] sm:$0xff] %vm560, %v898
  %915 = vst.msk [vmem:[#allocation3 + $0x50] sm:$0xff] %vm560, %v899
  %916 = vst.msk [vmem:[#allocation3 + $0x58] sm:$0xff] %vm560, %v900
  %917 = vst.msk [vmem:[#allocation3 + $0x60] sm:$0xff] %vm560, %v901
  %918 = vst.msk [vmem:[#allocation3 + $0x68] sm:$0xff] %vm560, %v902
  %919 = vst.msk [vmem:[#allocation3 + $0x70] sm:$0xff] %vm560, %v903
  %920 = vst.msk [vmem:[#allocation3 + $0x78] sm:$0xff] %vm560, %v904
  %v921 = vld [vmem:[%s4] sm:$0x1]
  %v923 = vsel %vm560, %v643, 0
  %v926 = vsel %vm560, %v645, 0
  %v929 = vsel %vm560, %v647, 0
  %v932 = vsel %vm560, %v649, 0
  %v935 = vsel %vm560, %v651, 0
  %v938 = vsel %vm560, %v653, 0
  %v941 = vsel %vm560, %v655, 0
  %v944 = vsel %vm560, %v657, 0
  %v947 = vsel %vm560, %v659, 0
  %v950 = vsel %vm560, %v661, 0
  %v953 = vsel %vm560, %v663, 0
  %v956 = vsel %vm560, %v665, 0
  %v959 = vsel %vm560, %v667, 0
  %v962 = vsel %vm560, %v669, 0
  %v965 = vsel %vm560, %v671, 0
  %v968 = vsel %vm560, %v673, 0
  %vm970 = vcmask 1040384
  %v972 = vsel %vm970, %v921, 0
  %974 = vmatprep.subr.mxu0 0.0
  %975 = vmatpush1.msra.mxu0 0.0
  %976 = vmatprep.subr.mxu0 0.0
  %977 = vmatpush1.msra.mxu0 0.0
  %978 = vmatprep.subr.mxu0 0.0
  %979 = vmatpush1.msra.mxu0 0.0
  %980 = vmatprep.subr.mxu0 0.0
  %981 = vmatpush1.msra.mxu0 0.0
  %982 = vmatprep.subr.mxu0 0.0
  %983 = vmatpush1.msra.mxu0 0.0
  %984 = vmatprep.subr.mxu0 0.0
  %985 = vmatpush1.msra.mxu0 0.0
  %986 = vmatprep.subr.mxu0 0.0
  %987 = vmatpush1.msra.mxu0 0.0
  %988 = vmatprep.subr.mxu0 0.0
  %989 = vmatpush1.msra.mxu0 0.0
  %990 = vmatprep.subr.mxu0 0.0
  %991 = vmatpush1.msra.mxu0 0.0
  %992 = vmatprep.subr.mxu0 0.0
  %993 = vmatpush1.msra.mxu0 0.0
  %994 = vmatprep.subr.mxu0 0.0
  %995 = vmatpush1.msra.mxu0 0.0
  %996 = vmatprep.subr.mxu0 0.0
  %997 = vmatpush1.msra.mxu0 0.0
  %998 = vmatprep.subr.mxu0 0.0
  %999 = vmatpush1.msra.mxu0 0.0
  %1000 = vmatprep.subr.mxu0 0.0
  %1001 = vmatpush1.msra.mxu0 0.0
  %1002 = vmatprep.subr.mxu0 0.0
  %1003 = vmatpush1.msra.mxu0 0.0
  %1004 = vmatprep.subr.mxu0 0.0
  %1005 = vmatpush1.msra.mxu0 %v972
  %1006 = vmatprep.subr.mxu0 0.0
  %1007 = vmatpush2.msra.mxu0 0.0
  %1008 = vmatprep.subr.mxu0 0.0
  %1009 = vmatpush2.msra.mxu0 0.0
  %1010 = vmatprep.subr.mxu0 0.0
  %1011 = vmatpush2.msra.mxu0 0.0
  %1012 = vmatprep.subr.mxu0 0.0
  %1013 = vmatpush2.msra.mxu0 0.0
  %1014 = vmatprep.subr.mxu0 0.0
  %1015 = vmatpush2.msra.mxu0 0.0
  %1016 = vmatprep.subr.mxu0 0.0
  %1017 = vmatpush2.msra.mxu0 0.0
  %1018 = vmatprep.subr.mxu0 0.0
  %1019 = vmatpush2.msra.mxu0 0.0
  %1020 = vmatprep.subr.mxu0 0.0
  %1021 = vmatpush2.msra.mxu0 0.0
  %1022 = vmatprep.subr.mxu0 0.0
  %1023 = vmatpush2.msra.mxu0 0.0
  %1024 = vmatprep.subr.mxu0 0.0
  %1025 = vmatpush2.msra.mxu0 0.0
  %1026 = vmatprep.subr.mxu0 0.0
  %1027 = vmatpush2.msra.mxu0 0.0
  %1028 = vmatprep.subr.mxu0 0.0
  %1029 = vmatpush2.msra.mxu0 0.0
  %1030 = vmatprep.subr.mxu0 0.0
  %1031 = vmatpush2.msra.mxu0 0.0
  %1032 = vmatprep.subr.mxu0 0.0
  %1033 = vmatpush2.msra.mxu0 0.0
  %1034 = vmatprep.subr.mxu0 0.0
  %1035 = vmatpush2.msra.mxu0 0.0
  %1036 = vmatprep.subr.mxu0 0.0
  %1037 = vmatpush2.msra.mxu0 0.0
  %1038 = vmatprep.mubr.f32.mxu0 0.0
  %1039 = vmatmul.mubr.f32.gmra.mxu0 %v923
  %v1040 = vpop.f32.mrf.mxu0
  %v1041 = vadd.f32 0.0, %v1040
  %v1042 = vpop.f32.mrf.mxu0
  %1043 = vmatprep.mubr.f32.mxu0 0.0
  %1044 = vmatmul.mubr.f32.gmra.mxu0 %v926
  %v1045 = vpop.f32.mrf.mxu0
  %v1046 = vadd.f32 0.0, %v1045
  %v1047 = vpop.f32.mrf.mxu0
  %1048 = vmatprep.mubr.f32.mxu0 0.0
  %1049 = vmatmul.mubr.f32.gmra.mxu0 %v929
  %v1050 = vpop.f32.mrf.mxu0
  %v1051 = vadd.f32 0.0, %v1050
  %v1052 = vpop.f32.mrf.mxu0
  %1053 = vmatprep.mubr.f32.mxu0 0.0
  %1054 = vmatmul.mubr.f32.gmra.mxu0 %v932
  %v1055 = vpop.f32.mrf.mxu0
  %v1056 = vadd.f32 0.0, %v1055
  %v1057 = vpop.f32.mrf.mxu0
  %1058 = vmatprep.mubr.f32.mxu0 0.0
  %1059 = vmatmul.mubr.f32.gmra.mxu0 %v935
  %v1060 = vpop.f32.mrf.mxu0
  %v1061 = vadd.f32 0.0, %v1060
  %v1062 = vpop.f32.mrf.mxu0
  %1063 = vmatprep.mubr.f32.mxu0 0.0
  %1064 = vmatmul.mubr.f32.gmra.mxu0 %v938
  %v1065 = vpop.f32.mrf.mxu0
  %v1066 = vadd.f32 0.0, %v1065
  %v1067 = vpop.f32.mrf.mxu0
  %1068 = vmatprep.mubr.f32.mxu0 0.0
  %1069 = vmatmul.mubr.f32.gmra.mxu0 %v941
  %v1070 = vpop.f32.mrf.mxu0
  %v1071 = vadd.f32 0.0, %v1070
  %v1072 = vpop.f32.mrf.mxu0
  %1073 = vmatprep.mubr.f32.mxu0 0.0
  %1074 = vmatmul.mubr.f32.gmra.mxu0 %v944
  %v1075 = vpop.f32.mrf.mxu0
  %v1076 = vadd.f32 0.0, %v1075
  %v1077 = vpop.f32.mrf.mxu0
  %1078 = vmatprep.mubr.f32.mxu0 0.0
  %1079 = vmatmul.mubr.f32.gmra.mxu0 %v947
  %v1080 = vpop.f32.mrf.mxu0
  %v1081 = vadd.f32 0.0, %v1080
  %v1082 = vpop.f32.mrf.mxu0
  %1083 = vmatprep.mubr.f32.mxu0 0.0
  %1084 = vmatmul.mubr.f32.gmra.mxu0 %v950
  %v1085 = vpop.f32.mrf.mxu0
  %v1086 = vadd.f32 0.0, %v1085
  %v1087 = vpop.f32.mrf.mxu0
  %1088 = vmatprep.mubr.f32.mxu0 0.0
  %1089 = vmatmul.mubr.f32.gmra.mxu0 %v953
  %v1090 = vpop.f32.mrf.mxu0
  %v1091 = vadd.f32 0.0, %v1090
  %v1092 = vpop.f32.mrf.mxu0
  %1093 = vmatprep.mubr.f32.mxu0 0.0
  %1094 = vmatmul.mubr.f32.gmra.mxu0 %v956
  %v1095 = vpop.f32.mrf.mxu0
  %v1096 = vadd.f32 0.0, %v1095
  %v1097 = vpop.f32.mrf.mxu0
  %1098 = vmatprep.mubr.f32.mxu0 0.0
  %1099 = vmatmul.mubr.f32.gmra.mxu0 %v959
  %v1100 = vpop.f32.mrf.mxu0
  %v1101 = vadd.f32 0.0, %v1100
  %v1102 = vpop.f32.mrf.mxu0
  %1103 = vmatprep.mubr.f32.mxu0 0.0
  %1104 = vmatmul.mubr.f32.gmra.mxu0 %v962
  %v1105 = vpop.f32.mrf.mxu0
  %v1106 = vadd.f32 0.0, %v1105
  %v1107 = vpop.f32.mrf.mxu0
  %1108 = vmatprep.mubr.f32.mxu0 0.0
  %1109 = vmatmul.mubr.f32.gmra.mxu0 %v965
  %v1110 = vpop.f32.mrf.mxu0
  %v1111 = vadd.f32 0.0, %v1110
  %v1112 = vpop.f32.mrf.mxu0
  %1113 = vmatprep.mubr.f32.mxu0 0.0
  %1114 = vmatmul.mubr.f32.gmra.mxu0 %v968
  %v1115 = vpop.f32.mrf.mxu0
  %v1116 = vadd.f32 0.0, %v1115
  %v1117 = vpop.f32.mrf.mxu0
  %1118 = vdwg.mxu0
  %v1119 = vsel %vm560, %v603, 0
  %1121 = vmatprep.subr.mxu0 0.0
  %1122 = vmatpush1.msra.mxu0 0.0
  %1123 = vmatprep.subr.mxu0 0.0
  %1124 = vmatpush1.msra.mxu0 0.0
  %1125 = vmatprep.subr.mxu0 0.0
  %1126 = vmatpush1.msra.mxu0 0.0
  %1127 = vmatprep.subr.mxu0 0.0
  %1128 = vmatpush1.msra.mxu0 0.0
  %1129 = vmatprep.subr.mxu0 0.0
  %1130 = vmatpush1.msra.mxu0 0.0
  %1131 = vmatprep.subr.mxu0 0.0
  %1132 = vmatpush1.msra.mxu0 0.0
  %1133 = vmatprep.subr.mxu0 0.0
  %1134 = vmatpush1.msra.mxu0 0.0
  %1135 = vmatprep.subr.mxu0 0.0
  %1136 = vmatpush1.msra.mxu0 0.0
  %1137 = vmatprep.subr.mxu0 0.0
  %1138 = vmatpush1.msra.mxu0 0.0
  %1139 = vmatprep.subr.mxu0 0.0
  %1140 = vmatpush1.msra.mxu0 0.0
  %1141 = vmatprep.subr.mxu0 0.0
  %1142 = vmatpush1.msra.mxu0 0.0
  %1143 = vmatprep.subr.mxu0 0.0
  %1144 = vmatpush1.msra.mxu0 0.0
  %1145 = vmatprep.subr.mxu0 0.0
  %1146 = vmatpush1.msra.mxu0 0.0
  %1147 = vmatprep.subr.mxu0 0.0
  %1148 = vmatpush1.msra.mxu0 0.0
  %1149 = vmatprep.subr.mxu0 0.0
  %1150 = vmatpush1.msra.mxu0 0.0
  %1151 = vmatprep.subr.mxu0 0.0
  %1152 = vmatpush1.msra.mxu0 %v972
  %1153 = vmatprep.subr.mxu0 0.0
  %1154 = vmatpush2.msra.mxu0 0.0
  %1155 = vmatprep.subr.mxu0 0.0
  %1156 = vmatpush2.msra.mxu0 0.0
  %1157 = vmatprep.subr.mxu0 0.0
  %1158 = vmatpush2.msra.mxu0 0.0
  %1159 = vmatprep.subr.mxu0 0.0
  %1160 = vmatpush2.msra.mxu0 0.0
  %1161 = vmatprep.subr.mxu0 0.0
  %1162 = vmatpush2.msra.mxu0 0.0
  %1163 = vmatprep.subr.mxu0 0.0
  %1164 = vmatpush2.msra.mxu0 0.0
  %1165 = vmatprep.subr.mxu0 0.0
  %1166 = vmatpush2.msra.mxu0 0.0
  %1167 = vmatprep.subr.mxu0 0.0
  %1168 = vmatpush2.msra.mxu0 0.0
  %1169 = vmatprep.subr.mxu0 0.0
  %1170 = vmatpush2.msra.mxu0 0.0
  %1171 = vmatprep.subr.mxu0 0.0
  %1172 = vmatpush2.msra.mxu0 0.0
  %1173 = vmatprep.subr.mxu0 0.0
  %1174 = vmatpush2.msra.mxu0 0.0
  %1175 = vmatprep.subr.mxu0 0.0
  %1176 = vmatpush2.msra.mxu0 0.0
  %1177 = vmatprep.subr.mxu0 0.0
  %1178 = vmatpush2.msra.mxu0 0.0
  %1179 = vmatprep.subr.mxu0 0.0
  %1180 = vmatpush2.msra.mxu0 0.0
  %1181 = vmatprep.subr.mxu0 0.0
  %1182 = vmatpush2.msra.mxu0 0.0
  %1183 = vmatprep.subr.mxu0 0.0
  %1184 = vmatpush2.msra.mxu0 0.0
  %1185 = vmatprep.mubr.f32.mxu0 0.0
  %1186 = vmatmul.mubr.f32.gmra.mxu0 %v1119
  %v1187 = vpop.f32.mrf.mxu0
  %v1188 = vadd.f32 0.0, %v1187
  %v1189 = vpop.f32.mrf.mxu0
  %1190 = vdwg.mxu0
  %v1191 = vld [vmem:[%s5] sm:$0xff]
  %v1192 = vld [vmem:[%s5 + $0x8] sm:$0xff]
  %v1193 = vld [vmem:[%s5 + $0x10] sm:$0xff]
  %v1194 = vld [vmem:[%s5 + $0x18] sm:$0xff]
  %v1195 = vld [vmem:[%s5 + $0x20] sm:$0xff]
  %v1196 = vld [vmem:[%s5 + $0x28] sm:$0xff]
  %v1197 = vld [vmem:[%s5 + $0x30] sm:$0xff]
  %v1198 = vld [vmem:[%s5 + $0x38] sm:$0xff]
  %v1199 = vld [vmem:[%s5 + $0x40] sm:$0xff]
  %v1200 = vld [vmem:[%s5 + $0x48] sm:$0xff]
  %v1201 = vld [vmem:[%s5 + $0x50] sm:$0xff]
  %v1202 = vld [vmem:[%s5 + $0x58] sm:$0xff]
  %v1203 = vld [vmem:[%s5 + $0x60] sm:$0xff]
  %v1204 = vld [vmem:[%s5 + $0x68] sm:$0xff]
  %v1205 = vld [vmem:[%s5 + $0x70] sm:$0xff]
  %v1206 = vld [vmem:[%s5 + $0x78] sm:$0xff]
  %v1207 = vlaneseq
  %v1208 = vshrl.u32 %v1207, 7
  %v1209 = vsub.s32 0, %v1208
  %v1210 = vrot.slane %v1188, %v1209
  %v1211 = vmul.f32 %v1210, %v1191
  %v1212 = vmul.f32 %v1210, %v1192
  %v1213 = vmul.f32 %v1210, %v1193
  %v1214 = vmul.f32 %v1210, %v1194
  %v1215 = vmul.f32 %v1210, %v1195
  %v1216 = vmul.f32 %v1210, %v1196
  %v1217 = vmul.f32 %v1210, %v1197
  %v1218 = vmul.f32 %v1210, %v1198
  %v1219 = vmul.f32 %v1210, %v1199
  %v1220 = vmul.f32 %v1210, %v1200
  %v1221 = vmul.f32 %v1210, %v1201
  %v1222 = vmul.f32 %v1210, %v1202
  %v1223 = vmul.f32 %v1210, %v1203
  %v1224 = vmul.f32 %v1210, %v1204
  %v1225 = vmul.f32 %v1210, %v1205
  %v1226 = vmul.f32 %v1210, %v1206
  %v1227 = vmul.f32 %v1041, %v272
  %v1228 = vmul.f32 %v1046, %v277
  %v1229 = vmul.f32 %v1051, %v282
  %v1230 = vmul.f32 %v1056, %v287
  %v1231 = vmul.f32 %v1061, %v292
  %v1232 = vmul.f32 %v1066, %v297
  %v1233 = vmul.f32 %v1071, %v302
  %v1234 = vmul.f32 %v1076, %v307
  %v1235 = vmul.f32 %v1081, %v312
  %v1236 = vmul.f32 %v1086, %v317
  %v1237 = vmul.f32 %v1091, %v322
  %v1238 = vmul.f32 %v1096, %v327
  %v1239 = vmul.f32 %v1101, %v332
  %v1240 = vmul.f32 %v1106, %v337
  %v1241 = vmul.f32 %v1111, %v342
  %v1242 = vmul.f32 %v1116, %v347
  %1243 = vmatprep.subr.mxu0 0.0
  %1244 = vmatpush1.msra.mxu0 %v1242
  %1245 = vmatprep.subr.mxu0 0.0
  %1246 = vmatpush1.msra.mxu0 %v1241
  %1247 = vmatprep.subr.mxu0 0.0
  %1248 = vmatpush1.msra.mxu0 %v1240
  %1249 = vmatprep.subr.mxu0 0.0
  %1250 = vmatpush1.msra.mxu0 %v1239
  %1251 = vmatprep.subr.mxu0 0.0
  %1252 = vmatpush1.msra.mxu0 %v1238
  %1253 = vmatprep.subr.mxu0 0.0
  %1254 = vmatpush1.msra.mxu0 %v1237
  %1255 = vmatprep.subr.mxu0 0.0
  %1256 = vmatpush1.msra.mxu0 %v1236
  %1257 = vmatprep.subr.mxu0 0.0
  %1258 = vmatpush1.msra.mxu0 %v1235
  %1259 = vmatprep.subr.mxu0 0.0
  %1260 = vmatpush1.msra.mxu0 %v1234
  %1261 = vmatprep.subr.mxu0 0.0
  %1262 = vmatpush1.msra.mxu0 %v1233
  %1263 = vmatprep.subr.mxu0 0.0
  %1264 = vmatpush1.msra.mxu0 %v1232
  %1265 = vmatprep.subr.mxu0 0.0
  %1266 = vmatpush1.msra.mxu0 %v1231
  %1267 = vmatprep.subr.mxu0 0.0
  %1268 = vmatpush1.msra.mxu0 %v1230
  %1269 = vmatprep.subr.mxu0 0.0
  %1270 = vmatpush1.msra.mxu0 %v1229
  %1271 = vmatprep.subr.mxu0 0.0
  %1272 = vmatpush1.msra.mxu0 %v1228
  %1273 = vmatprep.subr.mxu0 0.0
  %1274 = vmatpush1.msra.mxu0 %v1227
  %1275 = vmatprep.subr.mxu0 0.0
  %1276 = vmatpush2.msra.mxu0 0.0
  %1277 = vmatprep.subr.mxu0 0.0
  %1278 = vmatpush2.msra.mxu0 0.0
  %1279 = vmatprep.subr.mxu0 0.0
  %1280 = vmatpush2.msra.mxu0 0.0
  %1281 = vmatprep.subr.mxu0 0.0
  %1282 = vmatpush2.msra.mxu0 0.0
  %1283 = vmatprep.subr.mxu0 0.0
  %1284 = vmatpush2.msra.mxu0 0.0
  %1285 = vmatprep.subr.mxu0 0.0
  %1286 = vmatpush2.msra.mxu0 0.0
  %1287 = vmatprep.subr.mxu0 0.0
  %1288 = vmatpush2.msra.mxu0 0.0
  %1289 = vmatprep.subr.mxu0 0.0
  %1290 = vmatpush2.msra.mxu0 0.0
  %1291 = vmatprep.subr.mxu0 0.0
  %1292 = vmatpush2.msra.mxu0 0.0
  %1293 = vmatprep.subr.mxu0 0.0
  %1294 = vmatpush2.msra.mxu0 0.0
  %1295 = vmatprep.subr.mxu0 0.0
  %1296 = vmatpush2.msra.mxu0 0.0
  %1297 = vmatprep.subr.mxu0 0.0
  %1298 = vmatpush2.msra.mxu0 0.0
  %1299 = vmatprep.subr.mxu0 0.0
  %1300 = vmatpush2.msra.mxu0 0.0
  %1301 = vmatprep.subr.mxu0 0.0
  %1302 = vmatpush2.msra.mxu0 0.0
  %1303 = vmatprep.subr.mxu0 0.0
  %1304 = vmatpush2.msra.mxu0 0.0
  %1305 = vmatprep.subr.mxu0 0.0
  %1306 = vmatpush2.msra.mxu0 0.0
  %1307 = vmatprep.mubr.f32.mxu0 0.0
  %1308 = vmatmul.mubr.f32.gmra.mxu0 %v728
  %v1309 = vpop.f32.mrf.mxu0
  %v1310 = vadd.f32 0.0, %v1309
  %v1311 = vpop.f32.mrf.mxu0
  %1312 = vmatprep.mubr.f32.mxu0 0.0
  %1313 = vmatmul.mubr.f32.gmra.mxu0 %v729
  %v1314 = vpop.f32.mrf.mxu0
  %v1315 = vadd.f32 0.0, %v1314
  %v1316 = vpop.f32.mrf.mxu0
  %1317 = vmatprep.mubr.f32.mxu0 0.0
  %1318 = vmatmul.mubr.f32.gmra.mxu0 %v730
  %v1319 = vpop.f32.mrf.mxu0
  %v1320 = vadd.f32 0.0, %v1319
  %v1321 = vpop.f32.mrf.mxu0
  %1322 = vmatprep.mubr.f32.mxu0 0.0
  %1323 = vmatmul.mubr.f32.gmra.mxu0 %v731
  %v1324 = vpop.f32.mrf.mxu0
  %v1325 = vadd.f32 0.0, %v1324
  %v1326 = vpop.f32.mrf.mxu0
  %1327 = vmatprep.mubr.f32.mxu0 0.0
  %1328 = vmatmul.mubr.f32.gmra.mxu0 %v732
  %v1329 = vpop.f32.mrf.mxu0
  %v1330 = vadd.f32 0.0, %v1329
  %v1331 = vpop.f32.mrf.mxu0
  %1332 = vmatprep.mubr.f32.mxu0 0.0
  %1333 = vmatmul.mubr.f32.gmra.mxu0 %v733
  %v1334 = vpop.f32.mrf.mxu0
  %v1335 = vadd.f32 0.0, %v1334
  %v1336 = vpop.f32.mrf.mxu0
  %1337 = vmatprep.mubr.f32.mxu0 0.0
  %1338 = vmatmul.mubr.f32.gmra.mxu0 %v734
  %v1339 = vpop.f32.mrf.mxu0
  %v1340 = vadd.f32 0.0, %v1339
  %v1341 = vpop.f32.mrf.mxu0
  %1342 = vmatprep.mubr.f32.mxu0 0.0
  %1343 = vmatmul.mubr.f32.gmra.mxu0 %v735
  %v1344 = vpop.f32.mrf.mxu0
  %v1345 = vadd.f32 0.0, %v1344
  %v1346 = vpop.f32.mrf.mxu0
  %1347 = vmatprep.mubr.f32.mxu0 0.0
  %1348 = vmatmul.mubr.f32.gmra.mxu0 %v736
  %v1349 = vpop.f32.mrf.mxu0
  %v1350 = vadd.f32 0.0, %v1349
  %v1351 = vpop.f32.mrf.mxu0
  %1352 = vmatprep.mubr.f32.mxu0 0.0
  %1353 = vmatmul.mubr.f32.gmra.mxu0 %v737
  %v1354 = vpop.f32.mrf.mxu0
  %v1355 = vadd.f32 0.0, %v1354
  %v1356 = vpop.f32.mrf.mxu0
  %1357 = vmatprep.mubr.f32.mxu0 0.0
  %1358 = vmatmul.mubr.f32.gmra.mxu0 %v738
  %v1359 = vpop.f32.mrf.mxu0
  %v1360 = vadd.f32 0.0, %v1359
  %v1361 = vpop.f32.mrf.mxu0
  %1362 = vmatprep.mubr.f32.mxu0 0.0
  %1363 = vmatmul.mubr.f32.gmra.mxu0 %v739
  %v1364 = vpop.f32.mrf.mxu0
  %v1365 = vadd.f32 0.0, %v1364
  %v1366 = vpop.f32.mrf.mxu0
  %1367 = vmatprep.mubr.f32.mxu0 0.0
  %1368 = vmatmul.mubr.f32.gmra.mxu0 %v740
  %v1369 = vpop.f32.mrf.mxu0
  %v1370 = vadd.f32 0.0, %v1369
  %v1371 = vpop.f32.mrf.mxu0
  %1372 = vmatprep.mubr.f32.mxu0 0.0
  %1373 = vmatmul.mubr.f32.gmra.mxu0 %v741
  %v1374 = vpop.f32.mrf.mxu0
  %v1375 = vadd.f32 0.0, %v1374
  %v1376 = vpop.f32.mrf.mxu0
  %1377 = vmatprep.mubr.f32.mxu0 0.0
  %1378 = vmatmul.mubr.f32.gmra.mxu0 %v742
  %v1379 = vpop.f32.mrf.mxu0
  %v1380 = vadd.f32 0.0, %v1379
  %v1381 = vpop.f32.mrf.mxu0
  %1382 = vmatprep.mubr.f32.mxu0 0.0
  %1383 = vmatmul.mubr.f32.gmra.mxu0 %v743
  %v1384 = vpop.f32.mrf.mxu0
  %v1385 = vadd.f32 0.0, %v1384
  %v1386 = vpop.f32.mrf.mxu0
  %1387 = vdwg.mxu0
  %v1388 = vadd.f32 %v1211, %v1310
  %v1389 = vadd.f32 %v1212, %v1315
  %v1390 = vadd.f32 %v1213, %v1320
  %v1391 = vadd.f32 %v1214, %v1325
  %v1392 = vadd.f32 %v1215, %v1330
  %v1393 = vadd.f32 %v1216, %v1335
  %v1394 = vadd.f32 %v1217, %v1340
  %v1395 = vadd.f32 %v1218, %v1345
  %v1396 = vadd.f32 %v1219, %v1350
  %v1397 = vadd.f32 %v1220, %v1355
  %v1398 = vadd.f32 %v1221, %v1360
  %v1399 = vadd.f32 %v1222, %v1365
  %v1400 = vadd.f32 %v1223, %v1370
  %v1401 = vadd.f32 %v1224, %v1375
  %v1402 = vadd.f32 %v1225, %v1380
  %v1403 = vadd.f32 %v1226, %v1385
  %1404 = vst [vmem:[%s5] sm:$0xff] %v1388
  %1405 = vst [vmem:[%s5 + $0x8] sm:$0xff] %v1389
  %1406 = vst [vmem:[%s5 + $0x10] sm:$0xff] %v1390
  %1407 = vst [vmem:[%s5 + $0x18] sm:$0xff] %v1391
  %1408 = vst [vmem:[%s5 + $0x20] sm:$0xff] %v1392
  %1409 = vst [vmem:[%s5 + $0x28] sm:$0xff] %v1393
  %1410 = vst [vmem:[%s5 + $0x30] sm:$0xff] %v1394
  %1411 = vst [vmem:[%s5 + $0x38] sm:$0xff] %v1395
  %1412 = vst [vmem:[%s5 + $0x40] sm:$0xff] %v1396
  %1413 = vst [vmem:[%s5 + $0x48] sm:$0xff] %v1397
  %1414 = vst [vmem:[%s5 + $0x50] sm:$0xff] %v1398
  %1415 = vst [vmem:[%s5 + $0x58] sm:$0xff] %v1399
  %1416 = vst [vmem:[%s5 + $0x60] sm:$0xff] %v1400
  %1417 = vst [vmem:[%s5 + $0x68] sm:$0xff] %v1401
  %1418 = vst [vmem:[%s5 + $0x70] sm:$0xff] %v1402
  %1419 = vst [vmem:[%s5 + $0x78] sm:$0xff] %v1403
  // Predicated region
  $region26: #{kbgat_forward.4} parent=0 // pred_check
    %p1420 = pneg %p20
  $region27: #{kbgat_forward.4} parent=0 // pred_check_branch
    %1422 = sbr.rel (%p1420) target = $region29
  $region28: #{kbgat_forward.4} parent=0 // pred_region
    %v1423 = vld [vmem:[#allocation3] sm:$0xff]
    %v1424 = vld [vmem:[#allocation3 + $0x8] sm:$0xff]
    %v1425 = vld [vmem:[#allocation3 + $0x10] sm:$0xff]
    %v1426 = vld [vmem:[#allocation3 + $0x18] sm:$0xff]
    %v1427 = vld [vmem:[#allocation3 + $0x20] sm:$0xff]
    %v1428 = vld [vmem:[#allocation3 + $0x28] sm:$0xff]
    %v1429 = vld [vmem:[#allocation3 + $0x30] sm:$0xff]
    %v1430 = vld [vmem:[#allocation3 + $0x38] sm:$0xff]
    %v1431 = vld [vmem:[#allocation3 + $0x40] sm:$0xff]
    %v1432 = vld [vmem:[#allocation3 + $0x48] sm:$0xff]
    %v1433 = vld [vmem:[#allocation3 + $0x50] sm:$0xff]
    %v1434 = vld [vmem:[#allocation3 + $0x58] sm:$0xff]
    %v1435 = vld [vmem:[#allocation3 + $0x60] sm:$0xff]
    %v1436 = vld [vmem:[#allocation3 + $0x68] sm:$0xff]
    %v1437 = vld [vmem:[#allocation3 + $0x70] sm:$0xff]
    %v1438 = vld [vmem:[#allocation3 + $0x78] sm:$0xff]
    %v1439 = vld [vmem:[%s5] sm:$0xff]
    %v1440 = vld [vmem:[%s5 + $0x8] sm:$0xff]
    %v1441 = vld [vmem:[%s5 + $0x10] sm:$0xff]
    %v1442 = vld [vmem:[%s5 + $0x18] sm:$0xff]
    %v1443 = vld [vmem:[%s5 + $0x20] sm:$0xff]
    %v1444 = vld [vmem:[%s5 + $0x28] sm:$0xff]
    %v1445 = vld [vmem:[%s5 + $0x30] sm:$0xff]
    %v1446 = vld [vmem:[%s5 + $0x38] sm:$0xff]
    %v1447 = vld [vmem:[%s5 + $0x40] sm:$0xff]
    %v1448 = vld [vmem:[%s5 + $0x48] sm:$0xff]
    %v1449 = vld [vmem:[%s5 + $0x50] sm:$0xff]
    %v1450 = vld [vmem:[%s5 + $0x58] sm:$0xff]
    %v1451 = vld [vmem:[%s5 + $0x60] sm:$0xff]
    %v1452 = vld [vmem:[%s5 + $0x68] sm:$0xff]
    %v1453 = vld [vmem:[%s5 + $0x70] sm:$0xff]
    %v1454 = vld [vmem:[%s5 + $0x78] sm:$0xff]
    %v1456 = vsel %vm560, %v1423, 0
    %v1459 = vsel %vm560, %v1424, 0
    %v1462 = vsel %vm560, %v1425, 0
    %v1465 = vsel %vm560, %v1426, 0
    %v1468 = vsel %vm560, %v1427, 0
    %v1471 = vsel %vm560, %v1428, 0
    %v1474 = vsel %vm560, %v1429, 0
    %v1477 = vsel %vm560, %v1430, 0
    %v1480 = vsel %vm560, %v1431, 0
    %v1483 = vsel %vm560, %v1432, 0
    %v1486 = vsel %vm560, %v1433, 0
    %v1489 = vsel %vm560, %v1434, 0
    %v1492 = vsel %vm560, %v1435, 0
    %v1495 = vsel %vm560, %v1436, 0
    %v1498 = vsel %vm560, %v1437, 0
    %v1501 = vsel %vm560, %v1438, 0
    %1503 = vmatprep.subr.mxu0 0.0
    %1504 = vmatpush1.msra.mxu0 0.0
    %1505 = vmatprep.subr.mxu0 0.0
    %1506 = vmatpush1.msra.mxu0 0.0
    %1507 = vmatprep.subr.mxu0 0.0
    %1508 = vmatpush1.msra.mxu0 0.0
    %1509 = vmatprep.subr.mxu0 0.0
    %1510 = vmatpush1.msra.mxu0 0.0
    %1511 = vmatprep.subr.mxu0 0.0
    %1512 = vmatpush1.msra.mxu0 0.0
    %1513 = vmatprep.subr.mxu0 0.0
    %1514 = vmatpush1.msra.mxu0 0.0
    %1515 = vmatprep.subr.mxu0 0.0
    %1516 = vmatpush1.msra.mxu0 0.0
    %1517 = vmatprep.subr.mxu0 0.0
    %1518 = vmatpush1.msra.mxu0 0.0
    %1519 = vmatprep.subr.mxu0 0.0
    %1520 = vmatpush1.msra.mxu0 0.0
    %1521 = vmatprep.subr.mxu0 0.0
    %1522 = vmatpush1.msra.mxu0 0.0
    %1523 = vmatprep.subr.mxu0 0.0
    %1524 = vmatpush1.msra.mxu0 0.0
    %1525 = vmatprep.subr.mxu0 0.0
    %1526 = vmatpush1.msra.mxu0 0.0
    %1527 = vmatprep.subr.mxu0 0.0
    %1528 = vmatpush1.msra.mxu0 0.0
    %1529 = vmatprep.subr.mxu0 0.0
    %1530 = vmatpush1.msra.mxu0 0.0
    %1531 = vmatprep.subr.mxu0 0.0
    %1532 = vmatpush1.msra.mxu0 0.0
    %1533 = vmatprep.subr.mxu0 0.0
    %1534 = vmatpush1.msra.mxu0 %v972
    %1535 = vmatprep.subr.mxu0 0.0
    %1536 = vmatpush2.msra.mxu0 0.0
    %1537 = vmatprep.subr.mxu0 0.0
    %1538 = vmatpush2.msra.mxu0 0.0
    %1539 = vmatprep.subr.mxu0 0.0
    %1540 = vmatpush2.msra.mxu0 0.0
    %1541 = vmatprep.subr.mxu0 0.0
    %1542 = vmatpush2.msra.mxu0 0.0
    %1543 = vmatprep.subr.mxu0 0.0
    %1544 = vmatpush2.msra.mxu0 0.0
    %1545 = vmatprep.subr.mxu0 0.0
    %1546 = vmatpush2.msra.mxu0 0.0
    %1547 = vmatprep.subr.mxu0 0.0
    %1548 = vmatpush2.msra.mxu0 0.0
    %1549 = vmatprep.subr.mxu0 0.0
    %1550 = vmatpush2.msra.mxu0 0.0
    %1551 = vmatprep.subr.mxu0 0.0
    %1552 = vmatpush2.msra.mxu0 0.0
    %1553 = vmatprep.subr.mxu0 0.0
    %1554 = vmatpush2.msra.mxu0 0.0
    %1555 = vmatprep.subr.mxu0 0.0
    %1556 = vmatpush2.msra.mxu0 0.0
    %1557 = vmatprep.subr.mxu0 0.0
    %1558 = vmatpush2.msra.mxu0 0.0
    %1559 = vmatprep.subr.mxu0 0.0
    %1560 = vmatpush2.msra.mxu0 0.0
    %1561 = vmatprep.subr.mxu0 0.0
    %1562 = vmatpush2.msra.mxu0 0.0
    %1563 = vmatprep.subr.mxu0 0.0
    %1564 = vmatpush2.msra.mxu0 0.0
    %1565 = vmatprep.subr.mxu0 0.0
    %1566 = vmatpush2.msra.mxu0 0.0
    %1567 = vmatprep.mubr.f32.mxu0 0.0
    %1568 = vmatmul.mubr.f32.gmra.mxu0 %v1456
    %v1569 = vpop.f32.mrf.mxu0
    %v1570 = vadd.f32 1e-16, %v1569
    %v1571 = vpop.f32.mrf.mxu0
    %1572 = vmatprep.mubr.f32.mxu0 0.0
    %1573 = vmatmul.mubr.f32.gmra.mxu0 %v1459
    %v1574 = vpop.f32.mrf.mxu0
    %v1575 = vadd.f32 1e-16, %v1574
    %v1576 = vpop.f32.mrf.mxu0
    %1577 = vmatprep.mubr.f32.mxu0 0.0
    %1578 = vmatmul.mubr.f32.gmra.mxu0 %v1462
    %v1579 = vpop.f32.mrf.mxu0
    %v1580 = vadd.f32 1e-16, %v1579
    %v1581 = vpop.f32.mrf.mxu0
    %1582 = vmatprep.mubr.f32.mxu0 0.0
    %1583 = vmatmul.mubr.f32.gmra.mxu0 %v1465
    %v1584 = vpop.f32.mrf.mxu0
    %v1585 = vadd.f32 1e-16, %v1584
    %v1586 = vpop.f32.mrf.mxu0
    %1587 = vmatprep.mubr.f32.mxu0 0.0
    %1588 = vmatmul.mubr.f32.gmra.mxu0 %v1468
    %v1589 = vpop.f32.mrf.mxu0
    %v1590 = vadd.f32 1e-16, %v1589
    %v1591 = vpop.f32.mrf.mxu0
    %1592 = vmatprep.mubr.f32.mxu0 0.0
    %1593 = vmatmul.mubr.f32.gmra.mxu0 %v1471
    %v1594 = vpop.f32.mrf.mxu0
    %v1595 = vadd.f32 1e-16, %v1594
    %v1596 = vpop.f32.mrf.mxu0
    %1597 = vmatprep.mubr.f32.mxu0 0.0
    %1598 = vmatmul.mubr.f32.gmra.mxu0 %v1474
    %v1599 = vpop.f32.mrf.mxu0
    %v1600 = vadd.f32 1e-16, %v1599
    %v1601 = vpop.f32.mrf.mxu0
    %1602 = vmatprep.mubr.f32.mxu0 0.0
    %1603 = vmatmul.mubr.f32.gmra.mxu0 %v1477
    %v1604 = vpop.f32.mrf.mxu0
    %v1605 = vadd.f32 1e-16, %v1604
    %v1606 = vpop.f32.mrf.mxu0
    %1607 = vmatprep.mubr.f32.mxu0 0.0
    %1608 = vmatmul.mubr.f32.gmra.mxu0 %v1480
    %v1609 = vpop.f32.mrf.mxu0
    %v1610 = vadd.f32 1e-16, %v1609
    %v1611 = vpop.f32.mrf.mxu0
    %1612 = vmatprep.mubr.f32.mxu0 0.0
    %1613 = vmatmul.mubr.f32.gmra.mxu0 %v1483
    %v1614 = vpop.f32.mrf.mxu0
    %v1615 = vadd.f32 1e-16, %v1614
    %v1616 = vpop.f32.mrf.mxu0
    %1617 = vmatprep.mubr.f32.mxu0 0.0
    %1618 = vmatmul.mubr.f32.gmra.mxu0 %v1486
    %v1619 = vpop.f32.mrf.mxu0
    %v1620 = vadd.f32 1e-16, %v1619
    %v1621 = vpop.f32.mrf.mxu0
    %1622 = vmatprep.mubr.f32.mxu0 0.0
    %1623 = vmatmul.mubr.f32.gmra.mxu0 %v1489
    %v1624 = vpop.f32.mrf.mxu0
    %v1625 = vadd.f32 1e-16, %v1624
    %v1626 = vpop.f32.mrf.mxu0
    %1627 = vmatprep.mubr.f32.mxu0 0.0
    %1628 = vmatmul.mubr.f32.gmra.mxu0 %v1492
    %v1629 = vpop.f32.mrf.mxu0
    %v1630 = vadd.f32 1e-16, %v1629
    %v1631 = vpop.f32.mrf.mxu0
    %1632 = vmatprep.mubr.f32.mxu0 0.0
    %1633 = vmatmul.mubr.f32.gmra.mxu0 %v1495
    %v1634 = vpop.f32.mrf.mxu0
    %v1635 = vadd.f32 1e-16, %v1634
    %v1636 = vpop.f32.mrf.mxu0
    %1637 = vmatprep.mubr.f32.mxu0 0.0
    %1638 = vmatmul.mubr.f32.gmra.mxu0 %v1498
    %v1639 = vpop.f32.mrf.mxu0
    %v1640 = vadd.f32 1e-16, %v1639
    %v1641 = vpop.f32.mrf.mxu0
    %1642 = vmatprep.mubr.f32.mxu0 0.0
    %1643 = vmatmul.mubr.f32.gmra.mxu0 %v1501
    %v1644 = vpop.f32.mrf.mxu0
    %v1645 = vadd.f32 1e-16, %v1644
    %v1646 = vpop.f32.mrf.mxu0
    %1647 = vdwg.mxu0
    %v1648 = vrcp.pop %v1570
    %v1649 = vmul.f32 %v1439, %v1648
    %v1650 = vrcp.pop %v1575
    %v1651 = vmul.f32 %v1440, %v1650
    %v1652 = vrcp.pop %v1580
    %v1653 = vmul.f32 %v1441, %v1652
    %v1654 = vrcp.pop %v1585
    %v1655 = vmul.f32 %v1442, %v1654
    %v1656 = vrcp.pop %v1590
    %v1657 = vmul.f32 %v1443, %v1656
    %v1658 = vrcp.pop %v1595
    %v1659 = vmul.f32 %v1444, %v1658
    %v1660 = vrcp.pop %v1600
    %v1661 = vmul.f32 %v1445, %v1660
    %v1662 = vrcp.pop %v1605
    %v1663 = vmul.f32 %v1446, %v1662
    %v1664 = vrcp.pop %v1610
    %v1665 = vmul.f32 %v1447, %v1664
    %v1666 = vrcp.pop %v1615
    %v1667 = vmul.f32 %v1448, %v1666
    %v1668 = vrcp.pop %v1620
    %v1669 = vmul.f32 %v1449, %v1668
    %v1670 = vrcp.pop %v1625
    %v1671 = vmul.f32 %v1450, %v1670
    %v1672 = vrcp.pop %v1630
    %v1673 = vmul.f32 %v1451, %v1672
    %v1674 = vrcp.pop %v1635
    %v1675 = vmul.f32 %v1452, %v1674
    %v1676 = vrcp.pop %v1640
    %v1677 = vmul.f32 %v1453, %v1676
    %v1678 = vrcp.pop %v1645
    %v1679 = vmul.f32 %v1454, %v1678
    %vm1680 = vcmp.gt.f32.partialorder %v1649, 0.0
    %vm1681 = vcmp.gt.f32.partialorder %v1651, 0.0
    %vm1682 = vcmp.gt.f32.partialorder %v1653, 0.0
    %vm1683 = vcmp.gt.f32.partialorder %v1655, 0.0
    %vm1684 = vcmp.gt.f32.partialorder %v1657, 0.0
    %vm1685 = vcmp.gt.f32.partialorder %v1659, 0.0
    %vm1686 = vcmp.gt.f32.partialorder %v1661, 0.0
    %vm1687 = vcmp.gt.f32.partialorder %v1663, 0.0
    %vm1688 = vcmp.gt.f32.partialorder %v1665, 0.0
    %vm1689 = vcmp.gt.f32.partialorder %v1667, 0.0
    %vm1690 = vcmp.gt.f32.partialorder %v1669, 0.0
    %vm1691 = vcmp.gt.f32.partialorder %v1671, 0.0
    %vm1692 = vcmp.gt.f32.partialorder %v1673, 0.0
    %vm1693 = vcmp.gt.f32.partialorder %v1675, 0.0
    %vm1694 = vcmp.gt.f32.partialorder %v1677, 0.0
    %vm1695 = vcmp.gt.f32.partialorder %v1679, 0.0
    %v1696 = vmin.f32 %v1649, 0.0
    %v1697 = vmin.f32 %v1651, 0.0
    %v1698 = vmin.f32 %v1653, 0.0
    %v1699 = vmin.f32 %v1655, 0.0
    %v1700 = vmin.f32 %v1657, 0.0
    %v1701 = vmin.f32 %v1659, 0.0
    %v1702 = vmin.f32 %v1661, 0.0
    %v1703 = vmin.f32 %v1663, 0.0
    %v1704 = vmin.f32 %v1665, 0.0
    %v1705 = vmin.f32 %v1667, 0.0
    %v1706 = vmin.f32 %v1669, 0.0
    %v1707 = vmin.f32 %v1671, 0.0
    %v1708 = vmin.f32 %v1673, 0.0
    %v1709 = vmin.f32 %v1675, 0.0
    %v1710 = vmin.f32 %v1677, 0.0
    %v1711 = vmin.f32 %v1679, 0.0
    %v1712 = vmul.f32 %v1696, 1.442695
    %v1713 = vpow.pop %v1712
    %v1714 = vmul.f32 %v1697, 1.442695
    %v1715 = vpow.pop %v1714
    %v1716 = vmul.f32 %v1698, 1.442695
    %v1717 = vpow.pop %v1716
    %v1718 = vmul.f32 %v1699, 1.442695
    %v1719 = vpow.pop %v1718
    %v1720 = vmul.f32 %v1700, 1.442695
    %v1721 = vpow.pop %v1720
    %v1722 = vmul.f32 %v1701, 1.442695
    %v1723 = vpow.pop %v1722
    %v1724 = vmul.f32 %v1702, 1.442695
    %v1725 = vpow.pop %v1724
    %v1726 = vmul.f32 %v1703, 1.442695
    %v1727 = vpow.pop %v1726
    %v1728 = vmul.f32 %v1704, 1.442695
    %v1729 = vpow.pop %v1728
    %v1730 = vmul.f32 %v1705, 1.442695
    %v1731 = vpow.pop %v1730
    %v1732 = vmul.f32 %v1706, 1.442695
    %v1733 = vpow.pop %v1732
    %v1734 = vmul.f32 %v1707, 1.442695
    %v1735 = vpow.pop %v1734
    %v1736 = vmul.f32 %v1708, 1.442695
    %v1737 = vpow.pop %v1736
    %v1738 = vmul.f32 %v1709, 1.442695
    %v1739 = vpow.pop %v1738
    %v1740 = vmul.f32 %v1710, 1.442695
    %v1741 = vpow.pop %v1740
    %v1742 = vmul.f32 %v1711, 1.442695
    %v1743 = vpow.pop %v1742
    %v1744 = vsub.f32 %v1713, 1.0
    %v1745 = vsub.f32 %v1715, 1.0
    %v1746 = vsub.f32 %v1717, 1.0
    %v1747 = vsub.f32 %v1719, 1.0
    %v1748 = vsub.f32 %v1721, 1.0
    %v1749 = vsub.f32 %v1723, 1.0
    %v1750 = vsub.f32 %v1725, 1.0
    %v1751 = vsub.f32 %v1727, 1.0
    %v1752 = vsub.f32 %v1729, 1.0
    %v1753 = vsub.f32 %v1731, 1.0
    %v1754 = vsub.f32 %v1733, 1.0
    %v1755 = vsub.f32 %v1735, 1.0
    %v1756 = vsub.f32 %v1737, 1.0
    %v1757 = vsub.f32 %v1739, 1.0
    %v1758 = vsub.f32 %v1741, 1.0
    %v1759 = vsub.f32 %v1743, 1.0
    %v1760 = vsel %vm1680, %v1649, %v1744
    %v1761 = vsel %vm1681, %v1651, %v1745
    %v1762 = vsel %vm1682, %v1653, %v1746
    %v1763 = vsel %vm1683, %v1655, %v1747
    %v1764 = vsel %vm1684, %v1657, %v1748
    %v1765 = vsel %vm1685, %v1659, %v1749
    %v1766 = vsel %vm1686, %v1661, %v1750
    %v1767 = vsel %vm1687, %v1663, %v1751
    %v1768 = vsel %vm1688, %v1665, %v1752
    %v1769 = vsel %vm1689, %v1667, %v1753
    %v1770 = vsel %vm1690, %v1669, %v1754
    %v1771 = vsel %vm1691, %v1671, %v1755
    %v1772 = vsel %vm1692, %v1673, %v1756
    %v1773 = vsel %vm1693, %v1675, %v1757
    %v1774 = vsel %vm1694, %v1677, %v1758
    %v1775 = vsel %vm1695, %v1679, %v1759
    %1776 = vst [vmem:[%s5] sm:$0xff] %v1760
    %1777 = vst [vmem:[%s5 + $0x8] sm:$0xff] %v1761
    %1778 = vst [vmem:[%s5 + $0x10] sm:$0xff] %v1762
    %1779 = vst [vmem:[%s5 + $0x18] sm:$0xff] %v1763
    %1780 = vst [vmem:[%s5 + $0x20] sm:$0xff] %v1764
    %1781 = vst [vmem:[%s5 + $0x28] sm:$0xff] %v1765
    %1782 = vst [vmem:[%s5 + $0x30] sm:$0xff] %v1766
    %1783 = vst [vmem:[%s5 + $0x38] sm:$0xff] %v1767
    %1784 = vst [vmem:[%s5 + $0x40] sm:$0xff] %v1768
    %1785 = vst [vmem:[%s5 + $0x48] sm:$0xff] %v1769
    %1786 = vst [vmem:[%s5 + $0x50] sm:$0xff] %v1770
    %1787 = vst [vmem:[%s5 + $0x58] sm:$0xff] %v1771
    %1788 = vst [vmem:[%s5 + $0x60] sm:$0xff] %v1772
    %1789 = vst [vmem:[%s5 + $0x68] sm:$0xff] %v1773
    %1790 = vst [vmem:[%s5 + $0x70] sm:$0xff] %v1774
    %1791 = vst [vmem:[%s5 + $0x78] sm:$0xff] %v1775
  $region29: #{kbgat_forward.4} parent=0 // pred_fallthru
    _
  // Predicated region
  $region30: #{kbgat_forward.4} parent=0 // pred_check
    _
  $region31: #{kbgat_forward.4} parent=0 // pred_check_branch
    %1793 = sbr.rel (0) target = $region33
  $region32: #{kbgat_forward.4} parent=0 // pred_region
    _
  $region33: #{kbgat_forward.4} parent=0 // pred_fallthru
    _
  // Predicated region
  $region34: #{kbgat_forward.4} parent=0 // pred_check
    _
  $region35: #{kbgat_forward.4} parent=0 // pred_check_branch
    %1795 = sbr.rel (0) target = $region37
  $region36: #{kbgat_forward.4} parent=0 // pred_region
    _
  $region37: #{kbgat_forward.4} parent=0 // pred_fallthru
    _

</llo_original>
